<compile_context>
chip_gen: v5e
topology: v5e:2x2
jax: 0.10.0
libtpu: 0.0.40
codegen_flags: <defaults>
</compile_context>

<pallas_src>
import jax
import jax.numpy as jnp
import numpy as np
from jax import lax
from jax.experimental import pallas as pl
from jax.experimental.pallas import tpu as pltpu

_SQRT1_2 = 0.7071067811865476
_BN_EPS = 1e-5


# ----------------------------- in-kernel math helpers -----------------------------
def _erf(x):
    # Abramowitz & Stegun 7.1.26 polynomial, |err| < 1.5e-7 (exact-GELU semantics to ~1e-7).
    # The divide is replaced by an EUP approximate reciprocal + one Newton step (VALU -> EUP).
    a1, a2, a3, a4, a5 = 0.254829592, -0.284496736, 1.421413741, -1.453152027, 1.061405429
    p = 0.3275911
    ax = jnp.abs(x)
    d = 1.0 + p * ax
    t = pl.reciprocal(d, approx=True)
    t = t * (2.0 - d * t)                       # Newton refinement of 1/d (~1e-7 rel err)
    poly = ((((a5 * t + a4) * t + a3) * t + a2) * t + a1) * t
    y = 1.0 - poly * jnp.exp(-ax * ax)
    return jnp.where(x < 0.0, -y, y)


def _gelu(x):
    # exact (erf-based) GELU, matching nn.GELU() default
    return 0.5 * x * (1.0 + _erf(x * _SQRT1_2))


# ----------------------------------- kernel ----------------------------------------
def _make_decnn_kernel(H, W, Cin, Cout, B):
    HW = H * W

    def kernel(xu_ref, m_ref, w1_ref, b1_ref, w2_ref, wsc_ref, b2_ref, out_ref):
        # xu_ref  : (B, Cin, HW)    upsampled input tile (flattened spatial on lanes)
        # m_ref   : (9, HW)         per-tap 0/1 boundary masks (row t = dh*3+dw)
        # w1_ref  : (Cout, 9*Cin)   conv1 weights, BN1 scale folded
        # b1_ref  : (Cout, 1)       conv1 bias + BN1 folded
        # w2_ref  : (Cout, 9*Cout)  conv2 weights, BN2 folded
        # wsc_ref : (Cout, Cin)     1x1 shortcut weights, BNsc folded
        # b2_ref  : (Cout, 1)       conv2 + shortcut folded bias
        # out_ref : (B, Cout, HW)
        w1 = w1_ref[...]
        w2 = w2_ref[...]
        wsc = wsc_ref[...]
        b1 = b1_ref[...]
        b2 = b2_ref[...]

        def conv3x3(src, w, cin, acc):
            # src: (cin, HW) flattened image; w: (Cout, 9*cin); acc: (Cout, HW) f32 seed.
            # Taps are lane rotations of the flattened image (XLU, no stores); the boundary
            # masks zero every position whose tap would read across the image border (the
            # wrapped-around roll values land only on masked positions).
            for t in range(9):
                dh, dw = t // 3, t % 3
                off = (dh - 1) * W + (dw - 1)          # flat source offset of this tap
                tap = src if off == 0 else pltpu.roll(src, (-off) % HW, 1)
                if not (dh == 1 and dw == 1):
                    tap = tap * m_ref[t:t + 1, :]      # broadcast over channels
                acc = acc + jnp.dot(w[:, t * cin:(t + 1) * cin], tap,
                                    preferred_element_type=jnp.float32)
            return acc

        for b in range(B):                             # unrolled batch tile
            xf = xu_ref[b]                             # (Cin, HW) upsampled input
            # conv1 (3x3) + BN1 + GELU; bias seeds the accumulator (no extra bias pass).
            y1 = _gelu(conv3x3(xf, w1, Cin, jnp.broadcast_to(b1, (Cout, HW))))
            # conv2 (3x3) + BN2, fused with the 1x1 shortcut (+BNsc) and both biases.
            acc2 = jnp.broadcast_to(b2, (Cout, HW))
            acc2 = acc2 + jnp.dot(wsc, xf, preferred_element_type=jnp.float32)
            y2 = conv3x3(y1, w2, Cout, acc2)
            # Residual already folded in; final GELU and lane-dense store.
            out_ref[b] = _gelu(y2)

    return kernel


# ------------------------------- parameter folding -----------------------------------
def _prepare_kernel_params(params, eps=_BN_EPS):
    (w1, b1, g1, be1, m1, v1,
     w2, b2, g2, be2, m2, v2,
     wsc, bsc, gsc, besc, msc, vsc) = params
    cout, cin = w1.shape[0], w1.shape[1]
    s1 = g1 / jnp.sqrt(v1 + eps)
    s2 = g2 / jnp.sqrt(v2 + eps)
    ssc = gsc / jnp.sqrt(vsc + eps)
    # tap-major K order: k = (kh*3 + kw)*C + c   (OIHW -> (O,KH,KW,I) -> (O, 9*I))
    w1r = jnp.transpose(w1, (0, 2, 3, 1)).reshape(cout, 9 * cin) * s1[:, None]
    b1c = ((b1 - m1) * s1 + be1)[:, None]
    w2r = jnp.transpose(w2, (0, 2, 3, 1)).reshape(cout, 9 * cout) * s2[:, None]
    wscr = wsc.reshape(cout, cin) * ssc[:, None]
    b2c = ((b2 - m2) * s2 + be2 + (bsc - msc) * ssc + besc)[:, None]
    return w1r, b1c, w2r, wscr, b2c


def _make_tap_masks(H, W):
    HW = H * W
    p = np.arange(HW)
    ph, pw = p // W, p % W
    rows = [ph >= 1, np.ones(HW, bool), ph <= H - 2]
    cols = [pw >= 1, np.ones(HW, bool), pw <= W - 2]
    m = np.stack([(rows[t // 3] & cols[t % 3]).astype(np.float32) for t in range(9)])
    return jnp.asarray(m)                              # (9, HW)


def _pick_batch_tile(n):
    # Largest tile (<= 8) that divides N while keeping the grid >= 2 steps so that
    # dimension_semantics=("parallel",) can still shard across v7x's two TensorCores.
    if n <= 1:
        return 1
    best = 1
    for b in range(1, min(8, n) + 1):
        if n % b == 0 and n // b >= 2:
            best = b
    return best


# ----------------------------------- wrapper ----------------------------------------
def decnn_layer_forward(x_nchw, params, *, scale_factor=2, batch_tile=None):
    """Forward pass of DeCNNLayer. Input/output are NCHW float32 (no transposes needed)."""
    N, Cin, H0, W0 = x_nchw.shape
    sf = scale_factor
    H, W = H0 * sf, W0 * sf
    HW = H * W

    w1r, b1c, w2r, wscr, b2c = _prepare_kernel_params(params)
    Cout = w1r.shape[0]
    masks = _make_tap_masks(H, W)

    # Nearest-neighbour upsample is a pure indexing op; doing it in XLA removes the
    # O(H0*W0 * H*W) permutation matrix (and its K=H0*W0 matmul) from the kernel entirely.
    x_up = jnp.repeat(jnp.repeat(x_nchw.astype(jnp.float32), sf, axis=2), sf, axis=3)
    x_up = x_up.reshape(N, Cin, HW)

    B = _pick_batch_tile(N) if batch_tile is None else batch_tile
    assert N % B == 0, "batch_tile must divide the batch size"
    kernel = _make_decnn_kernel(H, W, Cin, Cout, B)

    # Explicit VMEM budget: double-buffered I/O blocks + single-copy constants (+ headroom).
    io_bytes = 2 * 4 * B * HW * (Cin + Cout)
    const_bytes = 4 * (9 * HW + Cout * 9 * Cin + Cout * 9 * Cout + Cout * Cin + 2 * Cout)
    vmem_limit = int(min(100 * 1024 * 1024,
                         max(8 * 1024 * 1024, 4 * (io_bytes + 2 * const_bytes))))

    flops_per_img = 2 * HW * (9 * Cin * Cout + 9 * Cout * Cout + Cin * Cout)
    cost = pl.CostEstimate(flops=int(N * flops_per_img),
                           transcendentals=int(N * 2 * Cout * HW),
                           bytes_accessed=int(4 * N * HW * (Cin + Cout) + const_bytes))

    out_flat = pl.pallas_call(
        kernel,
        out_shape=jax.ShapeDtypeStruct((N, Cout, HW), jnp.float32),
        grid=(N // B,),
        in_specs=[
            pl.BlockSpec((B, Cin, HW), lambda n: (n, 0, 0)),     # upsampled input tile
            pl.BlockSpec((9, HW), lambda n: (0, 0)),             # tap boundary masks
            pl.BlockSpec((Cout, 9 * Cin), lambda n: (0, 0)),     # conv1 (BN1 folded)
            pl.BlockSpec((Cout, 1), lambda n: (0, 0)),           # bias1 (BN1 folded)
            pl.BlockSpec((Cout, 9 * Cout), lambda n: (0, 0)),    # conv2 (BN2 folded)
            pl.BlockSpec((Cout, Cin), lambda n: (0, 0)),         # 1x1 shortcut (BNsc folded)
            pl.BlockSpec((Cout, 1), lambda n: (0, 0)),           # bias2 + shortcut bias
        ],
        out_specs=pl.BlockSpec((B, Cout, HW), lambda n: (n, 0, 0)),
        compiler_params=pltpu.CompilerParams(
            dimension_semantics=("parallel",),
            vmem_limit_bytes=vmem_limit),
        cost_estimate=cost,
    )(x_up, masks, w1r, b1c, w2r, wscr, b2c)

    return out_flat.reshape(N, Cout, H, W)


# ------------------------------- parameter setup -------------------------------------
def init_params(key, cin, cout):
    """Parameters in PyTorch layout: conv OIHW weights + biases, BN gamma/beta/mean/var."""
    ks = jax.random.split(key, 18)
    w1 = 0.1 * jax.random.normal(ks[0], (cout, cin, 3, 3), jnp.float32)
    b1 = 0.05 * jax.random.normal(ks[1], (cout,), jnp.float32)
    w2 = 0.1 * jax.random.normal(ks[2], (cout, cout, 3, 3), jnp.float32)
    b2 = 0.05 * jax.random.normal(ks[3], (cout,), jnp.float32)
    wsc = 0.1 * jax.random.normal(ks[4], (cout, cin, 1, 1), jnp.float32)
    bsc = 0.05 * jax.random.normal(ks[5], (cout,), jnp.float32)
    g1 = 1.0 + 0.1 * jax.random.normal(ks[6], (cout,), jnp.float32)
    g2 = 1.0 + 0.1 * jax.random.normal(ks[7], (cout,), jnp.float32)
    gsc = 1.0 + 0.1 * jax.random.normal(ks[8], (cout,), jnp.float32)
    be1 = 0.02 * jax.random.normal(ks[9], (cout,), jnp.float32)
    be2 = 0.02 * jax.random.normal(ks[10], (cout,), jnp.float32)
    besc = 0.02 * jax.random.normal(ks[11], (cout,), jnp.float32)
    m1 = 0.1 * jax.random.normal(ks[12], (cout,), jnp.float32)
    m2 = 0.1 * jax.random.normal(ks[13], (cout,), jnp.float32)
    msc = 0.1 * jax.random.normal(ks[14], (cout,), jnp.float32)
    v1 = 0.5 + jax.random.uniform(ks[15], (cout,), jnp.float32)
    v2 = 0.5 + jax.random.uniform(ks[16], (cout,), jnp.float32)
    vsc = 0.5 + jax.random.uniform(ks[17], (cout,), jnp.float32)
    return (w1, b1, g1, be1, m1, v1,
            w2, b2, g2, be2, m2, v2,
            wsc, bsc, gsc, besc, msc, vsc)


# ------------------------------- pure-JAX reference ----------------------------------
def reference_forward(x, params, scale_factor=2, eps=_BN_EPS):
    (w1, b1, g1, be1, m1, v1,
     w2, b2, g2, be2, m2, v2,
     wsc, bsc, gsc, besc, msc, vsc) = params
    dn = ("NCHW", "OIHW", "NCHW")

    def conv(a, w, b, padv):
        y = lax.conv_general_dilated(a, w, (1, 1), [(padv, padv), (padv, padv)],
                                     dimension_numbers=dn, precision=lax.Precision.HIGHEST)
        return y + b.reshape(1, -1, 1, 1)

    def bn(a, g, be, m, v):
        return ((a - m.reshape(1, -1, 1, 1)) / jnp.sqrt(v.reshape(1, -1, 1, 1) + eps)
                * g.reshape(1, -1, 1, 1) + be.reshape(1, -1, 1, 1))

    def gelu_exact(v):
        return 0.5 * v * (1.0 + jax.scipy.special.erf(v * _SQRT1_2))

    x_up = jnp.repeat(jnp.repeat(x, scale_factor, axis=2), scale_factor, axis=3)
    y = gelu_exact(bn(conv(x_up, w1, b1, 1), g1, be1, m1, v1))
    y = bn(conv(y, w2, b2, 1), g2, be2, m2, v2)
    res = bn(conv(x_up, wsc, bsc, 0), gsc, besc, msc, vsc)
    return gelu_exact(y + res)


# --------------------------------------- main ----------------------------------------
if __name__ == "__main__":
    key = jax.random.PRNGKey(0)
    kx, kp = jax.random.split(key)

    N, Cin, H0, W0 = 2, 4, 16, 16
    Cout = 8
    scale_factor = 2

    x = jax.random.normal(kx, (N, Cin, H0, W0), jnp.float32)   # NCHW, PyTorch convention
    params = init_params(kp, Cin, Cout)

    out = decnn_layer_forward(x, params, scale_factor=scale_factor)
    out = jax.block_until_ready(out)
    assert out.shape == (N, Cout, H0 * scale_factor, W0 * scale_factor)

    ref = reference_forward(x, params, scale_factor=scale_factor)
    np.testing.assert_allclose(np.asarray(out), np.asarray(ref), atol=2e-4, rtol=2e-4)

    print("KERNEL_OK")
</pallas_src>

<mosaic_0001>
module attributes {stable_mosaic.version = 11 : i64} {
  func.func @kernel(%arg0: i32, %arg1: memref<1x4x1024xf32, #tpu.memory_space<vmem>>, %arg2: memref<9x1024xf32, #tpu.memory_space<vmem>>, %arg3: memref<8x36xf32, #tpu.memory_space<vmem>>, %arg4: memref<8x1xf32, #tpu.memory_space<vmem>>, %arg5: memref<8x72xf32, #tpu.memory_space<vmem>>, %arg6: memref<8x4xf32, #tpu.memory_space<vmem>>, %arg7: memref<8x1xf32, #tpu.memory_space<vmem>>, %arg8: memref<1x8x1024xf32, #tpu.memory_space<vmem>>) attributes {dimension_semantics = [#tpu.dimension_semantics<parallel>], iteration_bounds = array<i64: 2>, scalar_prefetch = 0 : i64, scratch_operands = 0 : i64, tpu.core_type = #tpu.core_type<tc>, window_params = [{transform_indices = @transform_0, window_bounds = array<i64: 1, 4, 1024>}, {pipeline_mode = #tpu.pipeline_mode<synchronous>, transform_indices = @transform_1, window_bounds = array<i64: 9, 1024>}, {pipeline_mode = #tpu.pipeline_mode<synchronous>, transform_indices = @transform_2, window_bounds = array<i64: 8, 36>}, {pipeline_mode = #tpu.pipeline_mode<synchronous>, transform_indices = @transform_3, window_bounds = array<i64: 8, 1>}, {pipeline_mode = #tpu.pipeline_mode<synchronous>, transform_indices = @transform_4, window_bounds = array<i64: 8, 72>}, {pipeline_mode = #tpu.pipeline_mode<synchronous>, transform_indices = @transform_5, window_bounds = array<i64: 8, 4>}, {pipeline_mode = #tpu.pipeline_mode<synchronous>, transform_indices = @transform_6, window_bounds = array<i64: 8, 1>}, {transform_indices = @transform_7, window_bounds = array<i64: 1, 8, 1024>}]} {
    %c0 = arith.constant 0 : index
    %c0_0 = arith.constant 0 : index
    %0 = vector.load %arg3[%c0, %c0_0] : memref<8x36xf32, #tpu.memory_space<vmem>>, vector<8x36xf32>
    %c0_1 = arith.constant 0 : index
    %c0_2 = arith.constant 0 : index
    %1 = vector.load %arg5[%c0_1, %c0_2] : memref<8x72xf32, #tpu.memory_space<vmem>>, vector<8x72xf32>
    %c0_3 = arith.constant 0 : index
    %c0_4 = arith.constant 0 : index
    %2 = vector.load %arg6[%c0_3, %c0_4] : memref<8x4xf32, #tpu.memory_space<vmem>>, vector<8x4xf32>
    %c0_5 = arith.constant 0 : index
    %c0_6 = arith.constant 0 : index
    %3 = vector.load %arg4[%c0_5, %c0_6] : memref<8x1xf32, #tpu.memory_space<vmem>>, vector<8x1xf32>
    %c0_7 = arith.constant 0 : index
    %c0_8 = arith.constant 0 : index
    %4 = vector.load %arg7[%c0_7, %c0_8] : memref<8x1xf32, #tpu.memory_space<vmem>>, vector<8x1xf32>
    %c0_9 = arith.constant 0 : index
    %c0_10 = arith.constant 0 : index
    %c0_11 = arith.constant 0 : index
    %5 = vector.load %arg1[%c0_9, %c0_10, %c0_11] : memref<1x4x1024xf32, #tpu.memory_space<vmem>>, vector<1x4x1024xf32>
    %6 = vector.shape_cast %5 : vector<1x4x1024xf32> to vector<4x1024xf32>
    %7 = vector.shape_cast %3 : vector<8x1xf32> to vector<8x1xf32>
    %8 = vector.broadcast %7 : vector<8x1xf32> to vector<8x1024xf32>
    %c33_i32 = arith.constant 33 : i32
    %9 = tpu.dynamic_rotate %6 by %c33_i32 dim 1 : vector<4x1024xf32>, i32 -> vector<4x1024xf32>
    %c0_12 = arith.constant 0 : index
    %c0_13 = arith.constant 0 : index
    %10 = vector.load %arg2[%c0_12, %c0_13] : memref<9x1024xf32, #tpu.memory_space<vmem>>, vector<1x1024xf32>
    %11 = vector.broadcast %10 : vector<1x1024xf32> to vector<4x1024xf32>
    %12 = arith.mulf %9, %11 : vector<4x1024xf32>
    %13 = vector.extract_strided_slice %0 {offsets = [0, 0], sizes = [8, 4], strides = [1, 1]} : vector<8x36xf32> to vector<8x4xf32>
    %cst = arith.constant dense<0.000000e+00> : vector<8x1024xf32>
    %14 = tpu.matmul %13, %12, %cst {dimension_numbers = #tpu.dot_dimension_numbers<[1], [0], [0], [1], [0, 0, 1, 1], [], []>} : vector<8x4xf32>, vector<4x1024xf32>, vector<8x1024xf32> -> vector<8x1024xf32>
    %15 = arith.addf %8, %14 : vector<8x1024xf32>
    %c32_i32 = arith.constant 32 : i32
    %16 = tpu.dynamic_rotate %6 by %c32_i32 dim 1 : vector<4x1024xf32>, i32 -> vector<4x1024xf32>
    %c1 = arith.constant 1 : index
    %c0_14 = arith.constant 0 : index
    %17 = vector.load %arg2[%c1, %c0_14] : memref<9x1024xf32, #tpu.memory_space<vmem>>, vector<1x1024xf32>
    %18 = vector.broadcast %17 : vector<1x1024xf32> to vector<4x1024xf32>
    %19 = arith.mulf %16, %18 : vector<4x1024xf32>
    %20 = vector.extract_strided_slice %0 {offsets = [0, 4], sizes = [8, 4], strides = [1, 1]} : vector<8x36xf32> to vector<8x4xf32>
    %cst_15 = arith.constant dense<0.000000e+00> : vector<8x1024xf32>
    %21 = tpu.matmul %20, %19, %cst_15 {dimension_numbers = #tpu.dot_dimension_numbers<[1], [0], [0], [1], [0, 0, 1, 1], [], []>} : vector<8x4xf32>, vector<4x1024xf32>, vector<8x1024xf32> -> vector<8x1024xf32>
    %22 = arith.addf %15, %21 : vector<8x1024xf32>
    %c31_i32 = arith.constant 31 : i32
    %23 = tpu.dynamic_rotate %6 by %c31_i32 dim 1 : vector<4x1024xf32>, i32 -> vector<4x1024xf32>
    %c2 = arith.constant 2 : index
    %c0_16 = arith.constant 0 : index
    %24 = vector.load %arg2[%c2, %c0_16] : memref<9x1024xf32, #tpu.memory_space<vmem>>, vector<1x1024xf32>
    %25 = vector.broadcast %24 : vector<1x1024xf32> to vector<4x1024xf32>
    %26 = arith.mulf %23, %25 : vector<4x1024xf32>
    %27 = vector.extract_strided_slice %0 {offsets = [0, 8], sizes = [8, 4], strides = [1, 1]} : vector<8x36xf32> to vector<8x4xf32>
    %cst_17 = arith.constant dense<0.000000e+00> : vector<8x1024xf32>
    %28 = tpu.matmul %27, %26, %cst_17 {dimension_numbers = #tpu.dot_dimension_numbers<[1], [0], [0], [1], [0, 0, 1, 1], [], []>} : vector<8x4xf32>, vector<4x1024xf32>, vector<8x1024xf32> -> vector<8x1024xf32>
    %29 = arith.addf %22, %28 : vector<8x1024xf32>
    %c1_i32 = arith.constant 1 : i32
    %30 = tpu.dynamic_rotate %6 by %c1_i32 dim 1 : vector<4x1024xf32>, i32 -> vector<4x1024xf32>
    %c3 = arith.constant 3 : index
    %c0_18 = arith.constant 0 : index
    %31 = vector.load %arg2[%c3, %c0_18] : memref<9x1024xf32, #tpu.memory_space<vmem>>, vector<1x1024xf32>
    %32 = vector.broadcast %31 : vector<1x1024xf32> to vector<4x1024xf32>
    %33 = arith.mulf %30, %32 : vector<4x1024xf32>
    %34 = vector.extract_strided_slice %0 {offsets = [0, 12], sizes = [8, 4], strides = [1, 1]} : vector<8x36xf32> to vector<8x4xf32>
    %cst_19 = arith.constant dense<0.000000e+00> : vector<8x1024xf32>
    %35 = tpu.matmul %34, %33, %cst_19 {dimension_numbers = #tpu.dot_dimension_numbers<[1], [0], [0], [1], [0, 0, 1, 1], [], []>} : vector<8x4xf32>, vector<4x1024xf32>, vector<8x1024xf32> -> vector<8x1024xf32>
    %36 = arith.addf %29, %35 : vector<8x1024xf32>
    %37 = vector.extract_strided_slice %0 {offsets = [0, 16], sizes = [8, 4], strides = [1, 1]} : vector<8x36xf32> to vector<8x4xf32>
    %cst_20 = arith.constant dense<0.000000e+00> : vector<8x1024xf32>
    %38 = tpu.matmul %37, %6, %cst_20 {dimension_numbers = #tpu.dot_dimension_numbers<[1], [0], [0], [1], [0, 0, 1, 1], [], []>} : vector<8x4xf32>, vector<4x1024xf32>, vector<8x1024xf32> -> vector<8x1024xf32>
    %39 = arith.addf %36, %38 : vector<8x1024xf32>
    %c1023_i32 = arith.constant 1023 : i32
    %40 = tpu.dynamic_rotate %6 by %c1023_i32 dim 1 : vector<4x1024xf32>, i32 -> vector<4x1024xf32>
    %c5 = arith.constant 5 : index
    %c0_21 = arith.constant 0 : index
    %41 = vector.load %arg2[%c5, %c0_21] : memref<9x1024xf32, #tpu.memory_space<vmem>>, vector<1x1024xf32>
    %42 = vector.broadcast %41 : vector<1x1024xf32> to vector<4x1024xf32>
    %43 = arith.mulf %40, %42 : vector<4x1024xf32>
    %44 = vector.extract_strided_slice %0 {offsets = [0, 20], sizes = [8, 4], strides = [1, 1]} : vector<8x36xf32> to vector<8x4xf32>
    %cst_22 = arith.constant dense<0.000000e+00> : vector<8x1024xf32>
    %45 = tpu.matmul %44, %43, %cst_22 {dimension_numbers = #tpu.dot_dimension_numbers<[1], [0], [0], [1], [0, 0, 1, 1], [], []>} : vector<8x4xf32>, vector<4x1024xf32>, vector<8x1024xf32> -> vector<8x1024xf32>
    %46 = arith.addf %39, %45 : vector<8x1024xf32>
    %c993_i32 = arith.constant 993 : i32
    %47 = tpu.dynamic_rotate %6 by %c993_i32 dim 1 : vector<4x1024xf32>, i32 -> vector<4x1024xf32>
    %c6 = arith.constant 6 : index
    %c0_23 = arith.constant 0 : index
    %48 = vector.load %arg2[%c6, %c0_23] : memref<9x1024xf32, #tpu.memory_space<vmem>>, vector<1x1024xf32>
    %49 = vector.broadcast %48 : vector<1x1024xf32> to vector<4x1024xf32>
    %50 = arith.mulf %47, %49 : vector<4x1024xf32>
    %51 = vector.extract_strided_slice %0 {offsets = [0, 24], sizes = [8, 4], strides = [1, 1]} : vector<8x36xf32> to vector<8x4xf32>
    %cst_24 = arith.constant dense<0.000000e+00> : vector<8x1024xf32>
    %52 = tpu.matmul %51, %50, %cst_24 {dimension_numbers = #tpu.dot_dimension_numbers<[1], [0], [0], [1], [0, 0, 1, 1], [], []>} : vector<8x4xf32>, vector<4x1024xf32>, vector<8x1024xf32> -> vector<8x1024xf32>
    %53 = arith.addf %46, %52 : vector<8x1024xf32>
    %c992_i32 = arith.constant 992 : i32
    %54 = tpu.dynamic_rotate %6 by %c992_i32 dim 1 : vector<4x1024xf32>, i32 -> vector<4x1024xf32>
    %c7 = arith.constant 7 : index
    %c0_25 = arith.constant 0 : index
    %55 = vector.load %arg2[%c7, %c0_25] : memref<9x1024xf32, #tpu.memory_space<vmem>>, vector<1x1024xf32>
    %56 = vector.broadcast %55 : vector<1x1024xf32> to vector<4x1024xf32>
    %57 = arith.mulf %54, %56 : vector<4x1024xf32>
    %58 = vector.extract_strided_slice %0 {offsets = [0, 28], sizes = [8, 4], strides = [1, 1]} : vector<8x36xf32> to vector<8x4xf32>
    %cst_26 = arith.constant dense<0.000000e+00> : vector<8x1024xf32>
    %59 = tpu.matmul %58, %57, %cst_26 {dimension_numbers = #tpu.dot_dimension_numbers<[1], [0], [0], [1], [0, 0, 1, 1], [], []>} : vector<8x4xf32>, vector<4x1024xf32>, vector<8x1024xf32> -> vector<8x1024xf32>
    %60 = arith.addf %53, %59 : vector<8x1024xf32>
    %c991_i32 = arith.constant 991 : i32
    %61 = tpu.dynamic_rotate %6 by %c991_i32 dim 1 : vector<4x1024xf32>, i32 -> vector<4x1024xf32>
    %c8 = arith.constant 8 : index
    %c0_27 = arith.constant 0 : index
    %62 = vector.load %arg2[%c8, %c0_27] : memref<9x1024xf32, #tpu.memory_space<vmem>>, vector<1x1024xf32>
    %63 = vector.broadcast %62 : vector<1x1024xf32> to vector<4x1024xf32>
    %64 = arith.mulf %61, %63 : vector<4x1024xf32>
    %65 = vector.extract_strided_slice %0 {offsets = [0, 32], sizes = [8, 4], strides = [1, 1]} : vector<8x36xf32> to vector<8x4xf32>
    %cst_28 = arith.constant dense<0.000000e+00> : vector<8x1024xf32>
    %66 = tpu.matmul %65, %64, %cst_28 {dimension_numbers = #tpu.dot_dimension_numbers<[1], [0], [0], [1], [0, 0, 1, 1], [], []>} : vector<8x4xf32>, vector<4x1024xf32>, vector<8x1024xf32> -> vector<8x1024xf32>
    %67 = arith.addf %60, %66 : vector<8x1024xf32>
    %cst_29 = arith.constant 5.000000e-01 : f32
    %68 = vector.broadcast %cst_29 : f32 to vector<8x1024xf32>
    %69 = arith.mulf %68, %67 : vector<8x1024xf32>
    %cst_30 = arith.constant 0.707106769 : f32
    %70 = vector.broadcast %cst_30 : f32 to vector<8x1024xf32>
    %71 = arith.mulf %67, %70 : vector<8x1024xf32>
    %72 = math.absf %71 : vector<8x1024xf32>
    %cst_31 = arith.constant 0.327591091 : f32
    %73 = vector.broadcast %cst_31 : f32 to vector<8x1024xf32>
    %74 = arith.mulf %73, %72 : vector<8x1024xf32>
    %cst_32 = arith.constant 1.000000e+00 : f32
    %75 = vector.broadcast %cst_32 : f32 to vector<8x1024xf32>
    %76 = arith.addf %75, %74 : vector<8x1024xf32>
    %77 = tpu.reciprocal %76 {approx = true} : vector<8x1024xf32> -> vector<8x1024xf32>
    %78 = arith.mulf %76, %77 : vector<8x1024xf32>
    %cst_33 = arith.constant 2.000000e+00 : f32
    %79 = vector.broadcast %cst_33 : f32 to vector<8x1024xf32>
    %80 = arith.subf %79, %78 : vector<8x1024xf32>
    %81 = arith.mulf %77, %80 : vector<8x1024xf32>
    %cst_34 = arith.constant 1.06140542 : f32
    %82 = vector.broadcast %cst_34 : f32 to vector<8x1024xf32>
    %83 = arith.mulf %82, %81 : vector<8x1024xf32>
    %cst_35 = arith.constant -1.45315206 : f32
    %84 = vector.broadcast %cst_35 : f32 to vector<8x1024xf32>
    %85 = arith.addf %83, %84 : vector<8x1024xf32>
    %86 = arith.mulf %85, %81 : vector<8x1024xf32>
    %cst_36 = arith.constant 1.42141378 : f32
    %87 = vector.broadcast %cst_36 : f32 to vector<8x1024xf32>
    %88 = arith.addf %86, %87 : vector<8x1024xf32>
    %89 = arith.mulf %88, %81 : vector<8x1024xf32>
    %cst_37 = arith.constant -0.284496725 : f32
    %90 = vector.broadcast %cst_37 : f32 to vector<8x1024xf32>
    %91 = arith.addf %89, %90 : vector<8x1024xf32>
    %92 = arith.mulf %91, %81 : vector<8x1024xf32>
    %cst_38 = arith.constant 0.254829586 : f32
    %93 = vector.broadcast %cst_38 : f32 to vector<8x1024xf32>
    %94 = arith.addf %92, %93 : vector<8x1024xf32>
    %95 = arith.mulf %94, %81 : vector<8x1024xf32>
    %cst_39 = arith.constant 0.000000e+00 : f32
    %96 = vector.broadcast %cst_39 : f32 to vector<8x1024xf32>
    %97 = arith.subf %96, %72 : vector<8x1024xf32>
    %98 = arith.mulf %97, %72 : vector<8x1024xf32>
    %99 = math.exp %98 : vector<8x1024xf32>
    %100 = arith.mulf %95, %99 : vector<8x1024xf32>
    %cst_40 = arith.constant 1.000000e+00 : f32
    %101 = vector.broadcast %cst_40 : f32 to vector<8x1024xf32>
    %102 = arith.subf %101, %100 : vector<8x1024xf32>
    %cst_41 = arith.constant 0.000000e+00 : f32
    %103 = vector.broadcast %cst_41 : f32 to vector<8x1024xf32>
    %104 = arith.cmpf olt, %71, %103 : vector<8x1024xf32>
    %cst_42 = arith.constant 0.000000e+00 : f32
    %105 = vector.broadcast %cst_42 : f32 to vector<8x1024xf32>
    %106 = arith.subf %105, %102 : vector<8x1024xf32>
    %107 = arith.select %104, %106, %102 : vector<8x1024xi1>, vector<8x1024xf32>
    %cst_43 = arith.constant 1.000000e+00 : f32
    %108 = vector.broadcast %cst_43 : f32 to vector<8x1024xf32>
    %109 = arith.addf %108, %107 : vector<8x1024xf32>
    %110 = arith.mulf %69, %109 : vector<8x1024xf32>
    %111 = vector.shape_cast %4 : vector<8x1xf32> to vector<8x1xf32>
    %112 = vector.broadcast %111 : vector<8x1xf32> to vector<8x1024xf32>
    %cst_44 = arith.constant dense<0.000000e+00> : vector<8x1024xf32>
    %113 = tpu.matmul %2, %6, %cst_44 {dimension_numbers = #tpu.dot_dimension_numbers<[1], [0], [0], [1], [0, 0, 1, 1], [], []>} : vector<8x4xf32>, vector<4x1024xf32>, vector<8x1024xf32> -> vector<8x1024xf32>
    %114 = arith.addf %112, %113 : vector<8x1024xf32>
    %c33_i32_45 = arith.constant 33 : i32
    %115 = tpu.dynamic_rotate %110 by %c33_i32_45 dim 1 : vector<8x1024xf32>, i32 -> vector<8x1024xf32>
    %c0_46 = arith.constant 0 : index
    %c0_47 = arith.constant 0 : index
    %116 = vector.load %arg2[%c0_46, %c0_47] : memref<9x1024xf32, #tpu.memory_space<vmem>>, vector<1x1024xf32>
    %117 = vector.broadcast %116 : vector<1x1024xf32> to vector<8x1024xf32>
    %118 = arith.mulf %115, %117 : vector<8x1024xf32>
    %119 = vector.extract_strided_slice %1 {offsets = [0, 0], sizes = [8, 8], strides = [1, 1]} : vector<8x72xf32> to vector<8x8xf32>
    %cst_48 = arith.constant dense<0.000000e+00> : vector<8x1024xf32>
    %120 = tpu.matmul %119, %118, %cst_48 {dimension_numbers = #tpu.dot_dimension_numbers<[1], [0], [0], [1], [0, 0, 1, 1], [], []>} : vector<8x8xf32>, vector<8x1024xf32>, vector<8x1024xf32> -> vector<8x1024xf32>
    %121 = arith.addf %114, %120 : vector<8x1024xf32>
    %c32_i32_49 = arith.constant 32 : i32
    %122 = tpu.dynamic_rotate %110 by %c32_i32_49 dim 1 : vector<8x1024xf32>, i32 -> vector<8x1024xf32>
    %c1_50 = arith.constant 1 : index
    %c0_51 = arith.constant 0 : index
    %123 = vector.load %arg2[%c1_50, %c0_51] : memref<9x1024xf32, #tpu.memory_space<vmem>>, vector<1x1024xf32>
    %124 = vector.broadcast %123 : vector<1x1024xf32> to vector<8x1024xf32>
    %125 = arith.mulf %122, %124 : vector<8x1024xf32>
    %126 = vector.extract_strided_slice %1 {offsets = [0, 8], sizes = [8, 8], strides = [1, 1]} : vector<8x72xf32> to vector<8x8xf32>
    %cst_52 = arith.constant dense<0.000000e+00> : vector<8x1024xf32>
    %127 = tpu.matmul %126, %125, %cst_52 {dimension_numbers = #tpu.dot_dimension_numbers<[1], [0], [0], [1], [0, 0, 1, 1], [], []>} : vector<8x8xf32>, vector<8x1024xf32>, vector<8x1024xf32> -> vector<8x1024xf32>
    %128 = arith.addf %121, %127 : vector<8x1024xf32>
    %c31_i32_53 = arith.constant 31 : i32
    %129 = tpu.dynamic_rotate %110 by %c31_i32_53 dim 1 : vector<8x1024xf32>, i32 -> vector<8x1024xf32>
    %c2_54 = arith.constant 2 : index
    %c0_55 = arith.constant 0 : index
    %130 = vector.load %arg2[%c2_54, %c0_55] : memref<9x1024xf32, #tpu.memory_space<vmem>>, vector<1x1024xf32>
    %131 = vector.broadcast %130 : vector<1x1024xf32> to vector<8x1024xf32>
    %132 = arith.mulf %129, %131 : vector<8x1024xf32>
    %133 = vector.extract_strided_slice %1 {offsets = [0, 16], sizes = [8, 8], strides = [1, 1]} : vector<8x72xf32> to vector<8x8xf32>
    %cst_56 = arith.constant dense<0.000000e+00> : vector<8x1024xf32>
    %134 = tpu.matmul %133, %132, %cst_56 {dimension_numbers = #tpu.dot_dimension_numbers<[1], [0], [0], [1], [0, 0, 1, 1], [], []>} : vector<8x8xf32>, vector<8x1024xf32>, vector<8x1024xf32> -> vector<8x1024xf32>
    %135 = arith.addf %128, %134 : vector<8x1024xf32>
    %c1_i32_57 = arith.constant 1 : i32
    %136 = tpu.dynamic_rotate %110 by %c1_i32_57 dim 1 : vector<8x1024xf32>, i32 -> vector<8x1024xf32>
    %c3_58 = arith.constant 3 : index
    %c0_59 = arith.constant 0 : index
    %137 = vector.load %arg2[%c3_58, %c0_59] : memref<9x1024xf32, #tpu.memory_space<vmem>>, vector<1x1024xf32>
    %138 = vector.broadcast %137 : vector<1x1024xf32> to vector<8x1024xf32>
    %139 = arith.mulf %136, %138 : vector<8x1024xf32>
    %140 = vector.extract_strided_slice %1 {offsets = [0, 24], sizes = [8, 8], strides = [1, 1]} : vector<8x72xf32> to vector<8x8xf32>
    %cst_60 = arith.constant dense<0.000000e+00> : vector<8x1024xf32>
    %141 = tpu.matmul %140, %139, %cst_60 {dimension_numbers = #tpu.dot_dimension_numbers<[1], [0], [0], [1], [0, 0, 1, 1], [], []>} : vector<8x8xf32>, vector<8x1024xf32>, vector<8x1024xf32> -> vector<8x1024xf32>
    %142 = arith.addf %135, %141 : vector<8x1024xf32>
    %143 = vector.extract_strided_slice %1 {offsets = [0, 32], sizes = [8, 8], strides = [1, 1]} : vector<8x72xf32> to vector<8x8xf32>
    %cst_61 = arith.constant dense<0.000000e+00> : vector<8x1024xf32>
    %144 = tpu.matmul %143, %110, %cst_61 {dimension_numbers = #tpu.dot_dimension_numbers<[1], [0], [0], [1], [0, 0, 1, 1], [], []>} : vector<8x8xf32>, vector<8x1024xf32>, vector<8x1024xf32> -> vector<8x1024xf32>
    %145 = arith.addf %142, %144 : vector<8x1024xf32>
    %c1023_i32_62 = arith.constant 1023 : i32
    %146 = tpu.dynamic_rotate %110 by %c1023_i32_62 dim 1 : vector<8x1024xf32>, i32 -> vector<8x1024xf32>
    %c5_63 = arith.constant 5 : index
    %c0_64 = arith.constant 0 : index
    %147 = vector.load %arg2[%c5_63, %c0_64] : memref<9x1024xf32, #tpu.memory_space<vmem>>, vector<1x1024xf32>
    %148 = vector.broadcast %147 : vector<1x1024xf32> to vector<8x1024xf32>
    %149 = arith.mulf %146, %148 : vector<8x1024xf32>
    %150 = vector.extract_strided_slice %1 {offsets = [0, 40], sizes = [8, 8], strides = [1, 1]} : vector<8x72xf32> to vector<8x8xf32>
    %cst_65 = arith.constant dense<0.000000e+00> : vector<8x1024xf32>
    %151 = tpu.matmul %150, %149, %cst_65 {dimension_numbers = #tpu.dot_dimension_numbers<[1], [0], [0], [1], [0, 0, 1, 1], [], []>} : vector<8x8xf32>, vector<8x1024xf32>, vector<8x1024xf32> -> vector<8x1024xf32>
    %152 = arith.addf %145, %151 : vector<8x1024xf32>
    %c993_i32_66 = arith.constant 993 : i32
    %153 = tpu.dynamic_rotate %110 by %c993_i32_66 dim 1 : vector<8x1024xf32>, i32 -> vector<8x1024xf32>
    %c6_67 = arith.constant 6 : index
    %c0_68 = arith.constant 0 : index
    %154 = vector.load %arg2[%c6_67, %c0_68] : memref<9x1024xf32, #tpu.memory_space<vmem>>, vector<1x1024xf32>
    %155 = vector.broadcast %154 : vector<1x1024xf32> to vector<8x1024xf32>
    %156 = arith.mulf %153, %155 : vector<8x1024xf32>
    %157 = vector.extract_strided_slice %1 {offsets = [0, 48], sizes = [8, 8], strides = [1, 1]} : vector<8x72xf32> to vector<8x8xf32>
    %cst_69 = arith.constant dense<0.000000e+00> : vector<8x1024xf32>
    %158 = tpu.matmul %157, %156, %cst_69 {dimension_numbers = #tpu.dot_dimension_numbers<[1], [0], [0], [1], [0, 0, 1, 1], [], []>} : vector<8x8xf32>, vector<8x1024xf32>, vector<8x1024xf32> -> vector<8x1024xf32>
    %159 = arith.addf %152, %158 : vector<8x1024xf32>
    %c992_i32_70 = arith.constant 992 : i32
    %160 = tpu.dynamic_rotate %110 by %c992_i32_70 dim 1 : vector<8x1024xf32>, i32 -> vector<8x1024xf32>
    %c7_71 = arith.constant 7 : index
    %c0_72 = arith.constant 0 : index
    %161 = vector.load %arg2[%c7_71, %c0_72] : memref<9x1024xf32, #tpu.memory_space<vmem>>, vector<1x1024xf32>
    %162 = vector.broadcast %161 : vector<1x1024xf32> to vector<8x1024xf32>
    %163 = arith.mulf %160, %162 : vector<8x1024xf32>
    %164 = vector.extract_strided_slice %1 {offsets = [0, 56], sizes = [8, 8], strides = [1, 1]} : vector<8x72xf32> to vector<8x8xf32>
    %cst_73 = arith.constant dense<0.000000e+00> : vector<8x1024xf32>
    %165 = tpu.matmul %164, %163, %cst_73 {dimension_numbers = #tpu.dot_dimension_numbers<[1], [0], [0], [1], [0, 0, 1, 1], [], []>} : vector<8x8xf32>, vector<8x1024xf32>, vector<8x1024xf32> -> vector<8x1024xf32>
    %166 = arith.addf %159, %165 : vector<8x1024xf32>
    %c991_i32_74 = arith.constant 991 : i32
    %167 = tpu.dynamic_rotate %110 by %c991_i32_74 dim 1 : vector<8x1024xf32>, i32 -> vector<8x1024xf32>
    %c8_75 = arith.constant 8 : index
    %c0_76 = arith.constant 0 : index
    %168 = vector.load %arg2[%c8_75, %c0_76] : memref<9x1024xf32, #tpu.memory_space<vmem>>, vector<1x1024xf32>
    %169 = vector.broadcast %168 : vector<1x1024xf32> to vector<8x1024xf32>
    %170 = arith.mulf %167, %169 : vector<8x1024xf32>
    %171 = vector.extract_strided_slice %1 {offsets = [0, 64], sizes = [8, 8], strides = [1, 1]} : vector<8x72xf32> to vector<8x8xf32>
    %cst_77 = arith.constant dense<0.000000e+00> : vector<8x1024xf32>
    %172 = tpu.matmul %171, %170, %cst_77 {dimension_numbers = #tpu.dot_dimension_numbers<[1], [0], [0], [1], [0, 0, 1, 1], [], []>} : vector<8x8xf32>, vector<8x1024xf32>, vector<8x1024xf32> -> vector<8x1024xf32>
    %173 = arith.addf %166, %172 : vector<8x1024xf32>
    %cst_78 = arith.constant 5.000000e-01 : f32
    %174 = vector.broadcast %cst_78 : f32 to vector<8x1024xf32>
    %175 = arith.mulf %174, %173 : vector<8x1024xf32>
    %cst_79 = arith.constant 0.707106769 : f32
    %176 = vector.broadcast %cst_79 : f32 to vector<8x1024xf32>
    %177 = arith.mulf %173, %176 : vector<8x1024xf32>
    %178 = math.absf %177 : vector<8x1024xf32>
    %cst_80 = arith.constant 0.327591091 : f32
    %179 = vector.broadcast %cst_80 : f32 to vector<8x1024xf32>
    %180 = arith.mulf %179, %178 : vector<8x1024xf32>
    %cst_81 = arith.constant 1.000000e+00 : f32
    %181 = vector.broadcast %cst_81 : f32 to vector<8x1024xf32>
    %182 = arith.addf %181, %180 : vector<8x1024xf32>
    %183 = tpu.reciprocal %182 {approx = true} : vector<8x1024xf32> -> vector<8x1024xf32>
    %184 = arith.mulf %182, %183 : vector<8x1024xf32>
    %cst_82 = arith.constant 2.000000e+00 : f32
    %185 = vector.broadcast %cst_82 : f32 to vector<8x1024xf32>
    %186 = arith.subf %185, %184 : vector<8x1024xf32>
    %187 = arith.mulf %183, %186 : vector<8x1024xf32>
    %cst_83 = arith.constant 1.06140542 : f32
    %188 = vector.broadcast %cst_83 : f32 to vector<8x1024xf32>
    %189 = arith.mulf %188, %187 : vector<8x1024xf32>
    %cst_84 = arith.constant -1.45315206 : f32
    %190 = vector.broadcast %cst_84 : f32 to vector<8x1024xf32>
    %191 = arith.addf %189, %190 : vector<8x1024xf32>
    %192 = arith.mulf %191, %187 : vector<8x1024xf32>
    %cst_85 = arith.constant 1.42141378 : f32
    %193 = vector.broadcast %cst_85 : f32 to vector<8x1024xf32>
    %194 = arith.addf %192, %193 : vector<8x1024xf32>
    %195 = arith.mulf %194, %187 : vector<8x1024xf32>
    %cst_86 = arith.constant -0.284496725 : f32
    %196 = vector.broadcast %cst_86 : f32 to vector<8x1024xf32>
    %197 = arith.addf %195, %196 : vector<8x1024xf32>
    %198 = arith.mulf %197, %187 : vector<8x1024xf32>
    %cst_87 = arith.constant 0.254829586 : f32
    %199 = vector.broadcast %cst_87 : f32 to vector<8x1024xf32>
    %200 = arith.addf %198, %199 : vector<8x1024xf32>
    %201 = arith.mulf %200, %187 : vector<8x1024xf32>
    %cst_88 = arith.constant 0.000000e+00 : f32
    %202 = vector.broadcast %cst_88 : f32 to vector<8x1024xf32>
    %203 = arith.subf %202, %178 : vector<8x1024xf32>
    %204 = arith.mulf %203, %178 : vector<8x1024xf32>
    %205 = math.exp %204 : vector<8x1024xf32>
    %206 = arith.mulf %201, %205 : vector<8x1024xf32>
    %cst_89 = arith.constant 1.000000e+00 : f32
    %207 = vector.broadcast %cst_89 : f32 to vector<8x1024xf32>
    %208 = arith.subf %207, %206 : vector<8x1024xf32>
    %cst_90 = arith.constant 0.000000e+00 : f32
    %209 = vector.broadcast %cst_90 : f32 to vector<8x1024xf32>
    %210 = arith.cmpf olt, %177, %209 : vector<8x1024xf32>
    %cst_91 = arith.constant 0.000000e+00 : f32
    %211 = vector.broadcast %cst_91 : f32 to vector<8x1024xf32>
    %212 = arith.subf %211, %208 : vector<8x1024xf32>
    %213 = arith.select %210, %212, %208 : vector<8x1024xi1>, vector<8x1024xf32>
    %cst_92 = arith.constant 1.000000e+00 : f32
    %214 = vector.broadcast %cst_92 : f32 to vector<8x1024xf32>
    %215 = arith.addf %214, %213 : vector<8x1024xf32>
    %216 = arith.mulf %175, %215 : vector<8x1024xf32>
    %c0_93 = arith.constant 0 : index
    %c0_94 = arith.constant 0 : index
    %c0_95 = arith.constant 0 : index
    %217 = vector.load %arg8[%c0_93, %c0_94, %c0_95] : memref<1x8x1024xf32, #tpu.memory_space<vmem>>, vector<1x8x1024xf32>
    %218 = vector.shape_cast %217 : vector<1x8x1024xf32> to vector<8x1024xf32>
    %219 = vector.shape_cast %216 : vector<8x1024xf32> to vector<1x8x1024xf32>
    tpu.vector_store %arg8[%c0_93, %c0_94, %c0_95], %219 {strides = array<i32>} : memref<1x8x1024xf32, #tpu.memory_space<vmem>>, vector<1x8x1024xf32>,
    return
  }
  func.func @transform_0(%arg0: i32) -> (i32, i32, i32) {
    %c0_i32 = arith.constant 0 : i32
    %c0_i32_0 = arith.constant 0 : i32
    %c0_i32_1 = arith.constant 0 : i32
    return %arg0, %c0_i32, %c0_i32_0 : i32, i32, i32
  }
  func.func @transform_1(%arg0: i32) -> (i32, i32) {
    %c0_i32 = arith.constant 0 : i32
    %c0_i32_0 = arith.constant 0 : i32
    %c0_i32_1 = arith.constant 0 : i32
    return %c0_i32, %c0_i32_0 : i32, i32
  }
  func.func @transform_2(%arg0: i32) -> (i32, i32) {
    %c0_i32 = arith.constant 0 : i32
    %c0_i32_0 = arith.constant 0 : i32
    %c0_i32_1 = arith.constant 0 : i32
    return %c0_i32, %c0_i32_0 : i32, i32
  }
  func.func @transform_3(%arg0: i32) -> (i32, i32) {
    %c0_i32 = arith.constant 0 : i32
    %c0_i32_0 = arith.constant 0 : i32
    %c0_i32_1 = arith.constant 0 : i32
    return %c0_i32, %c0_i32_0 : i32, i32
  }
  func.func @transform_4(%arg0: i32) -> (i32, i32) {
    %c0_i32 = arith.constant 0 : i32
    %c0_i32_0 = arith.constant 0 : i32
    %c0_i32_1 = arith.constant 0 : i32
    return %c0_i32, %c0_i32_0 : i32, i32
  }
  func.func @transform_5(%arg0: i32) -> (i32, i32) {
    %c0_i32 = arith.constant 0 : i32
    %c0_i32_0 = arith.constant 0 : i32
    %c0_i32_1 = arith.constant 0 : i32
    return %c0_i32, %c0_i32_0 : i32, i32
  }
  func.func @transform_6(%arg0: i32) -> (i32, i32) {
    %c0_i32 = arith.constant 0 : i32
    %c0_i32_0 = arith.constant 0 : i32
    %c0_i32_1 = arith.constant 0 : i32
    return %c0_i32, %c0_i32_0 : i32, i32
  }
  func.func @transform_7(%arg0: i32) -> (i32, i32, i32) {
    %c0_i32 = arith.constant 0 : i32
    %c0_i32_0 = arith.constant 0 : i32
    %c0_i32_1 = arith.constant 0 : i32
    return %arg0, %c0_i32, %c0_i32_0 : i32, i32, i32
  }
}

</mosaic_0001>

<llo_original>
// kernel: tpu_custom_call.1
$region0: #{tpu_custom_call.1}
  #allocation0 [shape = 'u32[]', space=smem, size = 0x4, offset = 0x4, fixed_abs, tag = 'smem constant byte address 0x4 - core index']
  #allocation1 [shape = 'u32[72,128]{1,0:T(1,128)}', space=vmem, size = 0x9000, scoped, tag = 'internal scratch']
  %s0 = inlined_call_operand.hbm [shape: f32[2,4,1024], index: 0, kind: input, shape index: {}]
  %s1 = inlined_call_operand.hbm [shape: f32[9,1024], index: 1, kind: input, shape index: {}]
  %s2 = inlined_call_operand.vmem [shape: f32[8,36], index: 2, kind: input, shape index: {}]
  %s3 = inlined_call_operand.vmem [shape: f32[8,1], index: 3, kind: input, shape index: {}]
  %s4 = inlined_call_operand.vmem [shape: f32[8,72], index: 4, kind: input, shape index: {}]
  %s5 = inlined_call_operand.vmem [shape: f32[8,4], index: 5, kind: input, shape index: {}]
  %s6 = inlined_call_operand.vmem [shape: f32[8,1], index: 6, kind: input, shape index: {}]
  %s7 = inlined_call_operand.hbm [shape: f32[2,8,1024], index: 7, kind: output, shape index: {}]
  %s8 = sld [smem:[#allocation0]]
  $region69: #{tpu_custom_call.1} parent=0
    _
  %s10 = ssub.s32 1, %s8
  %s11 = scalar_select 0, %s10, %s8
  $region1: #{tpu_custom_call.1} parent=0
    #allocation2 [shape = 'u8[32768]{0}', space=vmem, size = 0x8000, scoped, tag = 'input window, operand 0']
    #allocation3 [shape = 's32[2]{0}', space=sflag, size = 0x8, scoped, tag = 'scoped memory for tpu_custom_call.1']
    #allocation4 [shape = 's32[2]{0}', space=sflag, size = 0x8, scoped, tag = 'scoped memory for tpu_custom_call.1']
    #allocation5 [shape = 'u8[65536]{0}', space=vmem, size = 0x10000, scoped, tag = 'input window, operand 1, single buffered']
    #allocation6 [shape = 's32[1]{0}', space=sflag, size = 0x4, scoped, tag = 'scoped memory for tpu_custom_call.1']
    #allocation7 [shape = 'u8[65536]{0}', space=vmem, size = 0x10000, scoped, tag = 'output window, operand 0']
    %12 = vsyncpa [#allocation3], 0
    %s13 = scalar_lea.sflag [#allocation3], 1
    %14 = vsyncpa %s13, 0
    %15 = vsyncpa [#allocation6], 0
    %16 = vsyncpa [#allocation4], 0
    %s17 = scalar_lea.sflag [#allocation4], 1
    %18 = vsyncpa %s17, 0
    loop: start=0, step=1, limit=4
    $region2: #{tpu_custom_call.1} parent=1 // loop_pre_header
      _
    $region3: #{tpu_custom_call.1} parent=1 // loop_header
      %s20 = sphi 0, %s24
      %p21 = scmp.ge.s32.totalorder %s20, 4
      %s30 = sphi 0, %s32
      %s33 = sphi 0, %s30
      %s34 = sphi 0, %s33
      %s50 = sphi 0, %s34
      %s54 = sphi 0, %s54
      %s56 = sphi 0, %s54
      %s57 = sphi 0, %s56
      %s71 = sphi 0, %s57
      %s75 = sphi 0, %s75
      %s77 = sphi 0, %s75
      %s78 = sphi 0, %s77
      %s92 = sphi 0, %s78
      %s96 = sphi 0, %s96
      %s98 = sphi 0, %s96
      %s99 = sphi 0, %s98
      %s113 = sphi 0, %s99
      %s117 = sphi 0, %s117
      %s119 = sphi 0, %s117
      %s120 = sphi 0, %s119
      %s134 = sphi 0, %s120
      %s138 = sphi 0, %s138
      %s140 = sphi 0, %s138
      %s141 = sphi 0, %s140
      %s155 = sphi 0, %s141
      %s159 = sphi 0, %s159
      %s161 = sphi 0, %s159
      %s162 = sphi 0, %s161
      %s176 = sphi 0, %s162
      %s182 = sphi 0, %s184
      %s185 = sphi 0, %s182
      %s186 = sphi 0, %s185
      %s202 = sphi 0, %s186
    $region4: #{tpu_custom_call.1} parent=1 // loop_header_branch
      %23 = sbr.rel (%p21) target = $region8
    $region5: #{tpu_custom_call.1} parent=1 // loop_body
      %s25 = ssub.s32 %s20, 1
      %s26 = ssub.s32 %s20, 2
      %s27 = sadd.s32 %s20, 1
      %s28 = ssub.s32 %s20, %s27
      %p29 = scmp.eq.s32.totalorder %s28, 0
      %s31 = sadd.s32 %s30, 1
      %s32 = scalar_select %p29, %s30, %s31
      %p35 = pneg %p29
      %p36 = scmp.eq.s32.totalorder %s20, 1
      %p37 = por %p35, %p36
      %p38 = scmp.ne.s32.totalorder %s30, %s33
      %p39 = scmp.eq.s32.totalorder %s20, 0
      %p40 = por %p38, %p39
      %p41 = scmp.ne.s32.totalorder %s30, %s33
      %p42 = scmp.eq.s32.totalorder %s25, 1
      %p43 = por %p41, %p42
      %p44 = scmp.ne.s32.totalorder %s33, %s34
      %p45 = scmp.eq.s32.totalorder %s25, 0
      %p46 = por %p44, %p45
      %p47 = scmp.ne.s32.totalorder %s33, %s34
      %p48 = scmp.eq.s32.totalorder %s26, 1
      %p49 = por %p47, %p48
      %p51 = scmp.ne.s32.totalorder %s34, %s50
      %p52 = scmp.eq.s32.totalorder %s26, 0
      %p53 = por %p51, %p52
      %s55 = sadd.s32 %s54, 1
      %p58 = scmp.eq.s32.totalorder %s20, 1
      %p59 = scmp.ne.s32.totalorder %s54, %s56
      %p60 = scmp.eq.s32.totalorder %s20, 0
      %p61 = por %p59, %p60
      %p62 = scmp.ne.s32.totalorder %s54, %s56
      %p63 = scmp.eq.s32.totalorder %s25, 1
      %p64 = por %p62, %p63
      %p65 = scmp.ne.s32.totalorder %s56, %s57
      %p66 = scmp.eq.s32.totalorder %s25, 0
      %p67 = por %p65, %p66
      %p68 = scmp.ne.s32.totalorder %s56, %s57
      %p69 = scmp.eq.s32.totalorder %s26, 1
      %p70 = por %p68, %p69
      %p72 = scmp.ne.s32.totalorder %s57, %s71
      %p73 = scmp.eq.s32.totalorder %s26, 0
      %p74 = por %p72, %p73
      %s76 = sadd.s32 %s75, 1
      %p79 = scmp.eq.s32.totalorder %s20, 1
      %p80 = scmp.ne.s32.totalorder %s75, %s77
      %p81 = scmp.eq.s32.totalorder %s20, 0
      %p82 = por %p80, %p81
      %p83 = scmp.ne.s32.totalorder %s75, %s77
      %p84 = scmp.eq.s32.totalorder %s25, 1
      %p85 = por %p83, %p84
      %p86 = scmp.ne.s32.totalorder %s77, %s78
      %p87 = scmp.eq.s32.totalorder %s25, 0
      %p88 = por %p86, %p87
      %p89 = scmp.ne.s32.totalorder %s77, %s78
      %p90 = scmp.eq.s32.totalorder %s26, 1
      %p91 = por %p89, %p90
      %p93 = scmp.ne.s32.totalorder %s78, %s92
      %p94 = scmp.eq.s32.totalorder %s26, 0
      %p95 = por %p93, %p94
      %s97 = sadd.s32 %s96, 1
      %p100 = scmp.eq.s32.totalorder %s20, 1
      %p101 = scmp.ne.s32.totalorder %s96, %s98
      %p102 = scmp.eq.s32.totalorder %s20, 0
      %p103 = por %p101, %p102
      %p104 = scmp.ne.s32.totalorder %s96, %s98
      %p105 = scmp.eq.s32.totalorder %s25, 1
      %p106 = por %p104, %p105
      %p107 = scmp.ne.s32.totalorder %s98, %s99
      %p108 = scmp.eq.s32.totalorder %s25, 0
      %p109 = por %p107, %p108
      %p110 = scmp.ne.s32.totalorder %s98, %s99
      %p111 = scmp.eq.s32.totalorder %s26, 1
      %p112 = por %p110, %p111
      %p114 = scmp.ne.s32.totalorder %s99, %s113
      %p115 = scmp.eq.s32.totalorder %s26, 0
      %p116 = por %p114, %p115
      %s118 = sadd.s32 %s117, 1
      %p121 = scmp.eq.s32.totalorder %s20, 1
      %p122 = scmp.ne.s32.totalorder %s117, %s119
      %p123 = scmp.eq.s32.totalorder %s20, 0
      %p124 = por %p122, %p123
      %p125 = scmp.ne.s32.totalorder %s117, %s119
      %p126 = scmp.eq.s32.totalorder %s25, 1
      %p127 = por %p125, %p126
      %p128 = scmp.ne.s32.totalorder %s119, %s120
      %p129 = scmp.eq.s32.totalorder %s25, 0
      %p130 = por %p128, %p129
      %p131 = scmp.ne.s32.totalorder %s119, %s120
      %p132 = scmp.eq.s32.totalorder %s26, 1
      %p133 = por %p131, %p132
      %p135 = scmp.ne.s32.totalorder %s120, %s134
      %p136 = scmp.eq.s32.totalorder %s26, 0
      %p137 = por %p135, %p136
      %s139 = sadd.s32 %s138, 1
      %p142 = scmp.eq.s32.totalorder %s20, 1
      %p143 = scmp.ne.s32.totalorder %s138, %s140
      %p144 = scmp.eq.s32.totalorder %s20, 0
      %p145 = por %p143, %p144
      %p146 = scmp.ne.s32.totalorder %s138, %s140
      %p147 = scmp.eq.s32.totalorder %s25, 1
      %p148 = por %p146, %p147
      %p149 = scmp.ne.s32.totalorder %s140, %s141
      %p150 = scmp.eq.s32.totalorder %s25, 0
      %p151 = por %p149, %p150
      %p152 = scmp.ne.s32.totalorder %s140, %s141
      %p153 = scmp.eq.s32.totalorder %s26, 1
      %p154 = por %p152, %p153
      %p156 = scmp.ne.s32.totalorder %s141, %s155
      %p157 = scmp.eq.s32.totalorder %s26, 0
      %p158 = por %p156, %p157
      %s160 = sadd.s32 %s159, 1
      %p163 = scmp.eq.s32.totalorder %s20, 1
      %p164 = scmp.ne.s32.totalorder %s159, %s161
      %p165 = scmp.eq.s32.totalorder %s20, 0
      %p166 = por %p164, %p165
      %p167 = scmp.ne.s32.totalorder %s159, %s161
      %p168 = scmp.eq.s32.totalorder %s25, 1
      %p169 = por %p167, %p168
      %p170 = scmp.ne.s32.totalorder %s161, %s162
      %p171 = scmp.eq.s32.totalorder %s25, 0
      %p172 = por %p170, %p171
      %p173 = scmp.ne.s32.totalorder %s161, %s162
      %p174 = scmp.eq.s32.totalorder %s26, 1
      %p175 = por %p173, %p174
      %p177 = scmp.ne.s32.totalorder %s162, %s176
      %p178 = scmp.eq.s32.totalorder %s26, 0
      %p179 = por %p177, %p178
      %s180 = ssub.s32 %s20, %s27
      %p181 = scmp.eq.s32.totalorder %s180, 0
      %s183 = sadd.s32 %s182, 1
      %s184 = scalar_select %p181, %s182, %s183
      %p187 = pneg %p181
      %p188 = scmp.eq.s32.totalorder %s20, 1
      %p189 = por %p187, %p188
      %p190 = scmp.ne.s32.totalorder %s182, %s185
      %p191 = scmp.eq.s32.totalorder %s20, 0
      %p192 = por %p190, %p191
      %p193 = scmp.ne.s32.totalorder %s182, %s185
      %p194 = scmp.eq.s32.totalorder %s25, 1
      %p195 = por %p193, %p194
      %p196 = scmp.ne.s32.totalorder %s185, %s186
      %p197 = scmp.eq.s32.totalorder %s25, 0
      %p198 = por %p196, %p197
      %p199 = scmp.ne.s32.totalorder %s185, %s186
      %p200 = scmp.eq.s32.totalorder %s26, 1
      %p201 = por %p199, %p200
      %p203 = scmp.ne.s32.totalorder %s186, %s202
      %p204 = scmp.eq.s32.totalorder %s26, 0
      %p205 = por %p203, %p204
      %p206 = scmp.le.s32.totalorder 1, %s20
      %p207 = scmp.lt.s32.totalorder %s20, 3
      %p208 = pnand %p206, %p207
      %p209 = pneg %p208
      // Predicated region
      $region9: #{tpu_custom_call.1} parent=5 // pred_check
        _
      $region10: #{tpu_custom_call.1} parent=5 // pred_check_branch
        %211 = sbr.rel (%p208) target = $region12
      $region11: #{tpu_custom_call.1} parent=5 // pred_region
        %s212 = ssub.s32 %s20, 1
        // Predicated region
        $region13: #{tpu_custom_call.1} parent=11 // pred_check
          %p213 = pneg %p67
        $region14: #{tpu_custom_call.1} parent=11 // pred_check_branch
          %215 = sbr.rel (%p213) target = $region16
        $region15: #{tpu_custom_call.1} parent=11 // pred_region
          %217 = vsyncadd [#allocation6], 0
          %s218 = sshll.u32 %s1, 4
          %s219 = int_to_ptr.hbm [resolvable:$true] %s218
          %s220 = sshll.u32 [#allocation5], 4
          %s221 = int_to_ptr.vmem [resolvable:$true] %s220
          %226 = dma.hbm_to_vmem [thread:$0]  %s219, 2048, %s221, [#allocation6], 1024, 1024, 64
        $region16: #{tpu_custom_call.1} parent=11 // pred_fallthru
          _
        // Predicated region
        $region17: #{tpu_custom_call.1} parent=11 // pred_check
          %p227 = pneg %p88
        $region18: #{tpu_custom_call.1} parent=11 // pred_check_branch
          %229 = sbr.rel (%p227) target = $region20
        $region19: #{tpu_custom_call.1} parent=11 // pred_region
          _
        $region20: #{tpu_custom_call.1} parent=11 // pred_fallthru
          _
        // Predicated region
        $region21: #{tpu_custom_call.1} parent=11 // pred_check
          %p230 = pneg %p109
        $region22: #{tpu_custom_call.1} parent=11 // pred_check_branch
          %232 = sbr.rel (%p230) target = $region24
        $region23: #{tpu_custom_call.1} parent=11 // pred_region
          _
        $region24: #{tpu_custom_call.1} parent=11 // pred_fallthru
          _
        // Predicated region
        $region25: #{tpu_custom_call.1} parent=11 // pred_check
          %p233 = pneg %p130
        $region26: #{tpu_custom_call.1} parent=11 // pred_check_branch
          %235 = sbr.rel (%p233) target = $region28
        $region27: #{tpu_custom_call.1} parent=11 // pred_region
          _
        $region28: #{tpu_custom_call.1} parent=11 // pred_fallthru
          _
        // Predicated region
        $region29: #{tpu_custom_call.1} parent=11 // pred_check
          %p236 = pneg %p151
        $region30: #{tpu_custom_call.1} parent=11 // pred_check_branch
          %238 = sbr.rel (%p236) target = $region32
        $region31: #{tpu_custom_call.1} parent=11 // pred_region
          _
        $region32: #{tpu_custom_call.1} parent=11 // pred_fallthru
          _
        // Predicated region
        $region33: #{tpu_custom_call.1} parent=11 // pred_check
          %p239 = pneg %p172
        $region34: #{tpu_custom_call.1} parent=11 // pred_check_branch
          %241 = sbr.rel (%p239) target = $region36
        $region35: #{tpu_custom_call.1} parent=11 // pred_region
          _
        $region36: #{tpu_custom_call.1} parent=11 // pred_fallthru
          _
      $region12: #{tpu_custom_call.1} parent=5 // pred_fallthru
        _
      %p242 = scmp.lt.s32.totalorder %s20, 2
      // Predicated region
      $region37: #{tpu_custom_call.1} parent=5 // pred_check
        %p243 = pneg %p242
      $region38: #{tpu_custom_call.1} parent=5 // pred_check_branch
        %245 = sbr.rel (%p243) target = $region40
      $region39: #{tpu_custom_call.1} parent=5 // pred_region
        // Predicated region
        $region41: #{tpu_custom_call.1} parent=39 // pred_check
          %p246 = pneg %p40
        $region42: #{tpu_custom_call.1} parent=39 // pred_check_branch
          %248 = sbr.rel (%p246) target = $region44
        $region43: #{tpu_custom_call.1} parent=39 // pred_region
          %s249 = sand.u32 %s30, 1
          %s250 = scalar_lea.sflag [#allocation3], %s249
          %s251 = sand.u32 %s30, 1
          %s252 = smul.addr %s251, 32
          %s253 = scalar_lea.vmem [#allocation2], %s252
          %255 = vsyncadd %s250, 0
          %s256 = smul.addr %s20, 8
          %s257 = smul.addr %s256, 4
          %s258 = scalar_lea.hbm %s0, %s257
          %s260 = sshll.u32 %s258, 4
          %s261 = int_to_ptr.hbm [resolvable:$true] %s260
          %s262 = sshll.u32 %s253, 4
          %s263 = int_to_ptr.vmem [resolvable:$true] %s262
          %265 = dma.hbm_to_vmem [thread:$0]  %s261, 512, %s263, %s250
        $region44: #{tpu_custom_call.1} parent=39 // pred_fallthru
          _
      $region40: #{tpu_custom_call.1} parent=5 // pred_fallthru
        _
      %p266 = scmp.le.s32.totalorder 1, %s20
      %p267 = scmp.lt.s32.totalorder %s20, 3
      %p268 = pnand %p266, %p267
      %p269 = pneg %p268
      // Predicated region
      $region45: #{tpu_custom_call.1} parent=5 // pred_check
        _
      $region46: #{tpu_custom_call.1} parent=5 // pred_check_branch
        %271 = sbr.rel (%p268) target = $region48
      $region47: #{tpu_custom_call.1} parent=5 // pred_region
        %s272 = ssub.s32 %s20, 1
        %s273 = sand.u32 %s33, 1
        %s274 = scalar_lea.sflag [#allocation3], %s273
        %s275 = sand.u32 %s33, 1
        %s276 = smul.addr %s275, 32
        %s277 = scalar_lea.vmem [#allocation2], %s276
        // Predicated region
        $region49: #{tpu_custom_call.1} parent=47 // pred_check
          %p278 = pneg %p46
        $region50: #{tpu_custom_call.1} parent=47 // pred_check_branch
          %280 = sbr.rel (%p278) target = $region52
        $region51: #{tpu_custom_call.1} parent=47 // pred_region
          %282 = dma.done %s274, 512
        $region52: #{tpu_custom_call.1} parent=47 // pred_fallthru
          _
        // Predicated region
        $region53: #{tpu_custom_call.1} parent=47 // pred_check
          %p283 = pneg %p67
        $region54: #{tpu_custom_call.1} parent=47 // pred_check_branch
          %285 = sbr.rel (%p283) target = $region56
        $region55: #{tpu_custom_call.1} parent=47 // pred_region
          %287 = dma.done [#allocation6], 2048
        $region56: #{tpu_custom_call.1} parent=47 // pred_fallthru
          _
        %s288 = sand.u32 %s33, 1
        %s289 = scalar_lea.sflag [#allocation3], %s288
        %s290 = sand.u32 %s33, 1
        %s291 = smul.addr %s290, 32
        %s292 = scalar_lea.vmem [#allocation2], %s291
        %p293 = pneg %p46
        %p294 = pneg %p43
        %p295 = pneg %p67
        %p296 = pneg %p64
        %p297 = pneg %p88
        %p298 = pneg %p85
        %p299 = pneg %p109
        %p300 = pneg %p106
        %p301 = pneg %p130
        %p302 = pneg %p127
        %p303 = pneg %p151
        %p304 = pneg %p148
        %p305 = pneg %p172
        %p306 = pneg %p169
        %p307 = pneg %p198
        %p308 = pneg %p195
        %s309 = sand.u32 %s185, 1
        %s310 = scalar_lea.sflag [#allocation4], %s309
        %s311 = sand.u32 %s185, 1
        %s312 = smul.addr %s311, 64
        %s313 = scalar_lea.vmem [#allocation7], %s312
        %v314 = vld [vmem:[%s2] sm:$0xff]
        %v315 = vld [vmem:[%s4] sm:$0xff]
        %v316 = vld [vmem:[%s5] sm:$0xff]
        %v317 = vld [vmem:[%s3] sm:$0xff]
        %v318 = vld [vmem:[%s6] sm:$0xff]
        %v319 = vld [vmem:[%s277] sm:$0xff]
        %v320 = vld [vmem:[%s277 + $0x8] sm:$0xff]
        %v321 = vld [vmem:[%s277 + $0x10] sm:$0xff]
        %v322 = vld [vmem:[%s277 + $0x18] sm:$0xff]
        %324 = vset.pattern.permute.xlu0 0
        %325 = vperm.xlu0 %324, %v317
        %v326 = vpop.permute.xlu0 %325
        %332 = vst [vmem:[#allocation1] ss:$2 sm:$0xff] %v319
        %s333 = scalar_lea.vmem [#allocation1], 16
        %334 = vst [vmem:[%s333] ss:$2 sm:$0xff] %v320
        %s335 = scalar_lea.vmem [#allocation1], 32
        %336 = vst [vmem:[%s335] ss:$2 sm:$0xff] %v321
        %s337 = scalar_lea.vmem [#allocation1], 48
        %338 = vst [vmem:[%s337] ss:$2 sm:$0xff] %v322
        %v339 = vld.sshfl [vmem:[#allocation1] sm:$0xff pattern:$0x75316420]
        %v340 = vld.sshfl [vmem:[#allocation1 + $0x8] sm:$0xff pattern:$0x75316420]
        %v341 = vld.sshfl [vmem:[#allocation1 + $0x10] sm:$0xff pattern:$0x75316420]
        %v342 = vld.sshfl [vmem:[#allocation1 + $0x18] sm:$0xff pattern:$0x75316420]
        %v343 = vld.sshfl [vmem:[#allocation1 + $0x20] sm:$0xff pattern:$0x75316420]
        %v344 = vld.sshfl [vmem:[#allocation1 + $0x28] sm:$0xff pattern:$0x75316420]
        %v345 = vld.sshfl [vmem:[#allocation1 + $0x30] sm:$0xff pattern:$0x75316420]
        %v346 = vld.sshfl [vmem:[#allocation1 + $0x38] sm:$0xff pattern:$0x75316420]
        %355 = vrot.lane.b32.xlu0 %v339, 33
        %v356 = vpop.permute.xlu0 %355
        %357 = vrot.lane.b32.xlu0 %v340, 33
        %v358 = vpop.permute.xlu0 %357
        %359 = vrot.lane.b32.xlu0 %v341, 33
        %v360 = vpop.permute.xlu0 %359
        %361 = vrot.lane.b32.xlu0 %v342, 33
        %v362 = vpop.permute.xlu0 %361
        %363 = vrot.lane.b32.xlu0 %v343, 33
        %v364 = vpop.permute.xlu0 %363
        %365 = vrot.lane.b32.xlu0 %v344, 33
        %v366 = vpop.permute.xlu0 %365
        %367 = vrot.lane.b32.xlu0 %v345, 33
        %v368 = vpop.permute.xlu0 %367
        %369 = vrot.lane.b32.xlu0 %v346, 33
        %v370 = vpop.permute.xlu0 %369
        %v371 = vlaneseq
        %v372 = vand.u32 %v371, 127
        %vm373 = vcmp.lt.s32.totalorder %v372, 33
        %v374 = vsel %vm373, %v368, %v370
        %v375 = vsel %vm373, %v366, %v368
        %v376 = vsel %vm373, %v364, %v366
        %v377 = vsel %vm373, %v362, %v364
        %v378 = vsel %vm373, %v360, %v362
        %v379 = vsel %vm373, %v358, %v360
        %v380 = vsel %vm373, %v356, %v358
        %v381 = vsel %vm373, %v370, %v356
        %v382 = vld [vmem:[#allocation5] ss:$8 sm:$0xf]
        %v383 = vld [vmem:[#allocation5] ss:$8 sm:$0xf0]
        %v384 = vor.u32 %v382, %v383
        %v386 = vperm.slane %v384, 0
        %v387 = vperm.slane %v384, 1
        %v388 = vperm.slane %v384, 2
        %v389 = vperm.slane %v384, 3
        %v390 = vperm.slane %v384, 4
        %v391 = vperm.slane %v384, 5
        %v392 = vperm.slane %v384, 6
        %v393 = vperm.slane %v384, 7
        %v402 = vmul.f32 %v381, %v386
        %v403 = vmul.f32 %v380, %v387
        %v404 = vmul.f32 %v379, %v388
        %v405 = vmul.f32 %v378, %v389
        %v406 = vmul.f32 %v377, %v390
        %v407 = vmul.f32 %v376, %v391
        %v408 = vmul.f32 %v375, %v392
        %v409 = vmul.f32 %v374, %v393
        %vm410 = vcmask 31744
        %v412 = vsel %vm410, %v314, 0
        %vm414 = vcmask 1043456
        %v416 = vsel %vm414, %v402, 0
        %v419 = vsel %vm414, %v403, 0
        %v422 = vsel %vm414, %v404, 0
        %v425 = vsel %vm414, %v405, 0
        %v428 = vsel %vm414, %v406, 0
        %v431 = vsel %vm414, %v407, 0
        %v434 = vsel %vm414, %v408, 0
        %v437 = vsel %vm414, %v409, 0
        %439 = vmatpush.msra.mxu0 0.0
        %440 = vmatpush.msra.mxu0 0.0
        %441 = vmatpush.msra.mxu0 0.0
        %442 = vmatpush.msra.mxu0 0.0
        %443 = vmatpush.msra.mxu0 0.0
        %444 = vmatpush.msra.mxu0 0.0
        %445 = vmatpush.msra.mxu0 0.0
        %446 = vmatpush.msra.mxu0 0.0
        %447 = vmatpush.msra.mxu0 0.0
        %448 = vmatpush.msra.mxu0 0.0
        %449 = vmatpush.msra.mxu0 0.0
        %450 = vmatpush.msra.mxu0 0.0
        %451 = vmatpush.msra.mxu0 0.0
        %452 = vmatpush.msra.mxu0 0.0
        %453 = vmatpush.msra.mxu0 0.0
        %454 = vmatpush.msra.mxu0 %v416
        %455 = vmatmul.f32.gmra.mxu0 %v412
        %v456 = vpop.f32.mrf.mxu0
        %v457 = vadd.f32 0.0, %v456
        %458 = vdwg.mxu0
        %459 = vmatpush.msra.mxu0 0.0
        %460 = vmatpush.msra.mxu0 0.0
        %461 = vmatpush.msra.mxu0 0.0
        %462 = vmatpush.msra.mxu0 0.0
        %463 = vmatpush.msra.mxu0 0.0
        %464 = vmatpush.msra.mxu0 0.0
        %465 = vmatpush.msra.mxu0 0.0
        %466 = vmatpush.msra.mxu0 0.0
        %467 = vmatpush.msra.mxu0 0.0
        %468 = vmatpush.msra.mxu0 0.0
        %469 = vmatpush.msra.mxu0 0.0
        %470 = vmatpush.msra.mxu0 0.0
        %471 = vmatpush.msra.mxu0 0.0
        %472 = vmatpush.msra.mxu0 0.0
        %473 = vmatpush.msra.mxu0 0.0
        %474 = vmatpush.msra.mxu0 %v419
        %475 = vmatmul.f32.gmra.mxu0 %v412
        %v476 = vpop.f32.mrf.mxu0
        %v477 = vadd.f32 0.0, %v476
        %478 = vdwg.mxu0
        %479 = vmatpush.msra.mxu0 0.0
        %480 = vmatpush.msra.mxu0 0.0
        %481 = vmatpush.msra.mxu0 0.0
        %482 = vmatpush.msra.mxu0 0.0
        %483 = vmatpush.msra.mxu0 0.0
        %484 = vmatpush.msra.mxu0 0.0
        %485 = vmatpush.msra.mxu0 0.0
        %486 = vmatpush.msra.mxu0 0.0
        %487 = vmatpush.msra.mxu0 0.0
        %488 = vmatpush.msra.mxu0 0.0
        %489 = vmatpush.msra.mxu0 0.0
        %490 = vmatpush.msra.mxu0 0.0
        %491 = vmatpush.msra.mxu0 0.0
        %492 = vmatpush.msra.mxu0 0.0
        %493 = vmatpush.msra.mxu0 0.0
        %494 = vmatpush.msra.mxu0 %v422
        %495 = vmatmul.f32.gmra.mxu0 %v412
        %v496 = vpop.f32.mrf.mxu0
        %v497 = vadd.f32 0.0, %v496
        %498 = vdwg.mxu0
        %499 = vmatpush.msra.mxu0 0.0
        %500 = vmatpush.msra.mxu0 0.0
        %501 = vmatpush.msra.mxu0 0.0
        %502 = vmatpush.msra.mxu0 0.0
        %503 = vmatpush.msra.mxu0 0.0
        %504 = vmatpush.msra.mxu0 0.0
        %505 = vmatpush.msra.mxu0 0.0
        %506 = vmatpush.msra.mxu0 0.0
        %507 = vmatpush.msra.mxu0 0.0
        %508 = vmatpush.msra.mxu0 0.0
        %509 = vmatpush.msra.mxu0 0.0
        %510 = vmatpush.msra.mxu0 0.0
        %511 = vmatpush.msra.mxu0 0.0
        %512 = vmatpush.msra.mxu0 0.0
        %513 = vmatpush.msra.mxu0 0.0
        %514 = vmatpush.msra.mxu0 %v425
        %515 = vmatmul.f32.gmra.mxu0 %v412
        %v516 = vpop.f32.mrf.mxu0
        %v517 = vadd.f32 0.0, %v516
        %518 = vdwg.mxu0
        %519 = vmatpush.msra.mxu0 0.0
        %520 = vmatpush.msra.mxu0 0.0
        %521 = vmatpush.msra.mxu0 0.0
        %522 = vmatpush.msra.mxu0 0.0
        %523 = vmatpush.msra.mxu0 0.0
        %524 = vmatpush.msra.mxu0 0.0
        %525 = vmatpush.msra.mxu0 0.0
        %526 = vmatpush.msra.mxu0 0.0
        %527 = vmatpush.msra.mxu0 0.0
        %528 = vmatpush.msra.mxu0 0.0
        %529 = vmatpush.msra.mxu0 0.0
        %530 = vmatpush.msra.mxu0 0.0
        %531 = vmatpush.msra.mxu0 0.0
        %532 = vmatpush.msra.mxu0 0.0
        %533 = vmatpush.msra.mxu0 0.0
        %534 = vmatpush.msra.mxu0 %v428
        %535 = vmatmul.f32.gmra.mxu0 %v412
        %v536 = vpop.f32.mrf.mxu0
        %v537 = vadd.f32 0.0, %v536
        %538 = vdwg.mxu0
        %539 = vmatpush.msra.mxu0 0.0
        %540 = vmatpush.msra.mxu0 0.0
        %541 = vmatpush.msra.mxu0 0.0
        %542 = vmatpush.msra.mxu0 0.0
        %543 = vmatpush.msra.mxu0 0.0
        %544 = vmatpush.msra.mxu0 0.0
        %545 = vmatpush.msra.mxu0 0.0
        %546 = vmatpush.msra.mxu0 0.0
        %547 = vmatpush.msra.mxu0 0.0
        %548 = vmatpush.msra.mxu0 0.0
        %549 = vmatpush.msra.mxu0 0.0
        %550 = vmatpush.msra.mxu0 0.0
        %551 = vmatpush.msra.mxu0 0.0
        %552 = vmatpush.msra.mxu0 0.0
        %553 = vmatpush.msra.mxu0 0.0
        %554 = vmatpush.msra.mxu0 %v431
        %555 = vmatmul.f32.gmra.mxu0 %v412
        %v556 = vpop.f32.mrf.mxu0
        %v557 = vadd.f32 0.0, %v556
        %558 = vdwg.mxu0
        %559 = vmatpush.msra.mxu0 0.0
        %560 = vmatpush.msra.mxu0 0.0
        %561 = vmatpush.msra.mxu0 0.0
        %562 = vmatpush.msra.mxu0 0.0
        %563 = vmatpush.msra.mxu0 0.0
        %564 = vmatpush.msra.mxu0 0.0
        %565 = vmatpush.msra.mxu0 0.0
        %566 = vmatpush.msra.mxu0 0.0
        %567 = vmatpush.msra.mxu0 0.0
        %568 = vmatpush.msra.mxu0 0.0
        %569 = vmatpush.msra.mxu0 0.0
        %570 = vmatpush.msra.mxu0 0.0
        %571 = vmatpush.msra.mxu0 0.0
        %572 = vmatpush.msra.mxu0 0.0
        %573 = vmatpush.msra.mxu0 0.0
        %574 = vmatpush.msra.mxu0 %v434
        %575 = vmatmul.f32.gmra.mxu0 %v412
        %v576 = vpop.f32.mrf.mxu0
        %v577 = vadd.f32 0.0, %v576
        %578 = vdwg.mxu0
        %579 = vmatpush.msra.mxu0 0.0
        %580 = vmatpush.msra.mxu0 0.0
        %581 = vmatpush.msra.mxu0 0.0
        %582 = vmatpush.msra.mxu0 0.0
        %583 = vmatpush.msra.mxu0 0.0
        %584 = vmatpush.msra.mxu0 0.0
        %585 = vmatpush.msra.mxu0 0.0
        %586 = vmatpush.msra.mxu0 0.0
        %587 = vmatpush.msra.mxu0 0.0
        %588 = vmatpush.msra.mxu0 0.0
        %589 = vmatpush.msra.mxu0 0.0
        %590 = vmatpush.msra.mxu0 0.0
        %591 = vmatpush.msra.mxu0 0.0
        %592 = vmatpush.msra.mxu0 0.0
        %593 = vmatpush.msra.mxu0 0.0
        %594 = vmatpush.msra.mxu0 %v437
        %595 = vmatmul.f32.gmra.mxu0 %v412
        %v596 = vpop.f32.mrf.mxu0
        %v597 = vadd.f32 0.0, %v596
        %598 = vdwg.mxu0
        %v599 = vadd.f32 %v326, %v457
        %v600 = vadd.f32 %v326, %v477
        %v601 = vadd.f32 %v326, %v497
        %v602 = vadd.f32 %v326, %v517
        %v603 = vadd.f32 %v326, %v537
        %v604 = vadd.f32 %v326, %v557
        %v605 = vadd.f32 %v326, %v577
        %v606 = vadd.f32 %v326, %v597
        %607 = vst [vmem:[#allocation1] ss:$2 sm:$0xff] %v319
        %s608 = scalar_lea.vmem [#allocation1], 16
        %609 = vst [vmem:[%s608] ss:$2 sm:$0xff] %v320
        %s610 = scalar_lea.vmem [#allocation1], 32
        %611 = vst [vmem:[%s610] ss:$2 sm:$0xff] %v321
        %s612 = scalar_lea.vmem [#allocation1], 48
        %613 = vst [vmem:[%s612] ss:$2 sm:$0xff] %v322
        %v614 = vld.sshfl [vmem:[#allocation1] sm:$0xff pattern:$0x75316420]
        %v615 = vld.sshfl [vmem:[#allocation1 + $0x8] sm:$0xff pattern:$0x75316420]
        %v616 = vld.sshfl [vmem:[#allocation1 + $0x10] sm:$0xff pattern:$0x75316420]
        %v617 = vld.sshfl [vmem:[#allocation1 + $0x18] sm:$0xff pattern:$0x75316420]
        %v618 = vld.sshfl [vmem:[#allocation1 + $0x20] sm:$0xff pattern:$0x75316420]
        %v619 = vld.sshfl [vmem:[#allocation1 + $0x28] sm:$0xff pattern:$0x75316420]
        %v620 = vld.sshfl [vmem:[#allocation1 + $0x30] sm:$0xff pattern:$0x75316420]
        %v621 = vld.sshfl [vmem:[#allocation1 + $0x38] sm:$0xff pattern:$0x75316420]
        %630 = vrot.lane.b32.xlu0 %v614, 32
        %v631 = vpop.permute.xlu0 %630
        %632 = vrot.lane.b32.xlu0 %v615, 32
        %v633 = vpop.permute.xlu0 %632
        %634 = vrot.lane.b32.xlu0 %v616, 32
        %v635 = vpop.permute.xlu0 %634
        %636 = vrot.lane.b32.xlu0 %v617, 32
        %v637 = vpop.permute.xlu0 %636
        %638 = vrot.lane.b32.xlu0 %v618, 32
        %v639 = vpop.permute.xlu0 %638
        %640 = vrot.lane.b32.xlu0 %v619, 32
        %v641 = vpop.permute.xlu0 %640
        %642 = vrot.lane.b32.xlu0 %v620, 32
        %v643 = vpop.permute.xlu0 %642
        %644 = vrot.lane.b32.xlu0 %v621, 32
        %v645 = vpop.permute.xlu0 %644
        %vm646 = vcmp.lt.s32.totalorder %v372, 32
        %v647 = vsel %vm646, %v643, %v645
        %v648 = vsel %vm646, %v641, %v643
        %v649 = vsel %vm646, %v639, %v641
        %v650 = vsel %vm646, %v637, %v639
        %v651 = vsel %vm646, %v635, %v637
        %v652 = vsel %vm646, %v633, %v635
        %v653 = vsel %vm646, %v631, %v633
        %v654 = vsel %vm646, %v645, %v631
        %s655 = scalar_lea.vmem [#allocation5], 1
        %v656 = vld [vmem:[%s655] ss:$8 sm:$0xf]
        %v657 = vld [vmem:[%s655] ss:$8 sm:$0xf0]
        %v658 = vor.u32 %v656, %v657
        %v660 = vperm.slane %v658, 0
        %v661 = vperm.slane %v658, 1
        %v662 = vperm.slane %v658, 2
        %v663 = vperm.slane %v658, 3
        %v664 = vperm.slane %v658, 4
        %v665 = vperm.slane %v658, 5
        %v666 = vperm.slane %v658, 6
        %v667 = vperm.slane %v658, 7
        %v676 = vmul.f32 %v654, %v660
        %v677 = vmul.f32 %v653, %v661
        %v678 = vmul.f32 %v652, %v662
        %v679 = vmul.f32 %v651, %v663
        %v680 = vmul.f32 %v650, %v664
        %v681 = vmul.f32 %v649, %v665
        %v682 = vmul.f32 %v648, %v666
        %v683 = vmul.f32 %v647, %v667
        %684 = vrot.lane.b32.xlu0 %v314, 124
        %v685 = vpop.permute.xlu0 %684
        %v686 = vsel %vm410, %v685, 0
        %v689 = vsel %vm414, %v676, 0
        %v692 = vsel %vm414, %v677, 0
        %v695 = vsel %vm414, %v678, 0
        %v698 = vsel %vm414, %v679, 0
        %v701 = vsel %vm414, %v680, 0
        %v704 = vsel %vm414, %v681, 0
        %v707 = vsel %vm414, %v682, 0
        %v710 = vsel %vm414, %v683, 0
        %712 = vmatpush.msra.mxu0 0.0
        %713 = vmatpush.msra.mxu0 0.0
        %714 = vmatpush.msra.mxu0 0.0
        %715 = vmatpush.msra.mxu0 0.0
        %716 = vmatpush.msra.mxu0 0.0
        %717 = vmatpush.msra.mxu0 0.0
        %718 = vmatpush.msra.mxu0 0.0
        %719 = vmatpush.msra.mxu0 0.0
        %720 = vmatpush.msra.mxu0 0.0
        %721 = vmatpush.msra.mxu0 0.0
        %722 = vmatpush.msra.mxu0 0.0
        %723 = vmatpush.msra.mxu0 0.0
        %724 = vmatpush.msra.mxu0 0.0
        %725 = vmatpush.msra.mxu0 0.0
        %726 = vmatpush.msra.mxu0 0.0
        %727 = vmatpush.msra.mxu0 %v689
        %728 = vmatmul.f32.gmra.mxu0 %v686
        %v729 = vpop.f32.mrf.mxu0
        %v730 = vadd.f32 0.0, %v729
        %731 = vdwg.mxu0
        %732 = vmatpush.msra.mxu0 0.0
        %733 = vmatpush.msra.mxu0 0.0
        %734 = vmatpush.msra.mxu0 0.0
        %735 = vmatpush.msra.mxu0 0.0
        %736 = vmatpush.msra.mxu0 0.0
        %737 = vmatpush.msra.mxu0 0.0
        %738 = vmatpush.msra.mxu0 0.0
        %739 = vmatpush.msra.mxu0 0.0
        %740 = vmatpush.msra.mxu0 0.0
        %741 = vmatpush.msra.mxu0 0.0
        %742 = vmatpush.msra.mxu0 0.0
        %743 = vmatpush.msra.mxu0 0.0
        %744 = vmatpush.msra.mxu0 0.0
        %745 = vmatpush.msra.mxu0 0.0
        %746 = vmatpush.msra.mxu0 0.0
        %747 = vmatpush.msra.mxu0 %v692
        %748 = vmatmul.f32.gmra.mxu0 %v686
        %v749 = vpop.f32.mrf.mxu0
        %v750 = vadd.f32 0.0, %v749
        %751 = vdwg.mxu0
        %752 = vmatpush.msra.mxu0 0.0
        %753 = vmatpush.msra.mxu0 0.0
        %754 = vmatpush.msra.mxu0 0.0
        %755 = vmatpush.msra.mxu0 0.0
        %756 = vmatpush.msra.mxu0 0.0
        %757 = vmatpush.msra.mxu0 0.0
        %758 = vmatpush.msra.mxu0 0.0
        %759 = vmatpush.msra.mxu0 0.0
        %760 = vmatpush.msra.mxu0 0.0
        %761 = vmatpush.msra.mxu0 0.0
        %762 = vmatpush.msra.mxu0 0.0
        %763 = vmatpush.msra.mxu0 0.0
        %764 = vmatpush.msra.mxu0 0.0
        %765 = vmatpush.msra.mxu0 0.0
        %766 = vmatpush.msra.mxu0 0.0
        %767 = vmatpush.msra.mxu0 %v695
        %768 = vmatmul.f32.gmra.mxu0 %v686
        %v769 = vpop.f32.mrf.mxu0
        %v770 = vadd.f32 0.0, %v769
        %771 = vdwg.mxu0
        %772 = vmatpush.msra.mxu0 0.0
        %773 = vmatpush.msra.mxu0 0.0
        %774 = vmatpush.msra.mxu0 0.0
        %775 = vmatpush.msra.mxu0 0.0
        %776 = vmatpush.msra.mxu0 0.0
        %777 = vmatpush.msra.mxu0 0.0
        %778 = vmatpush.msra.mxu0 0.0
        %779 = vmatpush.msra.mxu0 0.0
        %780 = vmatpush.msra.mxu0 0.0
        %781 = vmatpush.msra.mxu0 0.0
        %782 = vmatpush.msra.mxu0 0.0
        %783 = vmatpush.msra.mxu0 0.0
        %784 = vmatpush.msra.mxu0 0.0
        %785 = vmatpush.msra.mxu0 0.0
        %786 = vmatpush.msra.mxu0 0.0
        %787 = vmatpush.msra.mxu0 %v698
        %788 = vmatmul.f32.gmra.mxu0 %v686
        %v789 = vpop.f32.mrf.mxu0
        %v790 = vadd.f32 0.0, %v789
        %791 = vdwg.mxu0
        %792 = vmatpush.msra.mxu0 0.0
        %793 = vmatpush.msra.mxu0 0.0
        %794 = vmatpush.msra.mxu0 0.0
        %795 = vmatpush.msra.mxu0 0.0
        %796 = vmatpush.msra.mxu0 0.0
        %797 = vmatpush.msra.mxu0 0.0
        %798 = vmatpush.msra.mxu0 0.0
        %799 = vmatpush.msra.mxu0 0.0
        %800 = vmatpush.msra.mxu0 0.0
        %801 = vmatpush.msra.mxu0 0.0
        %802 = vmatpush.msra.mxu0 0.0
        %803 = vmatpush.msra.mxu0 0.0
        %804 = vmatpush.msra.mxu0 0.0
        %805 = vmatpush.msra.mxu0 0.0
        %806 = vmatpush.msra.mxu0 0.0
        %807 = vmatpush.msra.mxu0 %v701
        %808 = vmatmul.f32.gmra.mxu0 %v686
        %v809 = vpop.f32.mrf.mxu0
        %v810 = vadd.f32 0.0, %v809
        %811 = vdwg.mxu0
        %812 = vmatpush.msra.mxu0 0.0
        %813 = vmatpush.msra.mxu0 0.0
        %814 = vmatpush.msra.mxu0 0.0
        %815 = vmatpush.msra.mxu0 0.0
        %816 = vmatpush.msra.mxu0 0.0
        %817 = vmatpush.msra.mxu0 0.0
        %818 = vmatpush.msra.mxu0 0.0
        %819 = vmatpush.msra.mxu0 0.0
        %820 = vmatpush.msra.mxu0 0.0
        %821 = vmatpush.msra.mxu0 0.0
        %822 = vmatpush.msra.mxu0 0.0
        %823 = vmatpush.msra.mxu0 0.0
        %824 = vmatpush.msra.mxu0 0.0
        %825 = vmatpush.msra.mxu0 0.0
        %826 = vmatpush.msra.mxu0 0.0
        %827 = vmatpush.msra.mxu0 %v704
        %828 = vmatmul.f32.gmra.mxu0 %v686
        %v829 = vpop.f32.mrf.mxu0
        %v830 = vadd.f32 0.0, %v829
        %831 = vdwg.mxu0
        %832 = vmatpush.msra.mxu0 0.0
        %833 = vmatpush.msra.mxu0 0.0
        %834 = vmatpush.msra.mxu0 0.0
        %835 = vmatpush.msra.mxu0 0.0
        %836 = vmatpush.msra.mxu0 0.0
        %837 = vmatpush.msra.mxu0 0.0
        %838 = vmatpush.msra.mxu0 0.0
        %839 = vmatpush.msra.mxu0 0.0
        %840 = vmatpush.msra.mxu0 0.0
        %841 = vmatpush.msra.mxu0 0.0
        %842 = vmatpush.msra.mxu0 0.0
        %843 = vmatpush.msra.mxu0 0.0
        %844 = vmatpush.msra.mxu0 0.0
        %845 = vmatpush.msra.mxu0 0.0
        %846 = vmatpush.msra.mxu0 0.0
        %847 = vmatpush.msra.mxu0 %v707
        %848 = vmatmul.f32.gmra.mxu0 %v686
        %v849 = vpop.f32.mrf.mxu0
        %v850 = vadd.f32 0.0, %v849
        %851 = vdwg.mxu0
        %852 = vmatpush.msra.mxu0 0.0
        %853 = vmatpush.msra.mxu0 0.0
        %854 = vmatpush.msra.mxu0 0.0
        %855 = vmatpush.msra.mxu0 0.0
        %856 = vmatpush.msra.mxu0 0.0
        %857 = vmatpush.msra.mxu0 0.0
        %858 = vmatpush.msra.mxu0 0.0
        %859 = vmatpush.msra.mxu0 0.0
        %860 = vmatpush.msra.mxu0 0.0
        %861 = vmatpush.msra.mxu0 0.0
        %862 = vmatpush.msra.mxu0 0.0
        %863 = vmatpush.msra.mxu0 0.0
        %864 = vmatpush.msra.mxu0 0.0
        %865 = vmatpush.msra.mxu0 0.0
        %866 = vmatpush.msra.mxu0 0.0
        %867 = vmatpush.msra.mxu0 %v710
        %868 = vmatmul.f32.gmra.mxu0 %v686
        %v869 = vpop.f32.mrf.mxu0
        %v870 = vadd.f32 0.0, %v869
        %871 = vdwg.mxu0
        %v872 = vadd.f32 %v599, %v730
        %v873 = vadd.f32 %v600, %v750
        %v874 = vadd.f32 %v601, %v770
        %v875 = vadd.f32 %v602, %v790
        %v876 = vadd.f32 %v603, %v810
        %v877 = vadd.f32 %v604, %v830
        %v878 = vadd.f32 %v605, %v850
        %v879 = vadd.f32 %v606, %v870
        %880 = vst [vmem:[#allocation1] ss:$2 sm:$0xff] %v319
        %s881 = scalar_lea.vmem [#allocation1], 16
        %882 = vst [vmem:[%s881] ss:$2 sm:$0xff] %v320
        %s883 = scalar_lea.vmem [#allocation1], 32
        %884 = vst [vmem:[%s883] ss:$2 sm:$0xff] %v321
        %s885 = scalar_lea.vmem [#allocation1], 48
        %886 = vst [vmem:[%s885] ss:$2 sm:$0xff] %v322
        %v887 = vld.sshfl [vmem:[#allocation1] sm:$0xff pattern:$0x75316420]
        %v888 = vld.sshfl [vmem:[#allocation1 + $0x8] sm:$0xff pattern:$0x75316420]
        %v889 = vld.sshfl [vmem:[#allocation1 + $0x10] sm:$0xff pattern:$0x75316420]
        %v890 = vld.sshfl [vmem:[#allocation1 + $0x18] sm:$0xff pattern:$0x75316420]
        %v891 = vld.sshfl [vmem:[#allocation1 + $0x20] sm:$0xff pattern:$0x75316420]
        %v892 = vld.sshfl [vmem:[#allocation1 + $0x28] sm:$0xff pattern:$0x75316420]
        %v893 = vld.sshfl [vmem:[#allocation1 + $0x30] sm:$0xff pattern:$0x75316420]
        %v894 = vld.sshfl [vmem:[#allocation1 + $0x38] sm:$0xff pattern:$0x75316420]
        %903 = vrot.lane.b32.xlu0 %v887, 31
        %v904 = vpop.permute.xlu0 %903
        %905 = vrot.lane.b32.xlu0 %v888, 31
        %v906 = vpop.permute.xlu0 %905
        %907 = vrot.lane.b32.xlu0 %v889, 31
        %v908 = vpop.permute.xlu0 %907
        %909 = vrot.lane.b32.xlu0 %v890, 31
        %v910 = vpop.permute.xlu0 %909
        %911 = vrot.lane.b32.xlu0 %v891, 31
        %v912 = vpop.permute.xlu0 %911
        %913 = vrot.lane.b32.xlu0 %v892, 31
        %v914 = vpop.permute.xlu0 %913
        %915 = vrot.lane.b32.xlu0 %v893, 31
        %v916 = vpop.permute.xlu0 %915
        %917 = vrot.lane.b32.xlu0 %v894, 31
        %v918 = vpop.permute.xlu0 %917
        %vm919 = vcmp.lt.s32.totalorder %v372, 31
        %v920 = vsel %vm919, %v916, %v918
        %v921 = vsel %vm919, %v914, %v916
        %v922 = vsel %vm919, %v912, %v914
        %v923 = vsel %vm919, %v910, %v912
        %v924 = vsel %vm919, %v908, %v910
        %v925 = vsel %vm919, %v906, %v908
        %v926 = vsel %vm919, %v904, %v906
        %v927 = vsel %vm919, %v918, %v904
        %s928 = scalar_lea.vmem [#allocation5], 2
        %v929 = vld [vmem:[%s928] ss:$8 sm:$0xf]
        %v930 = vld [vmem:[%s928] ss:$8 sm:$0xf0]
        %v931 = vor.u32 %v929, %v930
        %v933 = vperm.slane %v931, 0
        %v934 = vperm.slane %v931, 1
        %v935 = vperm.slane %v931, 2
        %v936 = vperm.slane %v931, 3
        %v937 = vperm.slane %v931, 4
        %v938 = vperm.slane %v931, 5
        %v939 = vperm.slane %v931, 6
        %v940 = vperm.slane %v931, 7
        %v949 = vmul.f32 %v927, %v933
        %v950 = vmul.f32 %v926, %v934
        %v951 = vmul.f32 %v925, %v935
        %v952 = vmul.f32 %v924, %v936
        %v953 = vmul.f32 %v923, %v937
        %v954 = vmul.f32 %v922, %v938
        %v955 = vmul.f32 %v921, %v939
        %v956 = vmul.f32 %v920, %v940
        %957 = vrot.lane.b32.xlu0 %v314, 120
        %v958 = vpop.permute.xlu0 %957
        %v959 = vsel %vm410, %v958, 0
        %v962 = vsel %vm414, %v949, 0
        %v965 = vsel %vm414, %v950, 0
        %v968 = vsel %vm414, %v951, 0
        %v971 = vsel %vm414, %v952, 0
        %v974 = vsel %vm414, %v953, 0
        %v977 = vsel %vm414, %v954, 0
        %v980 = vsel %vm414, %v955, 0
        %v983 = vsel %vm414, %v956, 0
        %985 = vmatpush.msra.mxu0 0.0
        %986 = vmatpush.msra.mxu0 0.0
        %987 = vmatpush.msra.mxu0 0.0
        %988 = vmatpush.msra.mxu0 0.0
        %989 = vmatpush.msra.mxu0 0.0
        %990 = vmatpush.msra.mxu0 0.0
        %991 = vmatpush.msra.mxu0 0.0
        %992 = vmatpush.msra.mxu0 0.0
        %993 = vmatpush.msra.mxu0 0.0
        %994 = vmatpush.msra.mxu0 0.0
        %995 = vmatpush.msra.mxu0 0.0
        %996 = vmatpush.msra.mxu0 0.0
        %997 = vmatpush.msra.mxu0 0.0
        %998 = vmatpush.msra.mxu0 0.0
        %999 = vmatpush.msra.mxu0 0.0
        %1000 = vmatpush.msra.mxu0 %v962
        %1001 = vmatmul.f32.gmra.mxu0 %v959
        %v1002 = vpop.f32.mrf.mxu0
        %v1003 = vadd.f32 0.0, %v1002
        %1004 = vdwg.mxu0
        %1005 = vmatpush.msra.mxu0 0.0
        %1006 = vmatpush.msra.mxu0 0.0
        %1007 = vmatpush.msra.mxu0 0.0
        %1008 = vmatpush.msra.mxu0 0.0
        %1009 = vmatpush.msra.mxu0 0.0
        %1010 = vmatpush.msra.mxu0 0.0
        %1011 = vmatpush.msra.mxu0 0.0
        %1012 = vmatpush.msra.mxu0 0.0
        %1013 = vmatpush.msra.mxu0 0.0
        %1014 = vmatpush.msra.mxu0 0.0
        %1015 = vmatpush.msra.mxu0 0.0
        %1016 = vmatpush.msra.mxu0 0.0
        %1017 = vmatpush.msra.mxu0 0.0
        %1018 = vmatpush.msra.mxu0 0.0
        %1019 = vmatpush.msra.mxu0 0.0
        %1020 = vmatpush.msra.mxu0 %v965
        %1021 = vmatmul.f32.gmra.mxu0 %v959
        %v1022 = vpop.f32.mrf.mxu0
        %v1023 = vadd.f32 0.0, %v1022
        %1024 = vdwg.mxu0
        %1025 = vmatpush.msra.mxu0 0.0
        %1026 = vmatpush.msra.mxu0 0.0
        %1027 = vmatpush.msra.mxu0 0.0
        %1028 = vmatpush.msra.mxu0 0.0
        %1029 = vmatpush.msra.mxu0 0.0
        %1030 = vmatpush.msra.mxu0 0.0
        %1031 = vmatpush.msra.mxu0 0.0
        %1032 = vmatpush.msra.mxu0 0.0
        %1033 = vmatpush.msra.mxu0 0.0
        %1034 = vmatpush.msra.mxu0 0.0
        %1035 = vmatpush.msra.mxu0 0.0
        %1036 = vmatpush.msra.mxu0 0.0
        %1037 = vmatpush.msra.mxu0 0.0
        %1038 = vmatpush.msra.mxu0 0.0
        %1039 = vmatpush.msra.mxu0 0.0
        %1040 = vmatpush.msra.mxu0 %v968
        %1041 = vmatmul.f32.gmra.mxu0 %v959
        %v1042 = vpop.f32.mrf.mxu0
        %v1043 = vadd.f32 0.0, %v1042
        %1044 = vdwg.mxu0
        %1045 = vmatpush.msra.mxu0 0.0
        %1046 = vmatpush.msra.mxu0 0.0
        %1047 = vmatpush.msra.mxu0 0.0
        %1048 = vmatpush.msra.mxu0 0.0
        %1049 = vmatpush.msra.mxu0 0.0
        %1050 = vmatpush.msra.mxu0 0.0
        %1051 = vmatpush.msra.mxu0 0.0
        %1052 = vmatpush.msra.mxu0 0.0
        %1053 = vmatpush.msra.mxu0 0.0
        %1054 = vmatpush.msra.mxu0 0.0
        %1055 = vmatpush.msra.mxu0 0.0
        %1056 = vmatpush.msra.mxu0 0.0
        %1057 = vmatpush.msra.mxu0 0.0
        %1058 = vmatpush.msra.mxu0 0.0
        %1059 = vmatpush.msra.mxu0 0.0
        %1060 = vmatpush.msra.mxu0 %v971
        %1061 = vmatmul.f32.gmra.mxu0 %v959
        %v1062 = vpop.f32.mrf.mxu0
        %v1063 = vadd.f32 0.0, %v1062
        %1064 = vdwg.mxu0
        %1065 = vmatpush.msra.mxu0 0.0
        %1066 = vmatpush.msra.mxu0 0.0
        %1067 = vmatpush.msra.mxu0 0.0
        %1068 = vmatpush.msra.mxu0 0.0
        %1069 = vmatpush.msra.mxu0 0.0
        %1070 = vmatpush.msra.mxu0 0.0
        %1071 = vmatpush.msra.mxu0 0.0
        %1072 = vmatpush.msra.mxu0 0.0
        %1073 = vmatpush.msra.mxu0 0.0
        %1074 = vmatpush.msra.mxu0 0.0
        %1075 = vmatpush.msra.mxu0 0.0
        %1076 = vmatpush.msra.mxu0 0.0
        %1077 = vmatpush.msra.mxu0 0.0
        %1078 = vmatpush.msra.mxu0 0.0
        %1079 = vmatpush.msra.mxu0 0.0
        %1080 = vmatpush.msra.mxu0 %v974
        %1081 = vmatmul.f32.gmra.mxu0 %v959
        %v1082 = vpop.f32.mrf.mxu0
        %v1083 = vadd.f32 0.0, %v1082
        %1084 = vdwg.mxu0
        %1085 = vmatpush.msra.mxu0 0.0
        %1086 = vmatpush.msra.mxu0 0.0
        %1087 = vmatpush.msra.mxu0 0.0
        %1088 = vmatpush.msra.mxu0 0.0
        %1089 = vmatpush.msra.mxu0 0.0
        %1090 = vmatpush.msra.mxu0 0.0
        %1091 = vmatpush.msra.mxu0 0.0
        %1092 = vmatpush.msra.mxu0 0.0
        %1093 = vmatpush.msra.mxu0 0.0
        %1094 = vmatpush.msra.mxu0 0.0
        %1095 = vmatpush.msra.mxu0 0.0
        %1096 = vmatpush.msra.mxu0 0.0
        %1097 = vmatpush.msra.mxu0 0.0
        %1098 = vmatpush.msra.mxu0 0.0
        %1099 = vmatpush.msra.mxu0 0.0
        %1100 = vmatpush.msra.mxu0 %v977
        %1101 = vmatmul.f32.gmra.mxu0 %v959
        %v1102 = vpop.f32.mrf.mxu0
        %v1103 = vadd.f32 0.0, %v1102
        %1104 = vdwg.mxu0
        %1105 = vmatpush.msra.mxu0 0.0
        %1106 = vmatpush.msra.mxu0 0.0
        %1107 = vmatpush.msra.mxu0 0.0
        %1108 = vmatpush.msra.mxu0 0.0
        %1109 = vmatpush.msra.mxu0 0.0
        %1110 = vmatpush.msra.mxu0 0.0
        %1111 = vmatpush.msra.mxu0 0.0
        %1112 = vmatpush.msra.mxu0 0.0
        %1113 = vmatpush.msra.mxu0 0.0
        %1114 = vmatpush.msra.mxu0 0.0
        %1115 = vmatpush.msra.mxu0 0.0
        %1116 = vmatpush.msra.mxu0 0.0
        %1117 = vmatpush.msra.mxu0 0.0
        %1118 = vmatpush.msra.mxu0 0.0
        %1119 = vmatpush.msra.mxu0 0.0
        %1120 = vmatpush.msra.mxu0 %v980
        %1121 = vmatmul.f32.gmra.mxu0 %v959
        %v1122 = vpop.f32.mrf.mxu0
        %v1123 = vadd.f32 0.0, %v1122
        %1124 = vdwg.mxu0
        %1125 = vmatpush.msra.mxu0 0.0
        %1126 = vmatpush.msra.mxu0 0.0
        %1127 = vmatpush.msra.mxu0 0.0
        %1128 = vmatpush.msra.mxu0 0.0
        %1129 = vmatpush.msra.mxu0 0.0
        %1130 = vmatpush.msra.mxu0 0.0
        %1131 = vmatpush.msra.mxu0 0.0
        %1132 = vmatpush.msra.mxu0 0.0
        %1133 = vmatpush.msra.mxu0 0.0
        %1134 = vmatpush.msra.mxu0 0.0
        %1135 = vmatpush.msra.mxu0 0.0
        %1136 = vmatpush.msra.mxu0 0.0
        %1137 = vmatpush.msra.mxu0 0.0
        %1138 = vmatpush.msra.mxu0 0.0
        %1139 = vmatpush.msra.mxu0 0.0
        %1140 = vmatpush.msra.mxu0 %v983
        %1141 = vmatmul.f32.gmra.mxu0 %v959
        %v1142 = vpop.f32.mrf.mxu0
        %v1143 = vadd.f32 0.0, %v1142
        %1144 = vdwg.mxu0
        %v1145 = vadd.f32 %v872, %v1003
        %v1146 = vadd.f32 %v873, %v1023
        %v1147 = vadd.f32 %v874, %v1043
        %v1148 = vadd.f32 %v875, %v1063
        %v1149 = vadd.f32 %v876, %v1083
        %v1150 = vadd.f32 %v877, %v1103
        %v1151 = vadd.f32 %v878, %v1123
        %v1152 = vadd.f32 %v879, %v1143
        %1153 = vst [vmem:[#allocation1] ss:$2 sm:$0xff] %v319
        %s1154 = scalar_lea.vmem [#allocation1], 16
        %1155 = vst [vmem:[%s1154] ss:$2 sm:$0xff] %v320
        %s1156 = scalar_lea.vmem [#allocation1], 32
        %1157 = vst [vmem:[%s1156] ss:$2 sm:$0xff] %v321
        %s1158 = scalar_lea.vmem [#allocation1], 48
        %1159 = vst [vmem:[%s1158] ss:$2 sm:$0xff] %v322
        %v1160 = vld.sshfl [vmem:[#allocation1] sm:$0xff pattern:$0x75316420]
        %v1161 = vld.sshfl [vmem:[#allocation1 + $0x8] sm:$0xff pattern:$0x75316420]
        %v1162 = vld.sshfl [vmem:[#allocation1 + $0x10] sm:$0xff pattern:$0x75316420]
        %v1163 = vld.sshfl [vmem:[#allocation1 + $0x18] sm:$0xff pattern:$0x75316420]
        %v1164 = vld.sshfl [vmem:[#allocation1 + $0x20] sm:$0xff pattern:$0x75316420]
        %v1165 = vld.sshfl [vmem:[#allocation1 + $0x28] sm:$0xff pattern:$0x75316420]
        %v1166 = vld.sshfl [vmem:[#allocation1 + $0x30] sm:$0xff pattern:$0x75316420]
        %v1167 = vld.sshfl [vmem:[#allocation1 + $0x38] sm:$0xff pattern:$0x75316420]
        %1176 = vrot.lane.b32.xlu0 %v1160, 1
        %v1177 = vpop.permute.xlu0 %1176
        %1178 = vrot.lane.b32.xlu0 %v1161, 1
        %v1179 = vpop.permute.xlu0 %1178
        %1180 = vrot.lane.b32.xlu0 %v1162, 1
        %v1181 = vpop.permute.xlu0 %1180
        %1182 = vrot.lane.b32.xlu0 %v1163, 1
        %v1183 = vpop.permute.xlu0 %1182
        %1184 = vrot.lane.b32.xlu0 %v1164, 1
        %v1185 = vpop.permute.xlu0 %1184
        %1186 = vrot.lane.b32.xlu0 %v1165, 1
        %v1187 = vpop.permute.xlu0 %1186
        %1188 = vrot.lane.b32.xlu0 %v1166, 1
        %v1189 = vpop.permute.xlu0 %1188
        %1190 = vrot.lane.b32.xlu0 %v1167, 1
        %v1191 = vpop.permute.xlu0 %1190
        %vm1192 = vcmp.lt.s32.totalorder %v372, 1
        %v1193 = vsel %vm1192, %v1189, %v1191
        %v1194 = vsel %vm1192, %v1187, %v1189
        %v1195 = vsel %vm1192, %v1185, %v1187
        %v1196 = vsel %vm1192, %v1183, %v1185
        %v1197 = vsel %vm1192, %v1181, %v1183
        %v1198 = vsel %vm1192, %v1179, %v1181
        %v1199 = vsel %vm1192, %v1177, %v1179
        %v1200 = vsel %vm1192, %v1191, %v1177
        %s1201 = scalar_lea.vmem [#allocation5], 3
        %v1202 = vld [vmem:[%s1201] ss:$8 sm:$0xf]
        %v1203 = vld [vmem:[%s1201] ss:$8 sm:$0xf0]
        %v1204 = vor.u32 %v1202, %v1203
        %v1206 = vperm.slane %v1204, 0
        %v1207 = vperm.slane %v1204, 1
        %v1208 = vperm.slane %v1204, 2
        %v1209 = vperm.slane %v1204, 3
        %v1210 = vperm.slane %v1204, 4
        %v1211 = vperm.slane %v1204, 5
        %v1212 = vperm.slane %v1204, 6
        %v1213 = vperm.slane %v1204, 7
        %v1222 = vmul.f32 %v1200, %v1206
        %v1223 = vmul.f32 %v1199, %v1207
        %v1224 = vmul.f32 %v1198, %v1208
        %v1225 = vmul.f32 %v1197, %v1209
        %v1226 = vmul.f32 %v1196, %v1210
        %v1227 = vmul.f32 %v1195, %v1211
        %v1228 = vmul.f32 %v1194, %v1212
        %v1229 = vmul.f32 %v1193, %v1213
        %1230 = vrot.lane.b32.xlu0 %v314, 116
        %v1231 = vpop.permute.xlu0 %1230
        %v1232 = vsel %vm410, %v1231, 0
        %v1235 = vsel %vm414, %v1222, 0
        %v1238 = vsel %vm414, %v1223, 0
        %v1241 = vsel %vm414, %v1224, 0
        %v1244 = vsel %vm414, %v1225, 0
        %v1247 = vsel %vm414, %v1226, 0
        %v1250 = vsel %vm414, %v1227, 0
        %v1253 = vsel %vm414, %v1228, 0
        %v1256 = vsel %vm414, %v1229, 0
        %1258 = vmatpush.msra.mxu0 0.0
        %1259 = vmatpush.msra.mxu0 0.0
        %1260 = vmatpush.msra.mxu0 0.0
        %1261 = vmatpush.msra.mxu0 0.0
        %1262 = vmatpush.msra.mxu0 0.0
        %1263 = vmatpush.msra.mxu0 0.0
        %1264 = vmatpush.msra.mxu0 0.0
        %1265 = vmatpush.msra.mxu0 0.0
        %1266 = vmatpush.msra.mxu0 0.0
        %1267 = vmatpush.msra.mxu0 0.0
        %1268 = vmatpush.msra.mxu0 0.0
        %1269 = vmatpush.msra.mxu0 0.0
        %1270 = vmatpush.msra.mxu0 0.0
        %1271 = vmatpush.msra.mxu0 0.0
        %1272 = vmatpush.msra.mxu0 0.0
        %1273 = vmatpush.msra.mxu0 %v1235
        %1274 = vmatmul.f32.gmra.mxu0 %v1232
        %v1275 = vpop.f32.mrf.mxu0
        %v1276 = vadd.f32 0.0, %v1275
        %1277 = vdwg.mxu0
        %1278 = vmatpush.msra.mxu0 0.0
        %1279 = vmatpush.msra.mxu0 0.0
        %1280 = vmatpush.msra.mxu0 0.0
        %1281 = vmatpush.msra.mxu0 0.0
        %1282 = vmatpush.msra.mxu0 0.0
        %1283 = vmatpush.msra.mxu0 0.0
        %1284 = vmatpush.msra.mxu0 0.0
        %1285 = vmatpush.msra.mxu0 0.0
        %1286 = vmatpush.msra.mxu0 0.0
        %1287 = vmatpush.msra.mxu0 0.0
        %1288 = vmatpush.msra.mxu0 0.0
        %1289 = vmatpush.msra.mxu0 0.0
        %1290 = vmatpush.msra.mxu0 0.0
        %1291 = vmatpush.msra.mxu0 0.0
        %1292 = vmatpush.msra.mxu0 0.0
        %1293 = vmatpush.msra.mxu0 %v1238
        %1294 = vmatmul.f32.gmra.mxu0 %v1232
        %v1295 = vpop.f32.mrf.mxu0
        %v1296 = vadd.f32 0.0, %v1295
        %1297 = vdwg.mxu0
        %1298 = vmatpush.msra.mxu0 0.0
        %1299 = vmatpush.msra.mxu0 0.0
        %1300 = vmatpush.msra.mxu0 0.0
        %1301 = vmatpush.msra.mxu0 0.0
        %1302 = vmatpush.msra.mxu0 0.0
        %1303 = vmatpush.msra.mxu0 0.0
        %1304 = vmatpush.msra.mxu0 0.0
        %1305 = vmatpush.msra.mxu0 0.0
        %1306 = vmatpush.msra.mxu0 0.0
        %1307 = vmatpush.msra.mxu0 0.0
        %1308 = vmatpush.msra.mxu0 0.0
        %1309 = vmatpush.msra.mxu0 0.0
        %1310 = vmatpush.msra.mxu0 0.0
        %1311 = vmatpush.msra.mxu0 0.0
        %1312 = vmatpush.msra.mxu0 0.0
        %1313 = vmatpush.msra.mxu0 %v1241
        %1314 = vmatmul.f32.gmra.mxu0 %v1232
        %v1315 = vpop.f32.mrf.mxu0
        %v1316 = vadd.f32 0.0, %v1315
        %1317 = vdwg.mxu0
        %1318 = vmatpush.msra.mxu0 0.0
        %1319 = vmatpush.msra.mxu0 0.0
        %1320 = vmatpush.msra.mxu0 0.0
        %1321 = vmatpush.msra.mxu0 0.0
        %1322 = vmatpush.msra.mxu0 0.0
        %1323 = vmatpush.msra.mxu0 0.0
        %1324 = vmatpush.msra.mxu0 0.0
        %1325 = vmatpush.msra.mxu0 0.0
        %1326 = vmatpush.msra.mxu0 0.0
        %1327 = vmatpush.msra.mxu0 0.0
        %1328 = vmatpush.msra.mxu0 0.0
        %1329 = vmatpush.msra.mxu0 0.0
        %1330 = vmatpush.msra.mxu0 0.0
        %1331 = vmatpush.msra.mxu0 0.0
        %1332 = vmatpush.msra.mxu0 0.0
        %1333 = vmatpush.msra.mxu0 %v1244
        %1334 = vmatmul.f32.gmra.mxu0 %v1232
        %v1335 = vpop.f32.mrf.mxu0
        %v1336 = vadd.f32 0.0, %v1335
        %1337 = vdwg.mxu0
        %1338 = vmatpush.msra.mxu0 0.0
        %1339 = vmatpush.msra.mxu0 0.0
        %1340 = vmatpush.msra.mxu0 0.0
        %1341 = vmatpush.msra.mxu0 0.0
        %1342 = vmatpush.msra.mxu0 0.0
        %1343 = vmatpush.msra.mxu0 0.0
        %1344 = vmatpush.msra.mxu0 0.0
        %1345 = vmatpush.msra.mxu0 0.0
        %1346 = vmatpush.msra.mxu0 0.0
        %1347 = vmatpush.msra.mxu0 0.0
        %1348 = vmatpush.msra.mxu0 0.0
        %1349 = vmatpush.msra.mxu0 0.0
        %1350 = vmatpush.msra.mxu0 0.0
        %1351 = vmatpush.msra.mxu0 0.0
        %1352 = vmatpush.msra.mxu0 0.0
        %1353 = vmatpush.msra.mxu0 %v1247
        %1354 = vmatmul.f32.gmra.mxu0 %v1232
        %v1355 = vpop.f32.mrf.mxu0
        %v1356 = vadd.f32 0.0, %v1355
        %1357 = vdwg.mxu0
        %1358 = vmatpush.msra.mxu0 0.0
        %1359 = vmatpush.msra.mxu0 0.0
        %1360 = vmatpush.msra.mxu0 0.0
        %1361 = vmatpush.msra.mxu0 0.0
        %1362 = vmatpush.msra.mxu0 0.0
        %1363 = vmatpush.msra.mxu0 0.0
        %1364 = vmatpush.msra.mxu0 0.0
        %1365 = vmatpush.msra.mxu0 0.0
        %1366 = vmatpush.msra.mxu0 0.0
        %1367 = vmatpush.msra.mxu0 0.0
        %1368 = vmatpush.msra.mxu0 0.0
        %1369 = vmatpush.msra.mxu0 0.0
        %1370 = vmatpush.msra.mxu0 0.0
        %1371 = vmatpush.msra.mxu0 0.0
        %1372 = vmatpush.msra.mxu0 0.0
        %1373 = vmatpush.msra.mxu0 %v1250
        %1374 = vmatmul.f32.gmra.mxu0 %v1232
        %v1375 = vpop.f32.mrf.mxu0
        %v1376 = vadd.f32 0.0, %v1375
        %1377 = vdwg.mxu0
        %1378 = vmatpush.msra.mxu0 0.0
        %1379 = vmatpush.msra.mxu0 0.0
        %1380 = vmatpush.msra.mxu0 0.0
        %1381 = vmatpush.msra.mxu0 0.0
        %1382 = vmatpush.msra.mxu0 0.0
        %1383 = vmatpush.msra.mxu0 0.0
        %1384 = vmatpush.msra.mxu0 0.0
        %1385 = vmatpush.msra.mxu0 0.0
        %1386 = vmatpush.msra.mxu0 0.0
        %1387 = vmatpush.msra.mxu0 0.0
        %1388 = vmatpush.msra.mxu0 0.0
        %1389 = vmatpush.msra.mxu0 0.0
        %1390 = vmatpush.msra.mxu0 0.0
        %1391 = vmatpush.msra.mxu0 0.0
        %1392 = vmatpush.msra.mxu0 0.0
        %1393 = vmatpush.msra.mxu0 %v1253
        %1394 = vmatmul.f32.gmra.mxu0 %v1232
        %v1395 = vpop.f32.mrf.mxu0
        %v1396 = vadd.f32 0.0, %v1395
        %1397 = vdwg.mxu0
        %1398 = vmatpush.msra.mxu0 0.0
        %1399 = vmatpush.msra.mxu0 0.0
        %1400 = vmatpush.msra.mxu0 0.0
        %1401 = vmatpush.msra.mxu0 0.0
        %1402 = vmatpush.msra.mxu0 0.0
        %1403 = vmatpush.msra.mxu0 0.0
        %1404 = vmatpush.msra.mxu0 0.0
        %1405 = vmatpush.msra.mxu0 0.0
        %1406 = vmatpush.msra.mxu0 0.0
        %1407 = vmatpush.msra.mxu0 0.0
        %1408 = vmatpush.msra.mxu0 0.0
        %1409 = vmatpush.msra.mxu0 0.0
        %1410 = vmatpush.msra.mxu0 0.0
        %1411 = vmatpush.msra.mxu0 0.0
        %1412 = vmatpush.msra.mxu0 0.0
        %1413 = vmatpush.msra.mxu0 %v1256
        %1414 = vmatmul.f32.gmra.mxu0 %v1232
        %v1415 = vpop.f32.mrf.mxu0
        %v1416 = vadd.f32 0.0, %v1415
        %1417 = vdwg.mxu0
        %v1418 = vadd.f32 %v1145, %v1276
        %v1419 = vadd.f32 %v1146, %v1296
        %v1420 = vadd.f32 %v1147, %v1316
        %v1421 = vadd.f32 %v1148, %v1336
        %v1422 = vadd.f32 %v1149, %v1356
        %v1423 = vadd.f32 %v1150, %v1376
        %v1424 = vadd.f32 %v1151, %v1396
        %v1425 = vadd.f32 %v1152, %v1416
        %1426 = vrot.lane.b32.xlu0 %v314, 112
        %v1427 = vpop.permute.xlu0 %1426
        %1428 = vst [vmem:[#allocation1] ss:$2 sm:$0xff] %v319
        %s1429 = scalar_lea.vmem [#allocation1], 16
        %1430 = vst [vmem:[%s1429] ss:$2 sm:$0xff] %v320
        %s1431 = scalar_lea.vmem [#allocation1], 32
        %1432 = vst [vmem:[%s1431] ss:$2 sm:$0xff] %v321
        %s1433 = scalar_lea.vmem [#allocation1], 48
        %1434 = vst [vmem:[%s1433] ss:$2 sm:$0xff] %v322
        %v1435 = vld.sshfl [vmem:[#allocation1] sm:$0xff pattern:$0x75316420]
        %v1436 = vld.sshfl [vmem:[#allocation1 + $0x8] sm:$0xff pattern:$0x75316420]
        %v1437 = vld.sshfl [vmem:[#allocation1 + $0x10] sm:$0xff pattern:$0x75316420]
        %v1438 = vld.sshfl [vmem:[#allocation1 + $0x18] sm:$0xff pattern:$0x75316420]
        %v1439 = vld.sshfl [vmem:[#allocation1 + $0x20] sm:$0xff pattern:$0x75316420]
        %v1440 = vld.sshfl [vmem:[#allocation1 + $0x28] sm:$0xff pattern:$0x75316420]
        %v1441 = vld.sshfl [vmem:[#allocation1 + $0x30] sm:$0xff pattern:$0x75316420]
        %v1442 = vld.sshfl [vmem:[#allocation1 + $0x38] sm:$0xff pattern:$0x75316420]
        %v1443 = vsel %vm410, %v1427, 0
        %v1445 = vsel %vm414, %v1435, 0
        %v1447 = vsel %vm414, %v1436, 0
        %v1449 = vsel %vm414, %v1437, 0
        %v1451 = vsel %vm414, %v1438, 0
        %v1453 = vsel %vm414, %v1439, 0
        %v1455 = vsel %vm414, %v1440, 0
        %v1457 = vsel %vm414, %v1441, 0
        %v1459 = vsel %vm414, %v1442, 0
        %1461 = vmatpush.msra.mxu0 0.0
        %1462 = vmatpush.msra.mxu0 0.0
        %1463 = vmatpush.msra.mxu0 0.0
        %1464 = vmatpush.msra.mxu0 0.0
        %1465 = vmatpush.msra.mxu0 0.0
        %1466 = vmatpush.msra.mxu0 0.0
        %1467 = vmatpush.msra.mxu0 0.0
        %1468 = vmatpush.msra.mxu0 0.0
        %1469 = vmatpush.msra.mxu0 0.0
        %1470 = vmatpush.msra.mxu0 0.0
        %1471 = vmatpush.msra.mxu0 0.0
        %1472 = vmatpush.msra.mxu0 0.0
        %1473 = vmatpush.msra.mxu0 0.0
        %1474 = vmatpush.msra.mxu0 0.0
        %1475 = vmatpush.msra.mxu0 0.0
        %1476 = vmatpush.msra.mxu0 %v1445
        %1477 = vmatmul.f32.gmra.mxu0 %v1443
        %v1478 = vpop.f32.mrf.mxu0
        %v1479 = vadd.f32 0.0, %v1478
        %1480 = vdwg.mxu0
        %1481 = vmatpush.msra.mxu0 0.0
        %1482 = vmatpush.msra.mxu0 0.0
        %1483 = vmatpush.msra.mxu0 0.0
        %1484 = vmatpush.msra.mxu0 0.0
        %1485 = vmatpush.msra.mxu0 0.0
        %1486 = vmatpush.msra.mxu0 0.0
        %1487 = vmatpush.msra.mxu0 0.0
        %1488 = vmatpush.msra.mxu0 0.0
        %1489 = vmatpush.msra.mxu0 0.0
        %1490 = vmatpush.msra.mxu0 0.0
        %1491 = vmatpush.msra.mxu0 0.0
        %1492 = vmatpush.msra.mxu0 0.0
        %1493 = vmatpush.msra.mxu0 0.0
        %1494 = vmatpush.msra.mxu0 0.0
        %1495 = vmatpush.msra.mxu0 0.0
        %1496 = vmatpush.msra.mxu0 %v1447
        %1497 = vmatmul.f32.gmra.mxu0 %v1443
        %v1498 = vpop.f32.mrf.mxu0
        %v1499 = vadd.f32 0.0, %v1498
        %1500 = vdwg.mxu0
        %1501 = vmatpush.msra.mxu0 0.0
        %1502 = vmatpush.msra.mxu0 0.0
        %1503 = vmatpush.msra.mxu0 0.0
        %1504 = vmatpush.msra.mxu0 0.0
        %1505 = vmatpush.msra.mxu0 0.0
        %1506 = vmatpush.msra.mxu0 0.0
        %1507 = vmatpush.msra.mxu0 0.0
        %1508 = vmatpush.msra.mxu0 0.0
        %1509 = vmatpush.msra.mxu0 0.0
        %1510 = vmatpush.msra.mxu0 0.0
        %1511 = vmatpush.msra.mxu0 0.0
        %1512 = vmatpush.msra.mxu0 0.0
        %1513 = vmatpush.msra.mxu0 0.0
        %1514 = vmatpush.msra.mxu0 0.0
        %1515 = vmatpush.msra.mxu0 0.0
        %1516 = vmatpush.msra.mxu0 %v1449
        %1517 = vmatmul.f32.gmra.mxu0 %v1443
        %v1518 = vpop.f32.mrf.mxu0
        %v1519 = vadd.f32 0.0, %v1518
        %1520 = vdwg.mxu0
        %1521 = vmatpush.msra.mxu0 0.0
        %1522 = vmatpush.msra.mxu0 0.0
        %1523 = vmatpush.msra.mxu0 0.0
        %1524 = vmatpush.msra.mxu0 0.0
        %1525 = vmatpush.msra.mxu0 0.0
        %1526 = vmatpush.msra.mxu0 0.0
        %1527 = vmatpush.msra.mxu0 0.0
        %1528 = vmatpush.msra.mxu0 0.0
        %1529 = vmatpush.msra.mxu0 0.0
        %1530 = vmatpush.msra.mxu0 0.0
        %1531 = vmatpush.msra.mxu0 0.0
        %1532 = vmatpush.msra.mxu0 0.0
        %1533 = vmatpush.msra.mxu0 0.0
        %1534 = vmatpush.msra.mxu0 0.0
        %1535 = vmatpush.msra.mxu0 0.0
        %1536 = vmatpush.msra.mxu0 %v1451
        %1537 = vmatmul.f32.gmra.mxu0 %v1443
        %v1538 = vpop.f32.mrf.mxu0
        %v1539 = vadd.f32 0.0, %v1538
        %1540 = vdwg.mxu0
        %1541 = vmatpush.msra.mxu0 0.0
        %1542 = vmatpush.msra.mxu0 0.0
        %1543 = vmatpush.msra.mxu0 0.0
        %1544 = vmatpush.msra.mxu0 0.0
        %1545 = vmatpush.msra.mxu0 0.0
        %1546 = vmatpush.msra.mxu0 0.0
        %1547 = vmatpush.msra.mxu0 0.0
        %1548 = vmatpush.msra.mxu0 0.0
        %1549 = vmatpush.msra.mxu0 0.0
        %1550 = vmatpush.msra.mxu0 0.0
        %1551 = vmatpush.msra.mxu0 0.0
        %1552 = vmatpush.msra.mxu0 0.0
        %1553 = vmatpush.msra.mxu0 0.0
        %1554 = vmatpush.msra.mxu0 0.0
        %1555 = vmatpush.msra.mxu0 0.0
        %1556 = vmatpush.msra.mxu0 %v1453
        %1557 = vmatmul.f32.gmra.mxu0 %v1443
        %v1558 = vpop.f32.mrf.mxu0
        %v1559 = vadd.f32 0.0, %v1558
        %1560 = vdwg.mxu0
        %1561 = vmatpush.msra.mxu0 0.0
        %1562 = vmatpush.msra.mxu0 0.0
        %1563 = vmatpush.msra.mxu0 0.0
        %1564 = vmatpush.msra.mxu0 0.0
        %1565 = vmatpush.msra.mxu0 0.0
        %1566 = vmatpush.msra.mxu0 0.0
        %1567 = vmatpush.msra.mxu0 0.0
        %1568 = vmatpush.msra.mxu0 0.0
        %1569 = vmatpush.msra.mxu0 0.0
        %1570 = vmatpush.msra.mxu0 0.0
        %1571 = vmatpush.msra.mxu0 0.0
        %1572 = vmatpush.msra.mxu0 0.0
        %1573 = vmatpush.msra.mxu0 0.0
        %1574 = vmatpush.msra.mxu0 0.0
        %1575 = vmatpush.msra.mxu0 0.0
        %1576 = vmatpush.msra.mxu0 %v1455
        %1577 = vmatmul.f32.gmra.mxu0 %v1443
        %v1578 = vpop.f32.mrf.mxu0
        %v1579 = vadd.f32 0.0, %v1578
        %1580 = vdwg.mxu0
        %1581 = vmatpush.msra.mxu0 0.0
        %1582 = vmatpush.msra.mxu0 0.0
        %1583 = vmatpush.msra.mxu0 0.0
        %1584 = vmatpush.msra.mxu0 0.0
        %1585 = vmatpush.msra.mxu0 0.0
        %1586 = vmatpush.msra.mxu0 0.0
        %1587 = vmatpush.msra.mxu0 0.0
        %1588 = vmatpush.msra.mxu0 0.0
        %1589 = vmatpush.msra.mxu0 0.0
        %1590 = vmatpush.msra.mxu0 0.0
        %1591 = vmatpush.msra.mxu0 0.0
        %1592 = vmatpush.msra.mxu0 0.0
        %1593 = vmatpush.msra.mxu0 0.0
        %1594 = vmatpush.msra.mxu0 0.0
        %1595 = vmatpush.msra.mxu0 0.0
        %1596 = vmatpush.msra.mxu0 %v1457
        %1597 = vmatmul.f32.gmra.mxu0 %v1443
        %v1598 = vpop.f32.mrf.mxu0
        %v1599 = vadd.f32 0.0, %v1598
        %1600 = vdwg.mxu0
        %1601 = vmatpush.msra.mxu0 0.0
        %1602 = vmatpush.msra.mxu0 0.0
        %1603 = vmatpush.msra.mxu0 0.0
        %1604 = vmatpush.msra.mxu0 0.0
        %1605 = vmatpush.msra.mxu0 0.0
        %1606 = vmatpush.msra.mxu0 0.0
        %1607 = vmatpush.msra.mxu0 0.0
        %1608 = vmatpush.msra.mxu0 0.0
        %1609 = vmatpush.msra.mxu0 0.0
        %1610 = vmatpush.msra.mxu0 0.0
        %1611 = vmatpush.msra.mxu0 0.0
        %1612 = vmatpush.msra.mxu0 0.0
        %1613 = vmatpush.msra.mxu0 0.0
        %1614 = vmatpush.msra.mxu0 0.0
        %1615 = vmatpush.msra.mxu0 0.0
        %1616 = vmatpush.msra.mxu0 %v1459
        %1617 = vmatmul.f32.gmra.mxu0 %v1443
        %v1618 = vpop.f32.mrf.mxu0
        %v1619 = vadd.f32 0.0, %v1618
        %1620 = vdwg.mxu0
        %v1621 = vadd.f32 %v1418, %v1479
        %v1622 = vadd.f32 %v1419, %v1499
        %v1623 = vadd.f32 %v1420, %v1519
        %v1624 = vadd.f32 %v1421, %v1539
        %v1625 = vadd.f32 %v1422, %v1559
        %v1626 = vadd.f32 %v1423, %v1579
        %v1627 = vadd.f32 %v1424, %v1599
        %v1628 = vadd.f32 %v1425, %v1619
        %1629 = vst [vmem:[#allocation1] ss:$2 sm:$0xff] %v319
        %s1630 = scalar_lea.vmem [#allocation1], 16
        %1631 = vst [vmem:[%s1630] ss:$2 sm:$0xff] %v320
        %s1632 = scalar_lea.vmem [#allocation1], 32
        %1633 = vst [vmem:[%s1632] ss:$2 sm:$0xff] %v321
        %s1634 = scalar_lea.vmem [#allocation1], 48
        %1635 = vst [vmem:[%s1634] ss:$2 sm:$0xff] %v322
        %v1636 = vld.sshfl [vmem:[#allocation1] sm:$0xff pattern:$0x75316420]
        %v1637 = vld.sshfl [vmem:[#allocation1 + $0x8] sm:$0xff pattern:$0x75316420]
        %v1638 = vld.sshfl [vmem:[#allocation1 + $0x10] sm:$0xff pattern:$0x75316420]
        %v1639 = vld.sshfl [vmem:[#allocation1 + $0x18] sm:$0xff pattern:$0x75316420]
        %v1640 = vld.sshfl [vmem:[#allocation1 + $0x20] sm:$0xff pattern:$0x75316420]
        %v1641 = vld.sshfl [vmem:[#allocation1 + $0x28] sm:$0xff pattern:$0x75316420]
        %v1642 = vld.sshfl [vmem:[#allocation1 + $0x30] sm:$0xff pattern:$0x75316420]
        %v1643 = vld.sshfl [vmem:[#allocation1 + $0x38] sm:$0xff pattern:$0x75316420]
        %1652 = vrot.lane.b32.xlu0 %v1636, 127
        %v1653 = vpop.permute.xlu0 %1652
        %1654 = vrot.lane.b32.xlu0 %v1637, 127
        %v1655 = vpop.permute.xlu0 %1654
        %1656 = vrot.lane.b32.xlu0 %v1638, 127
        %v1657 = vpop.permute.xlu0 %1656
        %1658 = vrot.lane.b32.xlu0 %v1639, 127
        %v1659 = vpop.permute.xlu0 %1658
        %1660 = vrot.lane.b32.xlu0 %v1640, 127
        %v1661 = vpop.permute.xlu0 %1660
        %1662 = vrot.lane.b32.xlu0 %v1641, 127
        %v1663 = vpop.permute.xlu0 %1662
        %1664 = vrot.lane.b32.xlu0 %v1642, 127
        %v1665 = vpop.permute.xlu0 %1664
        %1666 = vrot.lane.b32.xlu0 %v1643, 127
        %v1667 = vpop.permute.xlu0 %1666
        %vm1668 = vcmp.lt.s32.totalorder %v372, 127
        %v1669 = vsel %vm1668, %v1665, %v1667
        %v1670 = vsel %vm1668, %v1663, %v1665
        %v1671 = vsel %vm1668, %v1661, %v1663
        %v1672 = vsel %vm1668, %v1659, %v1661
        %v1673 = vsel %vm1668, %v1657, %v1659
        %v1674 = vsel %vm1668, %v1655, %v1657
        %v1675 = vsel %vm1668, %v1653, %v1655
        %v1676 = vsel %vm1668, %v1667, %v1653
        %s1677 = scalar_lea.vmem [#allocation5], 5
        %v1678 = vld [vmem:[%s1677] ss:$8 sm:$0xf]
        %v1679 = vld [vmem:[%s1677] ss:$8 sm:$0xf0]
        %v1680 = vor.u32 %v1678, %v1679
        %v1682 = vperm.slane %v1680, 0
        %v1683 = vperm.slane %v1680, 1
        %v1684 = vperm.slane %v1680, 2
        %v1685 = vperm.slane %v1680, 3
        %v1686 = vperm.slane %v1680, 4
        %v1687 = vperm.slane %v1680, 5
        %v1688 = vperm.slane %v1680, 6
        %v1689 = vperm.slane %v1680, 7
        %v1698 = vmul.f32 %v1675, %v1682
        %v1699 = vmul.f32 %v1674, %v1683
        %v1700 = vmul.f32 %v1673, %v1684
        %v1701 = vmul.f32 %v1672, %v1685
        %v1702 = vmul.f32 %v1671, %v1686
        %v1703 = vmul.f32 %v1670, %v1687
        %v1704 = vmul.f32 %v1669, %v1688
        %v1705 = vmul.f32 %v1676, %v1689
        %1706 = vrot.lane.b32.xlu0 %v314, 108
        %v1707 = vpop.permute.xlu0 %1706
        %v1708 = vsel %vm410, %v1707, 0
        %v1711 = vsel %vm414, %v1698, 0
        %v1714 = vsel %vm414, %v1699, 0
        %v1717 = vsel %vm414, %v1700, 0
        %v1720 = vsel %vm414, %v1701, 0
        %v1723 = vsel %vm414, %v1702, 0
        %v1726 = vsel %vm414, %v1703, 0
        %v1729 = vsel %vm414, %v1704, 0
        %v1732 = vsel %vm414, %v1705, 0
        %1734 = vmatpush.msra.mxu0 0.0
        %1735 = vmatpush.msra.mxu0 0.0
        %1736 = vmatpush.msra.mxu0 0.0
        %1737 = vmatpush.msra.mxu0 0.0
        %1738 = vmatpush.msra.mxu0 0.0
        %1739 = vmatpush.msra.mxu0 0.0
        %1740 = vmatpush.msra.mxu0 0.0
        %1741 = vmatpush.msra.mxu0 0.0
        %1742 = vmatpush.msra.mxu0 0.0
        %1743 = vmatpush.msra.mxu0 0.0
        %1744 = vmatpush.msra.mxu0 0.0
        %1745 = vmatpush.msra.mxu0 0.0
        %1746 = vmatpush.msra.mxu0 0.0
        %1747 = vmatpush.msra.mxu0 0.0
        %1748 = vmatpush.msra.mxu0 0.0
        %1749 = vmatpush.msra.mxu0 %v1711
        %1750 = vmatmul.f32.gmra.mxu0 %v1708
        %v1751 = vpop.f32.mrf.mxu0
        %v1752 = vadd.f32 0.0, %v1751
        %1753 = vdwg.mxu0
        %1754 = vmatpush.msra.mxu0 0.0
        %1755 = vmatpush.msra.mxu0 0.0
        %1756 = vmatpush.msra.mxu0 0.0
        %1757 = vmatpush.msra.mxu0 0.0
        %1758 = vmatpush.msra.mxu0 0.0
        %1759 = vmatpush.msra.mxu0 0.0
        %1760 = vmatpush.msra.mxu0 0.0
        %1761 = vmatpush.msra.mxu0 0.0
        %1762 = vmatpush.msra.mxu0 0.0
        %1763 = vmatpush.msra.mxu0 0.0
        %1764 = vmatpush.msra.mxu0 0.0
        %1765 = vmatpush.msra.mxu0 0.0
        %1766 = vmatpush.msra.mxu0 0.0
        %1767 = vmatpush.msra.mxu0 0.0
        %1768 = vmatpush.msra.mxu0 0.0
        %1769 = vmatpush.msra.mxu0 %v1714
        %1770 = vmatmul.f32.gmra.mxu0 %v1708
        %v1771 = vpop.f32.mrf.mxu0
        %v1772 = vadd.f32 0.0, %v1771
        %1773 = vdwg.mxu0
        %1774 = vmatpush.msra.mxu0 0.0
        %1775 = vmatpush.msra.mxu0 0.0
        %1776 = vmatpush.msra.mxu0 0.0
        %1777 = vmatpush.msra.mxu0 0.0
        %1778 = vmatpush.msra.mxu0 0.0
        %1779 = vmatpush.msra.mxu0 0.0
        %1780 = vmatpush.msra.mxu0 0.0
        %1781 = vmatpush.msra.mxu0 0.0
        %1782 = vmatpush.msra.mxu0 0.0
        %1783 = vmatpush.msra.mxu0 0.0
        %1784 = vmatpush.msra.mxu0 0.0
        %1785 = vmatpush.msra.mxu0 0.0
        %1786 = vmatpush.msra.mxu0 0.0
        %1787 = vmatpush.msra.mxu0 0.0
        %1788 = vmatpush.msra.mxu0 0.0
        %1789 = vmatpush.msra.mxu0 %v1717
        %1790 = vmatmul.f32.gmra.mxu0 %v1708
        %v1791 = vpop.f32.mrf.mxu0
        %v1792 = vadd.f32 0.0, %v1791
        %1793 = vdwg.mxu0
        %1794 = vmatpush.msra.mxu0 0.0
        %1795 = vmatpush.msra.mxu0 0.0
        %1796 = vmatpush.msra.mxu0 0.0
        %1797 = vmatpush.msra.mxu0 0.0
        %1798 = vmatpush.msra.mxu0 0.0
        %1799 = vmatpush.msra.mxu0 0.0
        %1800 = vmatpush.msra.mxu0 0.0
        %1801 = vmatpush.msra.mxu0 0.0
        %1802 = vmatpush.msra.mxu0 0.0
        %1803 = vmatpush.msra.mxu0 0.0
        %1804 = vmatpush.msra.mxu0 0.0
        %1805 = vmatpush.msra.mxu0 0.0
        %1806 = vmatpush.msra.mxu0 0.0
        %1807 = vmatpush.msra.mxu0 0.0
        %1808 = vmatpush.msra.mxu0 0.0
        %1809 = vmatpush.msra.mxu0 %v1720
        %1810 = vmatmul.f32.gmra.mxu0 %v1708
        %v1811 = vpop.f32.mrf.mxu0
        %v1812 = vadd.f32 0.0, %v1811
        %1813 = vdwg.mxu0
        %1814 = vmatpush.msra.mxu0 0.0
        %1815 = vmatpush.msra.mxu0 0.0
        %1816 = vmatpush.msra.mxu0 0.0
        %1817 = vmatpush.msra.mxu0 0.0
        %1818 = vmatpush.msra.mxu0 0.0
        %1819 = vmatpush.msra.mxu0 0.0
        %1820 = vmatpush.msra.mxu0 0.0
        %1821 = vmatpush.msra.mxu0 0.0
        %1822 = vmatpush.msra.mxu0 0.0
        %1823 = vmatpush.msra.mxu0 0.0
        %1824 = vmatpush.msra.mxu0 0.0
        %1825 = vmatpush.msra.mxu0 0.0
        %1826 = vmatpush.msra.mxu0 0.0
        %1827 = vmatpush.msra.mxu0 0.0
        %1828 = vmatpush.msra.mxu0 0.0
        %1829 = vmatpush.msra.mxu0 %v1723
        %1830 = vmatmul.f32.gmra.mxu0 %v1708
        %v1831 = vpop.f32.mrf.mxu0
        %v1832 = vadd.f32 0.0, %v1831
        %1833 = vdwg.mxu0
        %1834 = vmatpush.msra.mxu0 0.0
        %1835 = vmatpush.msra.mxu0 0.0
        %1836 = vmatpush.msra.mxu0 0.0
        %1837 = vmatpush.msra.mxu0 0.0
        %1838 = vmatpush.msra.mxu0 0.0
        %1839 = vmatpush.msra.mxu0 0.0
        %1840 = vmatpush.msra.mxu0 0.0
        %1841 = vmatpush.msra.mxu0 0.0
        %1842 = vmatpush.msra.mxu0 0.0
        %1843 = vmatpush.msra.mxu0 0.0
        %1844 = vmatpush.msra.mxu0 0.0
        %1845 = vmatpush.msra.mxu0 0.0
        %1846 = vmatpush.msra.mxu0 0.0
        %1847 = vmatpush.msra.mxu0 0.0
        %1848 = vmatpush.msra.mxu0 0.0
        %1849 = vmatpush.msra.mxu0 %v1726
        %1850 = vmatmul.f32.gmra.mxu0 %v1708
        %v1851 = vpop.f32.mrf.mxu0
        %v1852 = vadd.f32 0.0, %v1851
        %1853 = vdwg.mxu0
        %1854 = vmatpush.msra.mxu0 0.0
        %1855 = vmatpush.msra.mxu0 0.0
        %1856 = vmatpush.msra.mxu0 0.0
        %1857 = vmatpush.msra.mxu0 0.0
        %1858 = vmatpush.msra.mxu0 0.0
        %1859 = vmatpush.msra.mxu0 0.0
        %1860 = vmatpush.msra.mxu0 0.0
        %1861 = vmatpush.msra.mxu0 0.0
        %1862 = vmatpush.msra.mxu0 0.0
        %1863 = vmatpush.msra.mxu0 0.0
        %1864 = vmatpush.msra.mxu0 0.0
        %1865 = vmatpush.msra.mxu0 0.0
        %1866 = vmatpush.msra.mxu0 0.0
        %1867 = vmatpush.msra.mxu0 0.0
        %1868 = vmatpush.msra.mxu0 0.0
        %1869 = vmatpush.msra.mxu0 %v1729
        %1870 = vmatmul.f32.gmra.mxu0 %v1708
        %v1871 = vpop.f32.mrf.mxu0
        %v1872 = vadd.f32 0.0, %v1871
        %1873 = vdwg.mxu0
        %1874 = vmatpush.msra.mxu0 0.0
        %1875 = vmatpush.msra.mxu0 0.0
        %1876 = vmatpush.msra.mxu0 0.0
        %1877 = vmatpush.msra.mxu0 0.0
        %1878 = vmatpush.msra.mxu0 0.0
        %1879 = vmatpush.msra.mxu0 0.0
        %1880 = vmatpush.msra.mxu0 0.0
        %1881 = vmatpush.msra.mxu0 0.0
        %1882 = vmatpush.msra.mxu0 0.0
        %1883 = vmatpush.msra.mxu0 0.0
        %1884 = vmatpush.msra.mxu0 0.0
        %1885 = vmatpush.msra.mxu0 0.0
        %1886 = vmatpush.msra.mxu0 0.0
        %1887 = vmatpush.msra.mxu0 0.0
        %1888 = vmatpush.msra.mxu0 0.0
        %1889 = vmatpush.msra.mxu0 %v1732
        %1890 = vmatmul.f32.gmra.mxu0 %v1708
        %v1891 = vpop.f32.mrf.mxu0
        %v1892 = vadd.f32 0.0, %v1891
        %1893 = vdwg.mxu0
        %v1894 = vadd.f32 %v1621, %v1752
        %v1895 = vadd.f32 %v1622, %v1772
        %v1896 = vadd.f32 %v1623, %v1792
        %v1897 = vadd.f32 %v1624, %v1812
        %v1898 = vadd.f32 %v1625, %v1832
        %v1899 = vadd.f32 %v1626, %v1852
        %v1900 = vadd.f32 %v1627, %v1872
        %v1901 = vadd.f32 %v1628, %v1892
        %1902 = vst [vmem:[#allocation1] ss:$2 sm:$0xff] %v319
        %s1903 = scalar_lea.vmem [#allocation1], 16
        %1904 = vst [vmem:[%s1903] ss:$2 sm:$0xff] %v320
        %s1905 = scalar_lea.vmem [#allocation1], 32
        %1906 = vst [vmem:[%s1905] ss:$2 sm:$0xff] %v321
        %s1907 = scalar_lea.vmem [#allocation1], 48
        %1908 = vst [vmem:[%s1907] ss:$2 sm:$0xff] %v322
        %v1909 = vld.sshfl [vmem:[#allocation1] sm:$0xff pattern:$0x75316420]
        %v1910 = vld.sshfl [vmem:[#allocation1 + $0x8] sm:$0xff pattern:$0x75316420]
        %v1911 = vld.sshfl [vmem:[#allocation1 + $0x10] sm:$0xff pattern:$0x75316420]
        %v1912 = vld.sshfl [vmem:[#allocation1 + $0x18] sm:$0xff pattern:$0x75316420]
        %v1913 = vld.sshfl [vmem:[#allocation1 + $0x20] sm:$0xff pattern:$0x75316420]
        %v1914 = vld.sshfl [vmem:[#allocation1 + $0x28] sm:$0xff pattern:$0x75316420]
        %v1915 = vld.sshfl [vmem:[#allocation1 + $0x30] sm:$0xff pattern:$0x75316420]
        %v1916 = vld.sshfl [vmem:[#allocation1 + $0x38] sm:$0xff pattern:$0x75316420]
        %1925 = vrot.lane.b32.xlu0 %v1909, 97
        %v1926 = vpop.permute.xlu0 %1925
        %1927 = vrot.lane.b32.xlu0 %v1910, 97
        %v1928 = vpop.permute.xlu0 %1927
        %1929 = vrot.lane.b32.xlu0 %v1911, 97
        %v1930 = vpop.permute.xlu0 %1929
        %1931 = vrot.lane.b32.xlu0 %v1912, 97
        %v1932 = vpop.permute.xlu0 %1931
        %1933 = vrot.lane.b32.xlu0 %v1913, 97
        %v1934 = vpop.permute.xlu0 %1933
        %1935 = vrot.lane.b32.xlu0 %v1914, 97
        %v1936 = vpop.permute.xlu0 %1935
        %1937 = vrot.lane.b32.xlu0 %v1915, 97
        %v1938 = vpop.permute.xlu0 %1937
        %1939 = vrot.lane.b32.xlu0 %v1916, 97
        %v1940 = vpop.permute.xlu0 %1939
        %vm1941 = vcmp.lt.s32.totalorder %v372, 97
        %v1942 = vsel %vm1941, %v1938, %v1940
        %v1943 = vsel %vm1941, %v1936, %v1938
        %v1944 = vsel %vm1941, %v1934, %v1936
        %v1945 = vsel %vm1941, %v1932, %v1934
        %v1946 = vsel %vm1941, %v1930, %v1932
        %v1947 = vsel %vm1941, %v1928, %v1930
        %v1948 = vsel %vm1941, %v1926, %v1928
        %v1949 = vsel %vm1941, %v1940, %v1926
        %s1950 = scalar_lea.vmem [#allocation5], 6
        %v1951 = vld [vmem:[%s1950] ss:$8 sm:$0xf]
        %v1952 = vld [vmem:[%s1950] ss:$8 sm:$0xf0]
        %v1953 = vor.u32 %v1951, %v1952
        %v1955 = vperm.slane %v1953, 0
        %v1956 = vperm.slane %v1953, 1
        %v1957 = vperm.slane %v1953, 2
        %v1958 = vperm.slane %v1953, 3
        %v1959 = vperm.slane %v1953, 4
        %v1960 = vperm.slane %v1953, 5
        %v1961 = vperm.slane %v1953, 6
        %v1962 = vperm.slane %v1953, 7
        %v1971 = vmul.f32 %v1948, %v1955
        %v1972 = vmul.f32 %v1947, %v1956
        %v1973 = vmul.f32 %v1946, %v1957
        %v1974 = vmul.f32 %v1945, %v1958
        %v1975 = vmul.f32 %v1944, %v1959
        %v1976 = vmul.f32 %v1943, %v1960
        %v1977 = vmul.f32 %v1942, %v1961
        %v1978 = vmul.f32 %v1949, %v1962
        %1979 = vrot.lane.b32.xlu0 %v314, 104
        %v1980 = vpop.permute.xlu0 %1979
        %v1981 = vsel %vm410, %v1980, 0
        %v1984 = vsel %vm414, %v1971, 0
        %v1987 = vsel %vm414, %v1972, 0
        %v1990 = vsel %vm414, %v1973, 0
        %v1993 = vsel %vm414, %v1974, 0
        %v1996 = vsel %vm414, %v1975, 0
        %v1999 = vsel %vm414, %v1976, 0
        %v2002 = vsel %vm414, %v1977, 0
        %v2005 = vsel %vm414, %v1978, 0
        %2007 = vmatpush.msra.mxu0 0.0
        %2008 = vmatpush.msra.mxu0 0.0
        %2009 = vmatpush.msra.mxu0 0.0
        %2010 = vmatpush.msra.mxu0 0.0
        %2011 = vmatpush.msra.mxu0 0.0
        %2012 = vmatpush.msra.mxu0 0.0
        %2013 = vmatpush.msra.mxu0 0.0
        %2014 = vmatpush.msra.mxu0 0.0
        %2015 = vmatpush.msra.mxu0 0.0
        %2016 = vmatpush.msra.mxu0 0.0
        %2017 = vmatpush.msra.mxu0 0.0
        %2018 = vmatpush.msra.mxu0 0.0
        %2019 = vmatpush.msra.mxu0 0.0
        %2020 = vmatpush.msra.mxu0 0.0
        %2021 = vmatpush.msra.mxu0 0.0
        %2022 = vmatpush.msra.mxu0 %v1984
        %2023 = vmatmul.f32.gmra.mxu0 %v1981
        %v2024 = vpop.f32.mrf.mxu0
        %v2025 = vadd.f32 0.0, %v2024
        %2026 = vdwg.mxu0
        %2027 = vmatpush.msra.mxu0 0.0
        %2028 = vmatpush.msra.mxu0 0.0
        %2029 = vmatpush.msra.mxu0 0.0
        %2030 = vmatpush.msra.mxu0 0.0
        %2031 = vmatpush.msra.mxu0 0.0
        %2032 = vmatpush.msra.mxu0 0.0
        %2033 = vmatpush.msra.mxu0 0.0
        %2034 = vmatpush.msra.mxu0 0.0
        %2035 = vmatpush.msra.mxu0 0.0
        %2036 = vmatpush.msra.mxu0 0.0
        %2037 = vmatpush.msra.mxu0 0.0
        %2038 = vmatpush.msra.mxu0 0.0
        %2039 = vmatpush.msra.mxu0 0.0
        %2040 = vmatpush.msra.mxu0 0.0
        %2041 = vmatpush.msra.mxu0 0.0
        %2042 = vmatpush.msra.mxu0 %v1987
        %2043 = vmatmul.f32.gmra.mxu0 %v1981
        %v2044 = vpop.f32.mrf.mxu0
        %v2045 = vadd.f32 0.0, %v2044
        %2046 = vdwg.mxu0
        %2047 = vmatpush.msra.mxu0 0.0
        %2048 = vmatpush.msra.mxu0 0.0
        %2049 = vmatpush.msra.mxu0 0.0
        %2050 = vmatpush.msra.mxu0 0.0
        %2051 = vmatpush.msra.mxu0 0.0
        %2052 = vmatpush.msra.mxu0 0.0
        %2053 = vmatpush.msra.mxu0 0.0
        %2054 = vmatpush.msra.mxu0 0.0
        %2055 = vmatpush.msra.mxu0 0.0
        %2056 = vmatpush.msra.mxu0 0.0
        %2057 = vmatpush.msra.mxu0 0.0
        %2058 = vmatpush.msra.mxu0 0.0
        %2059 = vmatpush.msra.mxu0 0.0
        %2060 = vmatpush.msra.mxu0 0.0
        %2061 = vmatpush.msra.mxu0 0.0
        %2062 = vmatpush.msra.mxu0 %v1990
        %2063 = vmatmul.f32.gmra.mxu0 %v1981
        %v2064 = vpop.f32.mrf.mxu0
        %v2065 = vadd.f32 0.0, %v2064
        %2066 = vdwg.mxu0
        %2067 = vmatpush.msra.mxu0 0.0
        %2068 = vmatpush.msra.mxu0 0.0
        %2069 = vmatpush.msra.mxu0 0.0
        %2070 = vmatpush.msra.mxu0 0.0
        %2071 = vmatpush.msra.mxu0 0.0
        %2072 = vmatpush.msra.mxu0 0.0
        %2073 = vmatpush.msra.mxu0 0.0
        %2074 = vmatpush.msra.mxu0 0.0
        %2075 = vmatpush.msra.mxu0 0.0
        %2076 = vmatpush.msra.mxu0 0.0
        %2077 = vmatpush.msra.mxu0 0.0
        %2078 = vmatpush.msra.mxu0 0.0
        %2079 = vmatpush.msra.mxu0 0.0
        %2080 = vmatpush.msra.mxu0 0.0
        %2081 = vmatpush.msra.mxu0 0.0
        %2082 = vmatpush.msra.mxu0 %v1993
        %2083 = vmatmul.f32.gmra.mxu0 %v1981
        %v2084 = vpop.f32.mrf.mxu0
        %v2085 = vadd.f32 0.0, %v2084
        %2086 = vdwg.mxu0
        %2087 = vmatpush.msra.mxu0 0.0
        %2088 = vmatpush.msra.mxu0 0.0
        %2089 = vmatpush.msra.mxu0 0.0
        %2090 = vmatpush.msra.mxu0 0.0
        %2091 = vmatpush.msra.mxu0 0.0
        %2092 = vmatpush.msra.mxu0 0.0
        %2093 = vmatpush.msra.mxu0 0.0
        %2094 = vmatpush.msra.mxu0 0.0
        %2095 = vmatpush.msra.mxu0 0.0
        %2096 = vmatpush.msra.mxu0 0.0
        %2097 = vmatpush.msra.mxu0 0.0
        %2098 = vmatpush.msra.mxu0 0.0
        %2099 = vmatpush.msra.mxu0 0.0
        %2100 = vmatpush.msra.mxu0 0.0
        %2101 = vmatpush.msra.mxu0 0.0
        %2102 = vmatpush.msra.mxu0 %v1996
        %2103 = vmatmul.f32.gmra.mxu0 %v1981
        %v2104 = vpop.f32.mrf.mxu0
        %v2105 = vadd.f32 0.0, %v2104
        %2106 = vdwg.mxu0
        %2107 = vmatpush.msra.mxu0 0.0
        %2108 = vmatpush.msra.mxu0 0.0
        %2109 = vmatpush.msra.mxu0 0.0
        %2110 = vmatpush.msra.mxu0 0.0
        %2111 = vmatpush.msra.mxu0 0.0
        %2112 = vmatpush.msra.mxu0 0.0
        %2113 = vmatpush.msra.mxu0 0.0
        %2114 = vmatpush.msra.mxu0 0.0
        %2115 = vmatpush.msra.mxu0 0.0
        %2116 = vmatpush.msra.mxu0 0.0
        %2117 = vmatpush.msra.mxu0 0.0
        %2118 = vmatpush.msra.mxu0 0.0
        %2119 = vmatpush.msra.mxu0 0.0
        %2120 = vmatpush.msra.mxu0 0.0
        %2121 = vmatpush.msra.mxu0 0.0
        %2122 = vmatpush.msra.mxu0 %v1999
        %2123 = vmatmul.f32.gmra.mxu0 %v1981
        %v2124 = vpop.f32.mrf.mxu0
        %v2125 = vadd.f32 0.0, %v2124
        %2126 = vdwg.mxu0
        %2127 = vmatpush.msra.mxu0 0.0
        %2128 = vmatpush.msra.mxu0 0.0
        %2129 = vmatpush.msra.mxu0 0.0
        %2130 = vmatpush.msra.mxu0 0.0
        %2131 = vmatpush.msra.mxu0 0.0
        %2132 = vmatpush.msra.mxu0 0.0
        %2133 = vmatpush.msra.mxu0 0.0
        %2134 = vmatpush.msra.mxu0 0.0
        %2135 = vmatpush.msra.mxu0 0.0
        %2136 = vmatpush.msra.mxu0 0.0
        %2137 = vmatpush.msra.mxu0 0.0
        %2138 = vmatpush.msra.mxu0 0.0
        %2139 = vmatpush.msra.mxu0 0.0
        %2140 = vmatpush.msra.mxu0 0.0
        %2141 = vmatpush.msra.mxu0 0.0
        %2142 = vmatpush.msra.mxu0 %v2002
        %2143 = vmatmul.f32.gmra.mxu0 %v1981
        %v2144 = vpop.f32.mrf.mxu0
        %v2145 = vadd.f32 0.0, %v2144
        %2146 = vdwg.mxu0
        %2147 = vmatpush.msra.mxu0 0.0
        %2148 = vmatpush.msra.mxu0 0.0
        %2149 = vmatpush.msra.mxu0 0.0
        %2150 = vmatpush.msra.mxu0 0.0
        %2151 = vmatpush.msra.mxu0 0.0
        %2152 = vmatpush.msra.mxu0 0.0
        %2153 = vmatpush.msra.mxu0 0.0
        %2154 = vmatpush.msra.mxu0 0.0
        %2155 = vmatpush.msra.mxu0 0.0
        %2156 = vmatpush.msra.mxu0 0.0
        %2157 = vmatpush.msra.mxu0 0.0
        %2158 = vmatpush.msra.mxu0 0.0
        %2159 = vmatpush.msra.mxu0 0.0
        %2160 = vmatpush.msra.mxu0 0.0
        %2161 = vmatpush.msra.mxu0 0.0
        %2162 = vmatpush.msra.mxu0 %v2005
        %2163 = vmatmul.f32.gmra.mxu0 %v1981
        %v2164 = vpop.f32.mrf.mxu0
        %v2165 = vadd.f32 0.0, %v2164
        %2166 = vdwg.mxu0
        %v2167 = vadd.f32 %v1894, %v2025
        %v2168 = vadd.f32 %v1895, %v2045
        %v2169 = vadd.f32 %v1896, %v2065
        %v2170 = vadd.f32 %v1897, %v2085
        %v2171 = vadd.f32 %v1898, %v2105
        %v2172 = vadd.f32 %v1899, %v2125
        %v2173 = vadd.f32 %v1900, %v2145
        %v2174 = vadd.f32 %v1901, %v2165
        %2175 = vst [vmem:[#allocation1] ss:$2 sm:$0xff] %v319
        %s2176 = scalar_lea.vmem [#allocation1], 16
        %2177 = vst [vmem:[%s2176] ss:$2 sm:$0xff] %v320
        %s2178 = scalar_lea.vmem [#allocation1], 32
        %2179 = vst [vmem:[%s2178] ss:$2 sm:$0xff] %v321
        %s2180 = scalar_lea.vmem [#allocation1], 48
        %2181 = vst [vmem:[%s2180] ss:$2 sm:$0xff] %v322
        %v2182 = vld.sshfl [vmem:[#allocation1] sm:$0xff pattern:$0x75316420]
        %v2183 = vld.sshfl [vmem:[#allocation1 + $0x8] sm:$0xff pattern:$0x75316420]
        %v2184 = vld.sshfl [vmem:[#allocation1 + $0x10] sm:$0xff pattern:$0x75316420]
        %v2185 = vld.sshfl [vmem:[#allocation1 + $0x18] sm:$0xff pattern:$0x75316420]
        %v2186 = vld.sshfl [vmem:[#allocation1 + $0x20] sm:$0xff pattern:$0x75316420]
        %v2187 = vld.sshfl [vmem:[#allocation1 + $0x28] sm:$0xff pattern:$0x75316420]
        %v2188 = vld.sshfl [vmem:[#allocation1 + $0x30] sm:$0xff pattern:$0x75316420]
        %v2189 = vld.sshfl [vmem:[#allocation1 + $0x38] sm:$0xff pattern:$0x75316420]
        %2198 = vrot.lane.b32.xlu0 %v2182, 96
        %v2199 = vpop.permute.xlu0 %2198
        %2200 = vrot.lane.b32.xlu0 %v2183, 96
        %v2201 = vpop.permute.xlu0 %2200
        %2202 = vrot.lane.b32.xlu0 %v2184, 96
        %v2203 = vpop.permute.xlu0 %2202
        %2204 = vrot.lane.b32.xlu0 %v2185, 96
        %v2205 = vpop.permute.xlu0 %2204
        %2206 = vrot.lane.b32.xlu0 %v2186, 96
        %v2207 = vpop.permute.xlu0 %2206
        %2208 = vrot.lane.b32.xlu0 %v2187, 96
        %v2209 = vpop.permute.xlu0 %2208
        %2210 = vrot.lane.b32.xlu0 %v2188, 96
        %v2211 = vpop.permute.xlu0 %2210
        %2212 = vrot.lane.b32.xlu0 %v2189, 96
        %v2213 = vpop.permute.xlu0 %2212
        %vm2214 = vcmp.lt.s32.totalorder %v372, 96
        %v2215 = vsel %vm2214, %v2211, %v2213
        %v2216 = vsel %vm2214, %v2209, %v2211
        %v2217 = vsel %vm2214, %v2207, %v2209
        %v2218 = vsel %vm2214, %v2205, %v2207
        %v2219 = vsel %vm2214, %v2203, %v2205
        %v2220 = vsel %vm2214, %v2201, %v2203
        %v2221 = vsel %vm2214, %v2199, %v2201
        %v2222 = vsel %vm2214, %v2213, %v2199
        %s2223 = scalar_lea.vmem [#allocation5], 7
        %v2224 = vld [vmem:[%s2223] ss:$8 sm:$0xf]
        %v2225 = vld [vmem:[%s2223] ss:$8 sm:$0xf0]
        %v2226 = vor.u32 %v2224, %v2225
        %v2228 = vperm.slane %v2226, 0
        %v2229 = vperm.slane %v2226, 1
        %v2230 = vperm.slane %v2226, 2
        %v2231 = vperm.slane %v2226, 3
        %v2232 = vperm.slane %v2226, 4
        %v2233 = vperm.slane %v2226, 5
        %v2234 = vperm.slane %v2226, 6
        %v2235 = vperm.slane %v2226, 7
        %v2244 = vmul.f32 %v2221, %v2228
        %v2245 = vmul.f32 %v2220, %v2229
        %v2246 = vmul.f32 %v2219, %v2230
        %v2247 = vmul.f32 %v2218, %v2231
        %v2248 = vmul.f32 %v2217, %v2232
        %v2249 = vmul.f32 %v2216, %v2233
        %v2250 = vmul.f32 %v2215, %v2234
        %v2251 = vmul.f32 %v2222, %v2235
        %2252 = vrot.lane.b32.xlu0 %v314, 100
        %v2253 = vpop.permute.xlu0 %2252
        %v2254 = vsel %vm410, %v2253, 0
        %v2257 = vsel %vm414, %v2244, 0
        %v2260 = vsel %vm414, %v2245, 0
        %v2263 = vsel %vm414, %v2246, 0
        %v2266 = vsel %vm414, %v2247, 0
        %v2269 = vsel %vm414, %v2248, 0
        %v2272 = vsel %vm414, %v2249, 0
        %v2275 = vsel %vm414, %v2250, 0
        %v2278 = vsel %vm414, %v2251, 0
        %2280 = vmatpush.msra.mxu0 0.0
        %2281 = vmatpush.msra.mxu0 0.0
        %2282 = vmatpush.msra.mxu0 0.0
        %2283 = vmatpush.msra.mxu0 0.0
        %2284 = vmatpush.msra.mxu0 0.0
        %2285 = vmatpush.msra.mxu0 0.0
        %2286 = vmatpush.msra.mxu0 0.0
        %2287 = vmatpush.msra.mxu0 0.0
        %2288 = vmatpush.msra.mxu0 0.0
        %2289 = vmatpush.msra.mxu0 0.0
        %2290 = vmatpush.msra.mxu0 0.0
        %2291 = vmatpush.msra.mxu0 0.0
        %2292 = vmatpush.msra.mxu0 0.0
        %2293 = vmatpush.msra.mxu0 0.0
        %2294 = vmatpush.msra.mxu0 0.0
        %2295 = vmatpush.msra.mxu0 %v2257
        %2296 = vmatmul.f32.gmra.mxu0 %v2254
        %v2297 = vpop.f32.mrf.mxu0
        %v2298 = vadd.f32 0.0, %v2297
        %2299 = vdwg.mxu0
        %2300 = vmatpush.msra.mxu0 0.0
        %2301 = vmatpush.msra.mxu0 0.0
        %2302 = vmatpush.msra.mxu0 0.0
        %2303 = vmatpush.msra.mxu0 0.0
        %2304 = vmatpush.msra.mxu0 0.0
        %2305 = vmatpush.msra.mxu0 0.0
        %2306 = vmatpush.msra.mxu0 0.0
        %2307 = vmatpush.msra.mxu0 0.0
        %2308 = vmatpush.msra.mxu0 0.0
        %2309 = vmatpush.msra.mxu0 0.0
        %2310 = vmatpush.msra.mxu0 0.0
        %2311 = vmatpush.msra.mxu0 0.0
        %2312 = vmatpush.msra.mxu0 0.0
        %2313 = vmatpush.msra.mxu0 0.0
        %2314 = vmatpush.msra.mxu0 0.0
        %2315 = vmatpush.msra.mxu0 %v2260
        %2316 = vmatmul.f32.gmra.mxu0 %v2254
        %v2317 = vpop.f32.mrf.mxu0
        %v2318 = vadd.f32 0.0, %v2317
        %2319 = vdwg.mxu0
        %2320 = vmatpush.msra.mxu0 0.0
        %2321 = vmatpush.msra.mxu0 0.0
        %2322 = vmatpush.msra.mxu0 0.0
        %2323 = vmatpush.msra.mxu0 0.0
        %2324 = vmatpush.msra.mxu0 0.0
        %2325 = vmatpush.msra.mxu0 0.0
        %2326 = vmatpush.msra.mxu0 0.0
        %2327 = vmatpush.msra.mxu0 0.0
        %2328 = vmatpush.msra.mxu0 0.0
        %2329 = vmatpush.msra.mxu0 0.0
        %2330 = vmatpush.msra.mxu0 0.0
        %2331 = vmatpush.msra.mxu0 0.0
        %2332 = vmatpush.msra.mxu0 0.0
        %2333 = vmatpush.msra.mxu0 0.0
        %2334 = vmatpush.msra.mxu0 0.0
        %2335 = vmatpush.msra.mxu0 %v2263
        %2336 = vmatmul.f32.gmra.mxu0 %v2254
        %v2337 = vpop.f32.mrf.mxu0
        %v2338 = vadd.f32 0.0, %v2337
        %2339 = vdwg.mxu0
        %2340 = vmatpush.msra.mxu0 0.0
        %2341 = vmatpush.msra.mxu0 0.0
        %2342 = vmatpush.msra.mxu0 0.0
        %2343 = vmatpush.msra.mxu0 0.0
        %2344 = vmatpush.msra.mxu0 0.0
        %2345 = vmatpush.msra.mxu0 0.0
        %2346 = vmatpush.msra.mxu0 0.0
        %2347 = vmatpush.msra.mxu0 0.0
        %2348 = vmatpush.msra.mxu0 0.0
        %2349 = vmatpush.msra.mxu0 0.0
        %2350 = vmatpush.msra.mxu0 0.0
        %2351 = vmatpush.msra.mxu0 0.0
        %2352 = vmatpush.msra.mxu0 0.0
        %2353 = vmatpush.msra.mxu0 0.0
        %2354 = vmatpush.msra.mxu0 0.0
        %2355 = vmatpush.msra.mxu0 %v2266
        %2356 = vmatmul.f32.gmra.mxu0 %v2254
        %v2357 = vpop.f32.mrf.mxu0
        %v2358 = vadd.f32 0.0, %v2357
        %2359 = vdwg.mxu0
        %2360 = vmatpush.msra.mxu0 0.0
        %2361 = vmatpush.msra.mxu0 0.0
        %2362 = vmatpush.msra.mxu0 0.0
        %2363 = vmatpush.msra.mxu0 0.0
        %2364 = vmatpush.msra.mxu0 0.0
        %2365 = vmatpush.msra.mxu0 0.0
        %2366 = vmatpush.msra.mxu0 0.0
        %2367 = vmatpush.msra.mxu0 0.0
        %2368 = vmatpush.msra.mxu0 0.0
        %2369 = vmatpush.msra.mxu0 0.0
        %2370 = vmatpush.msra.mxu0 0.0
        %2371 = vmatpush.msra.mxu0 0.0
        %2372 = vmatpush.msra.mxu0 0.0
        %2373 = vmatpush.msra.mxu0 0.0
        %2374 = vmatpush.msra.mxu0 0.0
        %2375 = vmatpush.msra.mxu0 %v2269
        %2376 = vmatmul.f32.gmra.mxu0 %v2254
        %v2377 = vpop.f32.mrf.mxu0
        %v2378 = vadd.f32 0.0, %v2377
        %2379 = vdwg.mxu0
        %2380 = vmatpush.msra.mxu0 0.0
        %2381 = vmatpush.msra.mxu0 0.0
        %2382 = vmatpush.msra.mxu0 0.0
        %2383 = vmatpush.msra.mxu0 0.0
        %2384 = vmatpush.msra.mxu0 0.0
        %2385 = vmatpush.msra.mxu0 0.0
        %2386 = vmatpush.msra.mxu0 0.0
        %2387 = vmatpush.msra.mxu0 0.0
        %2388 = vmatpush.msra.mxu0 0.0
        %2389 = vmatpush.msra.mxu0 0.0
        %2390 = vmatpush.msra.mxu0 0.0
        %2391 = vmatpush.msra.mxu0 0.0
        %2392 = vmatpush.msra.mxu0 0.0
        %2393 = vmatpush.msra.mxu0 0.0
        %2394 = vmatpush.msra.mxu0 0.0
        %2395 = vmatpush.msra.mxu0 %v2272
        %2396 = vmatmul.f32.gmra.mxu0 %v2254
        %v2397 = vpop.f32.mrf.mxu0
        %v2398 = vadd.f32 0.0, %v2397
        %2399 = vdwg.mxu0
        %2400 = vmatpush.msra.mxu0 0.0
        %2401 = vmatpush.msra.mxu0 0.0
        %2402 = vmatpush.msra.mxu0 0.0
        %2403 = vmatpush.msra.mxu0 0.0
        %2404 = vmatpush.msra.mxu0 0.0
        %2405 = vmatpush.msra.mxu0 0.0
        %2406 = vmatpush.msra.mxu0 0.0
        %2407 = vmatpush.msra.mxu0 0.0
        %2408 = vmatpush.msra.mxu0 0.0
        %2409 = vmatpush.msra.mxu0 0.0
        %2410 = vmatpush.msra.mxu0 0.0
        %2411 = vmatpush.msra.mxu0 0.0
        %2412 = vmatpush.msra.mxu0 0.0
        %2413 = vmatpush.msra.mxu0 0.0
        %2414 = vmatpush.msra.mxu0 0.0
        %2415 = vmatpush.msra.mxu0 %v2275
        %2416 = vmatmul.f32.gmra.mxu0 %v2254
        %v2417 = vpop.f32.mrf.mxu0
        %v2418 = vadd.f32 0.0, %v2417
        %2419 = vdwg.mxu0
        %2420 = vmatpush.msra.mxu0 0.0
        %2421 = vmatpush.msra.mxu0 0.0
        %2422 = vmatpush.msra.mxu0 0.0
        %2423 = vmatpush.msra.mxu0 0.0
        %2424 = vmatpush.msra.mxu0 0.0
        %2425 = vmatpush.msra.mxu0 0.0
        %2426 = vmatpush.msra.mxu0 0.0
        %2427 = vmatpush.msra.mxu0 0.0
        %2428 = vmatpush.msra.mxu0 0.0
        %2429 = vmatpush.msra.mxu0 0.0
        %2430 = vmatpush.msra.mxu0 0.0
        %2431 = vmatpush.msra.mxu0 0.0
        %2432 = vmatpush.msra.mxu0 0.0
        %2433 = vmatpush.msra.mxu0 0.0
        %2434 = vmatpush.msra.mxu0 0.0
        %2435 = vmatpush.msra.mxu0 %v2278
        %2436 = vmatmul.f32.gmra.mxu0 %v2254
        %v2437 = vpop.f32.mrf.mxu0
        %v2438 = vadd.f32 0.0, %v2437
        %2439 = vdwg.mxu0
        %v2440 = vadd.f32 %v2167, %v2298
        %v2441 = vadd.f32 %v2168, %v2318
        %v2442 = vadd.f32 %v2169, %v2338
        %v2443 = vadd.f32 %v2170, %v2358
        %v2444 = vadd.f32 %v2171, %v2378
        %v2445 = vadd.f32 %v2172, %v2398
        %v2446 = vadd.f32 %v2173, %v2418
        %v2447 = vadd.f32 %v2174, %v2438
        %2448 = vst [vmem:[#allocation1] ss:$2 sm:$0xff] %v319
        %s2449 = scalar_lea.vmem [#allocation1], 16
        %2450 = vst [vmem:[%s2449] ss:$2 sm:$0xff] %v320
        %s2451 = scalar_lea.vmem [#allocation1], 32
        %2452 = vst [vmem:[%s2451] ss:$2 sm:$0xff] %v321
        %s2453 = scalar_lea.vmem [#allocation1], 48
        %2454 = vst [vmem:[%s2453] ss:$2 sm:$0xff] %v322
        %v2455 = vld.sshfl [vmem:[#allocation1] sm:$0xff pattern:$0x75316420]
        %v2456 = vld.sshfl [vmem:[#allocation1 + $0x8] sm:$0xff pattern:$0x75316420]
        %v2457 = vld.sshfl [vmem:[#allocation1 + $0x10] sm:$0xff pattern:$0x75316420]
        %v2458 = vld.sshfl [vmem:[#allocation1 + $0x18] sm:$0xff pattern:$0x75316420]
        %v2459 = vld.sshfl [vmem:[#allocation1 + $0x20] sm:$0xff pattern:$0x75316420]
        %v2460 = vld.sshfl [vmem:[#allocation1 + $0x28] sm:$0xff pattern:$0x75316420]
        %v2461 = vld.sshfl [vmem:[#allocation1 + $0x30] sm:$0xff pattern:$0x75316420]
        %v2462 = vld.sshfl [vmem:[#allocation1 + $0x38] sm:$0xff pattern:$0x75316420]
        %2471 = vrot.lane.b32.xlu0 %v2455, 95
        %v2472 = vpop.permute.xlu0 %2471
        %2473 = vrot.lane.b32.xlu0 %v2456, 95
        %v2474 = vpop.permute.xlu0 %2473
        %2475 = vrot.lane.b32.xlu0 %v2457, 95
        %v2476 = vpop.permute.xlu0 %2475
        %2477 = vrot.lane.b32.xlu0 %v2458, 95
        %v2478 = vpop.permute.xlu0 %2477
        %2479 = vrot.lane.b32.xlu0 %v2459, 95
        %v2480 = vpop.permute.xlu0 %2479
        %2481 = vrot.lane.b32.xlu0 %v2460, 95
        %v2482 = vpop.permute.xlu0 %2481
        %2483 = vrot.lane.b32.xlu0 %v2461, 95
        %v2484 = vpop.permute.xlu0 %2483
        %2485 = vrot.lane.b32.xlu0 %v2462, 95
        %v2486 = vpop.permute.xlu0 %2485
        %vm2487 = vcmp.lt.s32.totalorder %v372, 95
        %v2488 = vsel %vm2487, %v2484, %v2486
        %v2489 = vsel %vm2487, %v2482, %v2484
        %v2490 = vsel %vm2487, %v2480, %v2482
        %v2491 = vsel %vm2487, %v2478, %v2480
        %v2492 = vsel %vm2487, %v2476, %v2478
        %v2493 = vsel %vm2487, %v2474, %v2476
        %v2494 = vsel %vm2487, %v2472, %v2474
        %v2495 = vsel %vm2487, %v2486, %v2472
        %s2496 = scalar_lea.vmem [#allocation5], 64
        %v2497 = vld [vmem:[%s2496] ss:$8 sm:$0xf]
        %v2498 = vld [vmem:[%s2496] ss:$8 sm:$0xf0]
        %v2499 = vor.u32 %v2497, %v2498
        %v2501 = vperm.slane %v2499, 0
        %v2502 = vperm.slane %v2499, 1
        %v2503 = vperm.slane %v2499, 2
        %v2504 = vperm.slane %v2499, 3
        %v2505 = vperm.slane %v2499, 4
        %v2506 = vperm.slane %v2499, 5
        %v2507 = vperm.slane %v2499, 6
        %v2508 = vperm.slane %v2499, 7
        %v2517 = vmul.f32 %v2494, %v2501
        %v2518 = vmul.f32 %v2493, %v2502
        %v2519 = vmul.f32 %v2492, %v2503
        %v2520 = vmul.f32 %v2491, %v2504
        %v2521 = vmul.f32 %v2490, %v2505
        %v2522 = vmul.f32 %v2489, %v2506
        %v2523 = vmul.f32 %v2488, %v2507
        %v2524 = vmul.f32 %v2495, %v2508
        %2525 = vrot.lane.b32.xlu0 %v314, 96
        %v2526 = vpop.permute.xlu0 %2525
        %v2527 = vsel %vm410, %v2526, 0
        %v2530 = vsel %vm414, %v2517, 0
        %v2533 = vsel %vm414, %v2518, 0
        %v2536 = vsel %vm414, %v2519, 0
        %v2539 = vsel %vm414, %v2520, 0
        %v2542 = vsel %vm414, %v2521, 0
        %v2545 = vsel %vm414, %v2522, 0
        %v2548 = vsel %vm414, %v2523, 0
        %v2551 = vsel %vm414, %v2524, 0
        %2553 = vmatpush.msra.mxu0 0.0
        %2554 = vmatpush.msra.mxu0 0.0
        %2555 = vmatpush.msra.mxu0 0.0
        %2556 = vmatpush.msra.mxu0 0.0
        %2557 = vmatpush.msra.mxu0 0.0
        %2558 = vmatpush.msra.mxu0 0.0
        %2559 = vmatpush.msra.mxu0 0.0
        %2560 = vmatpush.msra.mxu0 0.0
        %2561 = vmatpush.msra.mxu0 0.0
        %2562 = vmatpush.msra.mxu0 0.0
        %2563 = vmatpush.msra.mxu0 0.0
        %2564 = vmatpush.msra.mxu0 0.0
        %2565 = vmatpush.msra.mxu0 0.0
        %2566 = vmatpush.msra.mxu0 0.0
        %2567 = vmatpush.msra.mxu0 0.0
        %2568 = vmatpush.msra.mxu0 %v2530
        %2569 = vmatmul.f32.gmra.mxu0 %v2527
        %v2570 = vpop.f32.mrf.mxu0
        %v2571 = vadd.f32 0.0, %v2570
        %2572 = vdwg.mxu0
        %2573 = vmatpush.msra.mxu0 0.0
        %2574 = vmatpush.msra.mxu0 0.0
        %2575 = vmatpush.msra.mxu0 0.0
        %2576 = vmatpush.msra.mxu0 0.0
        %2577 = vmatpush.msra.mxu0 0.0
        %2578 = vmatpush.msra.mxu0 0.0
        %2579 = vmatpush.msra.mxu0 0.0
        %2580 = vmatpush.msra.mxu0 0.0
        %2581 = vmatpush.msra.mxu0 0.0
        %2582 = vmatpush.msra.mxu0 0.0
        %2583 = vmatpush.msra.mxu0 0.0
        %2584 = vmatpush.msra.mxu0 0.0
        %2585 = vmatpush.msra.mxu0 0.0
        %2586 = vmatpush.msra.mxu0 0.0
        %2587 = vmatpush.msra.mxu0 0.0
        %2588 = vmatpush.msra.mxu0 %v2533
        %2589 = vmatmul.f32.gmra.mxu0 %v2527
        %v2590 = vpop.f32.mrf.mxu0
        %v2591 = vadd.f32 0.0, %v2590
        %2592 = vdwg.mxu0
        %2593 = vmatpush.msra.mxu0 0.0
        %2594 = vmatpush.msra.mxu0 0.0
        %2595 = vmatpush.msra.mxu0 0.0
        %2596 = vmatpush.msra.mxu0 0.0
        %2597 = vmatpush.msra.mxu0 0.0
        %2598 = vmatpush.msra.mxu0 0.0
        %2599 = vmatpush.msra.mxu0 0.0
        %2600 = vmatpush.msra.mxu0 0.0
        %2601 = vmatpush.msra.mxu0 0.0
        %2602 = vmatpush.msra.mxu0 0.0
        %2603 = vmatpush.msra.mxu0 0.0
        %2604 = vmatpush.msra.mxu0 0.0
        %2605 = vmatpush.msra.mxu0 0.0
        %2606 = vmatpush.msra.mxu0 0.0
        %2607 = vmatpush.msra.mxu0 0.0
        %2608 = vmatpush.msra.mxu0 %v2536
        %2609 = vmatmul.f32.gmra.mxu0 %v2527
        %v2610 = vpop.f32.mrf.mxu0
        %v2611 = vadd.f32 0.0, %v2610
        %2612 = vdwg.mxu0
        %2613 = vmatpush.msra.mxu0 0.0
        %2614 = vmatpush.msra.mxu0 0.0
        %2615 = vmatpush.msra.mxu0 0.0
        %2616 = vmatpush.msra.mxu0 0.0
        %2617 = vmatpush.msra.mxu0 0.0
        %2618 = vmatpush.msra.mxu0 0.0
        %2619 = vmatpush.msra.mxu0 0.0
        %2620 = vmatpush.msra.mxu0 0.0
        %2621 = vmatpush.msra.mxu0 0.0
        %2622 = vmatpush.msra.mxu0 0.0
        %2623 = vmatpush.msra.mxu0 0.0
        %2624 = vmatpush.msra.mxu0 0.0
        %2625 = vmatpush.msra.mxu0 0.0
        %2626 = vmatpush.msra.mxu0 0.0
        %2627 = vmatpush.msra.mxu0 0.0
        %2628 = vmatpush.msra.mxu0 %v2539
        %2629 = vmatmul.f32.gmra.mxu0 %v2527
        %v2630 = vpop.f32.mrf.mxu0
        %v2631 = vadd.f32 0.0, %v2630
        %2632 = vdwg.mxu0
        %2633 = vmatpush.msra.mxu0 0.0
        %2634 = vmatpush.msra.mxu0 0.0
        %2635 = vmatpush.msra.mxu0 0.0
        %2636 = vmatpush.msra.mxu0 0.0
        %2637 = vmatpush.msra.mxu0 0.0
        %2638 = vmatpush.msra.mxu0 0.0
        %2639 = vmatpush.msra.mxu0 0.0
        %2640 = vmatpush.msra.mxu0 0.0
        %2641 = vmatpush.msra.mxu0 0.0
        %2642 = vmatpush.msra.mxu0 0.0
        %2643 = vmatpush.msra.mxu0 0.0
        %2644 = vmatpush.msra.mxu0 0.0
        %2645 = vmatpush.msra.mxu0 0.0
        %2646 = vmatpush.msra.mxu0 0.0
        %2647 = vmatpush.msra.mxu0 0.0
        %2648 = vmatpush.msra.mxu0 %v2542
        %2649 = vmatmul.f32.gmra.mxu0 %v2527
        %v2650 = vpop.f32.mrf.mxu0
        %v2651 = vadd.f32 0.0, %v2650
        %2652 = vdwg.mxu0
        %2653 = vmatpush.msra.mxu0 0.0
        %2654 = vmatpush.msra.mxu0 0.0
        %2655 = vmatpush.msra.mxu0 0.0
        %2656 = vmatpush.msra.mxu0 0.0
        %2657 = vmatpush.msra.mxu0 0.0
        %2658 = vmatpush.msra.mxu0 0.0
        %2659 = vmatpush.msra.mxu0 0.0
        %2660 = vmatpush.msra.mxu0 0.0
        %2661 = vmatpush.msra.mxu0 0.0
        %2662 = vmatpush.msra.mxu0 0.0
        %2663 = vmatpush.msra.mxu0 0.0
        %2664 = vmatpush.msra.mxu0 0.0
        %2665 = vmatpush.msra.mxu0 0.0
        %2666 = vmatpush.msra.mxu0 0.0
        %2667 = vmatpush.msra.mxu0 0.0
        %2668 = vmatpush.msra.mxu0 %v2545
        %2669 = vmatmul.f32.gmra.mxu0 %v2527
        %v2670 = vpop.f32.mrf.mxu0
        %v2671 = vadd.f32 0.0, %v2670
        %2672 = vdwg.mxu0
        %2673 = vmatpush.msra.mxu0 0.0
        %2674 = vmatpush.msra.mxu0 0.0
        %2675 = vmatpush.msra.mxu0 0.0
        %2676 = vmatpush.msra.mxu0 0.0
        %2677 = vmatpush.msra.mxu0 0.0
        %2678 = vmatpush.msra.mxu0 0.0
        %2679 = vmatpush.msra.mxu0 0.0
        %2680 = vmatpush.msra.mxu0 0.0
        %2681 = vmatpush.msra.mxu0 0.0
        %2682 = vmatpush.msra.mxu0 0.0
        %2683 = vmatpush.msra.mxu0 0.0
        %2684 = vmatpush.msra.mxu0 0.0
        %2685 = vmatpush.msra.mxu0 0.0
        %2686 = vmatpush.msra.mxu0 0.0
        %2687 = vmatpush.msra.mxu0 0.0
        %2688 = vmatpush.msra.mxu0 %v2548
        %2689 = vmatmul.f32.gmra.mxu0 %v2527
        %v2690 = vpop.f32.mrf.mxu0
        %v2691 = vadd.f32 0.0, %v2690
        %2692 = vdwg.mxu0
        %2693 = vmatpush.msra.mxu0 0.0
        %2694 = vmatpush.msra.mxu0 0.0
        %2695 = vmatpush.msra.mxu0 0.0
        %2696 = vmatpush.msra.mxu0 0.0
        %2697 = vmatpush.msra.mxu0 0.0
        %2698 = vmatpush.msra.mxu0 0.0
        %2699 = vmatpush.msra.mxu0 0.0
        %2700 = vmatpush.msra.mxu0 0.0
        %2701 = vmatpush.msra.mxu0 0.0
        %2702 = vmatpush.msra.mxu0 0.0
        %2703 = vmatpush.msra.mxu0 0.0
        %2704 = vmatpush.msra.mxu0 0.0
        %2705 = vmatpush.msra.mxu0 0.0
        %2706 = vmatpush.msra.mxu0 0.0
        %2707 = vmatpush.msra.mxu0 0.0
        %2708 = vmatpush.msra.mxu0 %v2551
        %2709 = vmatmul.f32.gmra.mxu0 %v2527
        %v2710 = vpop.f32.mrf.mxu0
        %v2711 = vadd.f32 0.0, %v2710
        %2712 = vdwg.mxu0
        %v2713 = vadd.f32 %v2440, %v2571
        %v2714 = vadd.f32 %v2441, %v2591
        %v2715 = vadd.f32 %v2442, %v2611
        %v2716 = vadd.f32 %v2443, %v2631
        %v2717 = vadd.f32 %v2444, %v2651
        %v2718 = vadd.f32 %v2445, %v2671
        %v2719 = vadd.f32 %v2446, %v2691
        %v2720 = vadd.f32 %v2447, %v2711
        %v2721 = vmul.f32 %v2713, 0.5
        %v2722 = vmul.f32 %v2714, 0.5
        %v2723 = vmul.f32 %v2715, 0.5
        %v2724 = vmul.f32 %v2716, 0.5
        %v2725 = vmul.f32 %v2717, 0.5
        %v2726 = vmul.f32 %v2718, 0.5
        %v2727 = vmul.f32 %v2719, 0.5
        %v2728 = vmul.f32 %v2720, 0.5
        %v2729 = vmul.f32 %v2713, 0.70710677
        %v2730 = vmul.f32 %v2714, 0.70710677
        %v2731 = vmul.f32 %v2715, 0.70710677
        %v2732 = vmul.f32 %v2716, 0.70710677
        %v2733 = vmul.f32 %v2717, 0.70710677
        %v2734 = vmul.f32 %v2718, 0.70710677
        %v2735 = vmul.f32 %v2719, 0.70710677
        %v2736 = vmul.f32 %v2720, 0.70710677
        %v2737 = vand.u32 2147483647, %v2729
        %v2738 = vand.u32 2147483647, %v2730
        %v2739 = vand.u32 2147483647, %v2731
        %v2740 = vand.u32 2147483647, %v2732
        %v2741 = vand.u32 2147483647, %v2733
        %v2742 = vand.u32 2147483647, %v2734
        %v2743 = vand.u32 2147483647, %v2735
        %v2744 = vand.u32 2147483647, %v2736
        %v2745 = vmul.f32 %v2737, 0.3275911
        %v2746 = vmul.f32 %v2738, 0.3275911
        %v2747 = vmul.f32 %v2739, 0.3275911
        %v2748 = vmul.f32 %v2740, 0.3275911
        %v2749 = vmul.f32 %v2741, 0.3275911
        %v2750 = vmul.f32 %v2742, 0.3275911
        %v2751 = vmul.f32 %v2743, 0.3275911
        %v2752 = vmul.f32 %v2744, 0.3275911
        %v2753 = vadd.f32 %v2745, 1.0
        %v2754 = vadd.f32 %v2746, 1.0
        %v2755 = vadd.f32 %v2747, 1.0
        %v2756 = vadd.f32 %v2748, 1.0
        %v2757 = vadd.f32 %v2749, 1.0
        %v2758 = vadd.f32 %v2750, 1.0
        %v2759 = vadd.f32 %v2751, 1.0
        %v2760 = vadd.f32 %v2752, 1.0
        %v2761 = vrcp.pop %v2753
        %v2762 = vrcp.pop %v2754
        %v2763 = vrcp.pop %v2755
        %v2764 = vrcp.pop %v2756
        %v2765 = vrcp.pop %v2757
        %v2766 = vrcp.pop %v2758
        %v2767 = vrcp.pop %v2759
        %v2768 = vrcp.pop %v2760
        %v2769 = vmul.f32 %v2753, %v2761
        %v2770 = vmul.f32 %v2754, %v2762
        %v2771 = vmul.f32 %v2755, %v2763
        %v2772 = vmul.f32 %v2756, %v2764
        %v2773 = vmul.f32 %v2757, %v2765
        %v2774 = vmul.f32 %v2758, %v2766
        %v2775 = vmul.f32 %v2759, %v2767
        %v2776 = vmul.f32 %v2760, %v2768
        %v2777 = vsub.f32 2.0, %v2769
        %v2778 = vsub.f32 2.0, %v2770
        %v2779 = vsub.f32 2.0, %v2771
        %v2780 = vsub.f32 2.0, %v2772
        %v2781 = vsub.f32 2.0, %v2773
        %v2782 = vsub.f32 2.0, %v2774
        %v2783 = vsub.f32 2.0, %v2775
        %v2784 = vsub.f32 2.0, %v2776
        %v2785 = vmul.f32 %v2761, %v2777
        %v2786 = vmul.f32 %v2762, %v2778
        %v2787 = vmul.f32 %v2763, %v2779
        %v2788 = vmul.f32 %v2764, %v2780
        %v2789 = vmul.f32 %v2765, %v2781
        %v2790 = vmul.f32 %v2766, %v2782
        %v2791 = vmul.f32 %v2767, %v2783
        %v2792 = vmul.f32 %v2768, %v2784
        %v2793 = vmul.f32 %v2785, 1.0614054
        %v2794 = vmul.f32 %v2786, 1.0614054
        %v2795 = vmul.f32 %v2787, 1.0614054
        %v2796 = vmul.f32 %v2788, 1.0614054
        %v2797 = vmul.f32 %v2789, 1.0614054
        %v2798 = vmul.f32 %v2790, 1.0614054
        %v2799 = vmul.f32 %v2791, 1.0614054
        %v2800 = vmul.f32 %v2792, 1.0614054
        %v2801 = vadd.f32 %v2793, -1.4531521
        %v2802 = vadd.f32 %v2794, -1.4531521
        %v2803 = vadd.f32 %v2795, -1.4531521
        %v2804 = vadd.f32 %v2796, -1.4531521
        %v2805 = vadd.f32 %v2797, -1.4531521
        %v2806 = vadd.f32 %v2798, -1.4531521
        %v2807 = vadd.f32 %v2799, -1.4531521
        %v2808 = vadd.f32 %v2800, -1.4531521
        %v2809 = vmul.f32 %v2801, %v2785
        %v2810 = vmul.f32 %v2802, %v2786
        %v2811 = vmul.f32 %v2803, %v2787
        %v2812 = vmul.f32 %v2804, %v2788
        %v2813 = vmul.f32 %v2805, %v2789
        %v2814 = vmul.f32 %v2806, %v2790
        %v2815 = vmul.f32 %v2807, %v2791
        %v2816 = vmul.f32 %v2808, %v2792
        %v2817 = vadd.f32 %v2809, 1.4214138
        %v2818 = vadd.f32 %v2810, 1.4214138
        %v2819 = vadd.f32 %v2811, 1.4214138
        %v2820 = vadd.f32 %v2812, 1.4214138
        %v2821 = vadd.f32 %v2813, 1.4214138
        %v2822 = vadd.f32 %v2814, 1.4214138
        %v2823 = vadd.f32 %v2815, 1.4214138
        %v2824 = vadd.f32 %v2816, 1.4214138
        %v2825 = vmul.f32 %v2817, %v2785
        %v2826 = vmul.f32 %v2818, %v2786
        %v2827 = vmul.f32 %v2819, %v2787
        %v2828 = vmul.f32 %v2820, %v2788
        %v2829 = vmul.f32 %v2821, %v2789
        %v2830 = vmul.f32 %v2822, %v2790
        %v2831 = vmul.f32 %v2823, %v2791
        %v2832 = vmul.f32 %v2824, %v2792
        %v2833 = vadd.f32 %v2825, -0.28449672
        %v2834 = vadd.f32 %v2826, -0.28449672
        %v2835 = vadd.f32 %v2827, -0.28449672
        %v2836 = vadd.f32 %v2828, -0.28449672
        %v2837 = vadd.f32 %v2829, -0.28449672
        %v2838 = vadd.f32 %v2830, -0.28449672
        %v2839 = vadd.f32 %v2831, -0.28449672
        %v2840 = vadd.f32 %v2832, -0.28449672
        %v2841 = vmul.f32 %v2833, %v2785
        %v2842 = vmul.f32 %v2834, %v2786
        %v2843 = vmul.f32 %v2835, %v2787
        %v2844 = vmul.f32 %v2836, %v2788
        %v2845 = vmul.f32 %v2837, %v2789
        %v2846 = vmul.f32 %v2838, %v2790
        %v2847 = vmul.f32 %v2839, %v2791
        %v2848 = vmul.f32 %v2840, %v2792
        %v2849 = vadd.f32 %v2841, 0.2548296
        %v2850 = vadd.f32 %v2842, 0.2548296
        %v2851 = vadd.f32 %v2843, 0.2548296
        %v2852 = vadd.f32 %v2844, 0.2548296
        %v2853 = vadd.f32 %v2845, 0.2548296
        %v2854 = vadd.f32 %v2846, 0.2548296
        %v2855 = vadd.f32 %v2847, 0.2548296
        %v2856 = vadd.f32 %v2848, 0.2548296
        %v2857 = vmul.f32 %v2849, %v2785
        %v2858 = vmul.f32 %v2850, %v2786
        %v2859 = vmul.f32 %v2851, %v2787
        %v2860 = vmul.f32 %v2852, %v2788
        %v2861 = vmul.f32 %v2853, %v2789
        %v2862 = vmul.f32 %v2854, %v2790
        %v2863 = vmul.f32 %v2855, %v2791
        %v2864 = vmul.f32 %v2856, %v2792
        %v2865 = vsub.f32 0.0, %v2737
        %v2866 = vsub.f32 0.0, %v2738
        %v2867 = vsub.f32 0.0, %v2739
        %v2868 = vsub.f32 0.0, %v2740
        %v2869 = vsub.f32 0.0, %v2741
        %v2870 = vsub.f32 0.0, %v2742
        %v2871 = vsub.f32 0.0, %v2743
        %v2872 = vsub.f32 0.0, %v2744
        %v2873 = vmul.f32 %v2865, %v2737
        %v2874 = vmul.f32 %v2866, %v2738
        %v2875 = vmul.f32 %v2867, %v2739
        %v2876 = vmul.f32 %v2868, %v2740
        %v2877 = vmul.f32 %v2869, %v2741
        %v2878 = vmul.f32 %v2870, %v2742
        %v2879 = vmul.f32 %v2871, %v2743
        %v2880 = vmul.f32 %v2872, %v2744
        %v2881 = vmul.f32 %v2873, 1.442695
        %v2882 = vpow.pop %v2881
        %v2883 = vmul.f32 %v2874, 1.442695
        %v2884 = vpow.pop %v2883
        %v2885 = vmul.f32 %v2875, 1.442695
        %v2886 = vpow.pop %v2885
        %v2887 = vmul.f32 %v2876, 1.442695
        %v2888 = vpow.pop %v2887
        %v2889 = vmul.f32 %v2877, 1.442695
        %v2890 = vpow.pop %v2889
        %v2891 = vmul.f32 %v2878, 1.442695
        %v2892 = vpow.pop %v2891
        %v2893 = vmul.f32 %v2879, 1.442695
        %v2894 = vpow.pop %v2893
        %v2895 = vmul.f32 %v2880, 1.442695
        %v2896 = vpow.pop %v2895
        %v2897 = vmul.f32 %v2857, %v2882
        %v2898 = vmul.f32 %v2858, %v2884
        %v2899 = vmul.f32 %v2859, %v2886
        %v2900 = vmul.f32 %v2860, %v2888
        %v2901 = vmul.f32 %v2861, %v2890
        %v2902 = vmul.f32 %v2862, %v2892
        %v2903 = vmul.f32 %v2863, %v2894
        %v2904 = vmul.f32 %v2864, %v2896
        %v2905 = vsub.f32 1.0, %v2897
        %v2906 = vsub.f32 1.0, %v2898
        %v2907 = vsub.f32 1.0, %v2899
        %v2908 = vsub.f32 1.0, %v2900
        %v2909 = vsub.f32 1.0, %v2901
        %v2910 = vsub.f32 1.0, %v2902
        %v2911 = vsub.f32 1.0, %v2903
        %v2912 = vsub.f32 1.0, %v2904
        %vm2913 = vcmp.lt.f32.partialorder %v2729, 0.0
        %vm2914 = vcmp.lt.f32.partialorder %v2730, 0.0
        %vm2915 = vcmp.lt.f32.partialorder %v2731, 0.0
        %vm2916 = vcmp.lt.f32.partialorder %v2732, 0.0
        %vm2917 = vcmp.lt.f32.partialorder %v2733, 0.0
        %vm2918 = vcmp.lt.f32.partialorder %v2734, 0.0
        %vm2919 = vcmp.lt.f32.partialorder %v2735, 0.0
        %vm2920 = vcmp.lt.f32.partialorder %v2736, 0.0
        %v2921 = vsub.f32 0.0, %v2905
        %v2922 = vsub.f32 0.0, %v2906
        %v2923 = vsub.f32 0.0, %v2907
        %v2924 = vsub.f32 0.0, %v2908
        %v2925 = vsub.f32 0.0, %v2909
        %v2926 = vsub.f32 0.0, %v2910
        %v2927 = vsub.f32 0.0, %v2911
        %v2928 = vsub.f32 0.0, %v2912
        %v2929 = vsel %vm2913, %v2921, %v2905
        %v2930 = vsel %vm2914, %v2922, %v2906
        %v2931 = vsel %vm2915, %v2923, %v2907
        %v2932 = vsel %vm2916, %v2924, %v2908
        %v2933 = vsel %vm2917, %v2925, %v2909
        %v2934 = vsel %vm2918, %v2926, %v2910
        %v2935 = vsel %vm2919, %v2927, %v2911
        %v2936 = vsel %vm2920, %v2928, %v2912
        %v2937 = vadd.f32 %v2929, 1.0
        %v2938 = vadd.f32 %v2930, 1.0
        %v2939 = vadd.f32 %v2931, 1.0
        %v2940 = vadd.f32 %v2932, 1.0
        %v2941 = vadd.f32 %v2933, 1.0
        %v2942 = vadd.f32 %v2934, 1.0
        %v2943 = vadd.f32 %v2935, 1.0
        %v2944 = vadd.f32 %v2936, 1.0
        %v2945 = vmul.f32 %v2721, %v2937
        %v2946 = vmul.f32 %v2722, %v2938
        %v2947 = vmul.f32 %v2723, %v2939
        %v2948 = vmul.f32 %v2724, %v2940
        %v2949 = vmul.f32 %v2725, %v2941
        %v2950 = vmul.f32 %v2726, %v2942
        %v2951 = vmul.f32 %v2727, %v2943
        %v2952 = vmul.f32 %v2728, %v2944
        %2954 = vset.pattern.permute.xlu0 0
        %2955 = vperm.xlu0 %2954, %v318
        %v2956 = vpop.permute.xlu0 %2955
        %2958 = vst [vmem:[#allocation1] ss:$2 sm:$0xff] %v319
        %s2959 = scalar_lea.vmem [#allocation1], 16
        %2960 = vst [vmem:[%s2959] ss:$2 sm:$0xff] %v320
        %s2961 = scalar_lea.vmem [#allocation1], 32
        %2962 = vst [vmem:[%s2961] ss:$2 sm:$0xff] %v321
        %s2963 = scalar_lea.vmem [#allocation1], 48
        %2964 = vst [vmem:[%s2963] ss:$2 sm:$0xff] %v322
        %v2965 = vld.sshfl [vmem:[#allocation1] sm:$0xff pattern:$0x75316420]
        %v2966 = vld.sshfl [vmem:[#allocation1 + $0x8] sm:$0xff pattern:$0x75316420]
        %v2967 = vld.sshfl [vmem:[#allocation1 + $0x10] sm:$0xff pattern:$0x75316420]
        %v2968 = vld.sshfl [vmem:[#allocation1 + $0x18] sm:$0xff pattern:$0x75316420]
        %v2969 = vld.sshfl [vmem:[#allocation1 + $0x20] sm:$0xff pattern:$0x75316420]
        %v2970 = vld.sshfl [vmem:[#allocation1 + $0x28] sm:$0xff pattern:$0x75316420]
        %v2971 = vld.sshfl [vmem:[#allocation1 + $0x30] sm:$0xff pattern:$0x75316420]
        %v2972 = vld.sshfl [vmem:[#allocation1 + $0x38] sm:$0xff pattern:$0x75316420]
        %v2974 = vsel %vm410, %v316, 0
        %v2976 = vsel %vm414, %v2965, 0
        %v2978 = vsel %vm414, %v2966, 0
        %v2980 = vsel %vm414, %v2967, 0
        %v2982 = vsel %vm414, %v2968, 0
        %v2984 = vsel %vm414, %v2969, 0
        %v2986 = vsel %vm414, %v2970, 0
        %v2988 = vsel %vm414, %v2971, 0
        %v2990 = vsel %vm414, %v2972, 0
        %2992 = vmatpush.msra.mxu0 0.0
        %2993 = vmatpush.msra.mxu0 0.0
        %2994 = vmatpush.msra.mxu0 0.0
        %2995 = vmatpush.msra.mxu0 0.0
        %2996 = vmatpush.msra.mxu0 0.0
        %2997 = vmatpush.msra.mxu0 0.0
        %2998 = vmatpush.msra.mxu0 0.0
        %2999 = vmatpush.msra.mxu0 0.0
        %3000 = vmatpush.msra.mxu0 0.0
        %3001 = vmatpush.msra.mxu0 0.0
        %3002 = vmatpush.msra.mxu0 0.0
        %3003 = vmatpush.msra.mxu0 0.0
        %3004 = vmatpush.msra.mxu0 0.0
        %3005 = vmatpush.msra.mxu0 0.0
        %3006 = vmatpush.msra.mxu0 0.0
        %3007 = vmatpush.msra.mxu0 %v2976
        %3008 = vmatmul.f32.gmra.mxu0 %v2974
        %v3009 = vpop.f32.mrf.mxu0
        %v3010 = vadd.f32 0.0, %v3009
        %3011 = vdwg.mxu0
        %3012 = vmatpush.msra.mxu0 0.0
        %3013 = vmatpush.msra.mxu0 0.0
        %3014 = vmatpush.msra.mxu0 0.0
        %3015 = vmatpush.msra.mxu0 0.0
        %3016 = vmatpush.msra.mxu0 0.0
        %3017 = vmatpush.msra.mxu0 0.0
        %3018 = vmatpush.msra.mxu0 0.0
        %3019 = vmatpush.msra.mxu0 0.0
        %3020 = vmatpush.msra.mxu0 0.0
        %3021 = vmatpush.msra.mxu0 0.0
        %3022 = vmatpush.msra.mxu0 0.0
        %3023 = vmatpush.msra.mxu0 0.0
        %3024 = vmatpush.msra.mxu0 0.0
        %3025 = vmatpush.msra.mxu0 0.0
        %3026 = vmatpush.msra.mxu0 0.0
        %3027 = vmatpush.msra.mxu0 %v2978
        %3028 = vmatmul.f32.gmra.mxu0 %v2974
        %v3029 = vpop.f32.mrf.mxu0
        %v3030 = vadd.f32 0.0, %v3029
        %3031 = vdwg.mxu0
        %3032 = vmatpush.msra.mxu0 0.0
        %3033 = vmatpush.msra.mxu0 0.0
        %3034 = vmatpush.msra.mxu0 0.0
        %3035 = vmatpush.msra.mxu0 0.0
        %3036 = vmatpush.msra.mxu0 0.0
        %3037 = vmatpush.msra.mxu0 0.0
        %3038 = vmatpush.msra.mxu0 0.0
        %3039 = vmatpush.msra.mxu0 0.0
        %3040 = vmatpush.msra.mxu0 0.0
        %3041 = vmatpush.msra.mxu0 0.0
        %3042 = vmatpush.msra.mxu0 0.0
        %3043 = vmatpush.msra.mxu0 0.0
        %3044 = vmatpush.msra.mxu0 0.0
        %3045 = vmatpush.msra.mxu0 0.0
        %3046 = vmatpush.msra.mxu0 0.0
        %3047 = vmatpush.msra.mxu0 %v2980
        %3048 = vmatmul.f32.gmra.mxu0 %v2974
        %v3049 = vpop.f32.mrf.mxu0
        %v3050 = vadd.f32 0.0, %v3049
        %3051 = vdwg.mxu0
        %3052 = vmatpush.msra.mxu0 0.0
        %3053 = vmatpush.msra.mxu0 0.0
        %3054 = vmatpush.msra.mxu0 0.0
        %3055 = vmatpush.msra.mxu0 0.0
        %3056 = vmatpush.msra.mxu0 0.0
        %3057 = vmatpush.msra.mxu0 0.0
        %3058 = vmatpush.msra.mxu0 0.0
        %3059 = vmatpush.msra.mxu0 0.0
        %3060 = vmatpush.msra.mxu0 0.0
        %3061 = vmatpush.msra.mxu0 0.0
        %3062 = vmatpush.msra.mxu0 0.0
        %3063 = vmatpush.msra.mxu0 0.0
        %3064 = vmatpush.msra.mxu0 0.0
        %3065 = vmatpush.msra.mxu0 0.0
        %3066 = vmatpush.msra.mxu0 0.0
        %3067 = vmatpush.msra.mxu0 %v2982
        %3068 = vmatmul.f32.gmra.mxu0 %v2974
        %v3069 = vpop.f32.mrf.mxu0
        %v3070 = vadd.f32 0.0, %v3069
        %3071 = vdwg.mxu0
        %3072 = vmatpush.msra.mxu0 0.0
        %3073 = vmatpush.msra.mxu0 0.0
        %3074 = vmatpush.msra.mxu0 0.0
        %3075 = vmatpush.msra.mxu0 0.0
        %3076 = vmatpush.msra.mxu0 0.0
        %3077 = vmatpush.msra.mxu0 0.0
        %3078 = vmatpush.msra.mxu0 0.0
        %3079 = vmatpush.msra.mxu0 0.0
        %3080 = vmatpush.msra.mxu0 0.0
        %3081 = vmatpush.msra.mxu0 0.0
        %3082 = vmatpush.msra.mxu0 0.0
        %3083 = vmatpush.msra.mxu0 0.0
        %3084 = vmatpush.msra.mxu0 0.0
        %3085 = vmatpush.msra.mxu0 0.0
        %3086 = vmatpush.msra.mxu0 0.0
        %3087 = vmatpush.msra.mxu0 %v2984
        %3088 = vmatmul.f32.gmra.mxu0 %v2974
        %v3089 = vpop.f32.mrf.mxu0
        %v3090 = vadd.f32 0.0, %v3089
        %3091 = vdwg.mxu0
        %3092 = vmatpush.msra.mxu0 0.0
        %3093 = vmatpush.msra.mxu0 0.0
        %3094 = vmatpush.msra.mxu0 0.0
        %3095 = vmatpush.msra.mxu0 0.0
        %3096 = vmatpush.msra.mxu0 0.0
        %3097 = vmatpush.msra.mxu0 0.0
        %3098 = vmatpush.msra.mxu0 0.0
        %3099 = vmatpush.msra.mxu0 0.0
        %3100 = vmatpush.msra.mxu0 0.0
        %3101 = vmatpush.msra.mxu0 0.0
        %3102 = vmatpush.msra.mxu0 0.0
        %3103 = vmatpush.msra.mxu0 0.0
        %3104 = vmatpush.msra.mxu0 0.0
        %3105 = vmatpush.msra.mxu0 0.0
        %3106 = vmatpush.msra.mxu0 0.0
        %3107 = vmatpush.msra.mxu0 %v2986
        %3108 = vmatmul.f32.gmra.mxu0 %v2974
        %v3109 = vpop.f32.mrf.mxu0
        %v3110 = vadd.f32 0.0, %v3109
        %3111 = vdwg.mxu0
        %3112 = vmatpush.msra.mxu0 0.0
        %3113 = vmatpush.msra.mxu0 0.0
        %3114 = vmatpush.msra.mxu0 0.0
        %3115 = vmatpush.msra.mxu0 0.0
        %3116 = vmatpush.msra.mxu0 0.0
        %3117 = vmatpush.msra.mxu0 0.0
        %3118 = vmatpush.msra.mxu0 0.0
        %3119 = vmatpush.msra.mxu0 0.0
        %3120 = vmatpush.msra.mxu0 0.0
        %3121 = vmatpush.msra.mxu0 0.0
        %3122 = vmatpush.msra.mxu0 0.0
        %3123 = vmatpush.msra.mxu0 0.0
        %3124 = vmatpush.msra.mxu0 0.0
        %3125 = vmatpush.msra.mxu0 0.0
        %3126 = vmatpush.msra.mxu0 0.0
        %3127 = vmatpush.msra.mxu0 %v2988
        %3128 = vmatmul.f32.gmra.mxu0 %v2974
        %v3129 = vpop.f32.mrf.mxu0
        %v3130 = vadd.f32 0.0, %v3129
        %3131 = vdwg.mxu0
        %3132 = vmatpush.msra.mxu0 0.0
        %3133 = vmatpush.msra.mxu0 0.0
        %3134 = vmatpush.msra.mxu0 0.0
        %3135 = vmatpush.msra.mxu0 0.0
        %3136 = vmatpush.msra.mxu0 0.0
        %3137 = vmatpush.msra.mxu0 0.0
        %3138 = vmatpush.msra.mxu0 0.0
        %3139 = vmatpush.msra.mxu0 0.0
        %3140 = vmatpush.msra.mxu0 0.0
        %3141 = vmatpush.msra.mxu0 0.0
        %3142 = vmatpush.msra.mxu0 0.0
        %3143 = vmatpush.msra.mxu0 0.0
        %3144 = vmatpush.msra.mxu0 0.0
        %3145 = vmatpush.msra.mxu0 0.0
        %3146 = vmatpush.msra.mxu0 0.0
        %3147 = vmatpush.msra.mxu0 %v2990
        %3148 = vmatmul.f32.gmra.mxu0 %v2974
        %v3149 = vpop.f32.mrf.mxu0
        %v3150 = vadd.f32 0.0, %v3149
        %3151 = vdwg.mxu0
        %v3152 = vadd.f32 %v2956, %v3010
        %v3153 = vadd.f32 %v2956, %v3030
        %v3154 = vadd.f32 %v2956, %v3050
        %v3155 = vadd.f32 %v2956, %v3070
        %v3156 = vadd.f32 %v2956, %v3090
        %v3157 = vadd.f32 %v2956, %v3110
        %v3158 = vadd.f32 %v2956, %v3130
        %v3159 = vadd.f32 %v2956, %v3150
        %3160 = vrot.lane.b32.xlu0 %v2945, 33
        %v3161 = vpop.permute.xlu0 %3160
        %3162 = vrot.lane.b32.xlu0 %v2946, 33
        %v3163 = vpop.permute.xlu0 %3162
        %3164 = vrot.lane.b32.xlu0 %v2947, 33
        %v3165 = vpop.permute.xlu0 %3164
        %3166 = vrot.lane.b32.xlu0 %v2948, 33
        %v3167 = vpop.permute.xlu0 %3166
        %3168 = vrot.lane.b32.xlu0 %v2949, 33
        %v3169 = vpop.permute.xlu0 %3168
        %3170 = vrot.lane.b32.xlu0 %v2950, 33
        %v3171 = vpop.permute.xlu0 %3170
        %3172 = vrot.lane.b32.xlu0 %v2951, 33
        %v3173 = vpop.permute.xlu0 %3172
        %3174 = vrot.lane.b32.xlu0 %v2952, 33
        %v3175 = vpop.permute.xlu0 %3174
        %v3176 = vsel %vm373, %v3173, %v3175
        %v3177 = vsel %vm373, %v3171, %v3173
        %v3178 = vsel %vm373, %v3169, %v3171
        %v3179 = vsel %vm373, %v3167, %v3169
        %v3180 = vsel %vm373, %v3165, %v3167
        %v3181 = vsel %vm373, %v3163, %v3165
        %v3182 = vsel %vm373, %v3161, %v3163
        %v3183 = vsel %vm373, %v3175, %v3161
        %v3184 = vmul.f32 %v3183, %v386
        %v3185 = vmul.f32 %v3182, %v387
        %v3186 = vmul.f32 %v3181, %v388
        %v3187 = vmul.f32 %v3180, %v389
        %v3188 = vmul.f32 %v3179, %v390
        %v3189 = vmul.f32 %v3178, %v391
        %v3190 = vmul.f32 %v3177, %v392
        %v3191 = vmul.f32 %v3176, %v393
        %vm3192 = vcmask 64512
        %v3194 = vsel %vm3192, %v315, 0
        %3196 = vmatpush.msra.mxu0 0.0
        %3197 = vmatpush.msra.mxu0 0.0
        %3198 = vmatpush.msra.mxu0 0.0
        %3199 = vmatpush.msra.mxu0 0.0
        %3200 = vmatpush.msra.mxu0 0.0
        %3201 = vmatpush.msra.mxu0 0.0
        %3202 = vmatpush.msra.mxu0 0.0
        %3203 = vmatpush.msra.mxu0 0.0
        %3204 = vmatpush.msra.mxu0 0.0
        %3205 = vmatpush.msra.mxu0 0.0
        %3206 = vmatpush.msra.mxu0 0.0
        %3207 = vmatpush.msra.mxu0 0.0
        %3208 = vmatpush.msra.mxu0 0.0
        %3209 = vmatpush.msra.mxu0 0.0
        %3210 = vmatpush.msra.mxu0 0.0
        %3211 = vmatpush.msra.mxu0 %v3184
        %3212 = vmatmul.f32.gmra.mxu0 %v3194
        %v3213 = vpop.f32.mrf.mxu0
        %v3214 = vadd.f32 0.0, %v3213
        %3215 = vdwg.mxu0
        %3216 = vmatpush.msra.mxu0 0.0
        %3217 = vmatpush.msra.mxu0 0.0
        %3218 = vmatpush.msra.mxu0 0.0
        %3219 = vmatpush.msra.mxu0 0.0
        %3220 = vmatpush.msra.mxu0 0.0
        %3221 = vmatpush.msra.mxu0 0.0
        %3222 = vmatpush.msra.mxu0 0.0
        %3223 = vmatpush.msra.mxu0 0.0
        %3224 = vmatpush.msra.mxu0 0.0
        %3225 = vmatpush.msra.mxu0 0.0
        %3226 = vmatpush.msra.mxu0 0.0
        %3227 = vmatpush.msra.mxu0 0.0
        %3228 = vmatpush.msra.mxu0 0.0
        %3229 = vmatpush.msra.mxu0 0.0
        %3230 = vmatpush.msra.mxu0 0.0
        %3231 = vmatpush.msra.mxu0 %v3185
        %3232 = vmatmul.f32.gmra.mxu0 %v3194
        %v3233 = vpop.f32.mrf.mxu0
        %v3234 = vadd.f32 0.0, %v3233
        %3235 = vdwg.mxu0
        %3236 = vmatpush.msra.mxu0 0.0
        %3237 = vmatpush.msra.mxu0 0.0
        %3238 = vmatpush.msra.mxu0 0.0
        %3239 = vmatpush.msra.mxu0 0.0
        %3240 = vmatpush.msra.mxu0 0.0
        %3241 = vmatpush.msra.mxu0 0.0
        %3242 = vmatpush.msra.mxu0 0.0
        %3243 = vmatpush.msra.mxu0 0.0
        %3244 = vmatpush.msra.mxu0 0.0
        %3245 = vmatpush.msra.mxu0 0.0
        %3246 = vmatpush.msra.mxu0 0.0
        %3247 = vmatpush.msra.mxu0 0.0
        %3248 = vmatpush.msra.mxu0 0.0
        %3249 = vmatpush.msra.mxu0 0.0
        %3250 = vmatpush.msra.mxu0 0.0
        %3251 = vmatpush.msra.mxu0 %v3186
        %3252 = vmatmul.f32.gmra.mxu0 %v3194
        %v3253 = vpop.f32.mrf.mxu0
        %v3254 = vadd.f32 0.0, %v3253
        %3255 = vdwg.mxu0
        %3256 = vmatpush.msra.mxu0 0.0
        %3257 = vmatpush.msra.mxu0 0.0
        %3258 = vmatpush.msra.mxu0 0.0
        %3259 = vmatpush.msra.mxu0 0.0
        %3260 = vmatpush.msra.mxu0 0.0
        %3261 = vmatpush.msra.mxu0 0.0
        %3262 = vmatpush.msra.mxu0 0.0
        %3263 = vmatpush.msra.mxu0 0.0
        %3264 = vmatpush.msra.mxu0 0.0
        %3265 = vmatpush.msra.mxu0 0.0
        %3266 = vmatpush.msra.mxu0 0.0
        %3267 = vmatpush.msra.mxu0 0.0
        %3268 = vmatpush.msra.mxu0 0.0
        %3269 = vmatpush.msra.mxu0 0.0
        %3270 = vmatpush.msra.mxu0 0.0
        %3271 = vmatpush.msra.mxu0 %v3187
        %3272 = vmatmul.f32.gmra.mxu0 %v3194
        %v3273 = vpop.f32.mrf.mxu0
        %v3274 = vadd.f32 0.0, %v3273
        %3275 = vdwg.mxu0
        %3276 = vmatpush.msra.mxu0 0.0
        %3277 = vmatpush.msra.mxu0 0.0
        %3278 = vmatpush.msra.mxu0 0.0
        %3279 = vmatpush.msra.mxu0 0.0
        %3280 = vmatpush.msra.mxu0 0.0
        %3281 = vmatpush.msra.mxu0 0.0
        %3282 = vmatpush.msra.mxu0 0.0
        %3283 = vmatpush.msra.mxu0 0.0
        %3284 = vmatpush.msra.mxu0 0.0
        %3285 = vmatpush.msra.mxu0 0.0
        %3286 = vmatpush.msra.mxu0 0.0
        %3287 = vmatpush.msra.mxu0 0.0
        %3288 = vmatpush.msra.mxu0 0.0
        %3289 = vmatpush.msra.mxu0 0.0
        %3290 = vmatpush.msra.mxu0 0.0
        %3291 = vmatpush.msra.mxu0 %v3188
        %3292 = vmatmul.f32.gmra.mxu0 %v3194
        %v3293 = vpop.f32.mrf.mxu0
        %v3294 = vadd.f32 0.0, %v3293
        %3295 = vdwg.mxu0
        %3296 = vmatpush.msra.mxu0 0.0
        %3297 = vmatpush.msra.mxu0 0.0
        %3298 = vmatpush.msra.mxu0 0.0
        %3299 = vmatpush.msra.mxu0 0.0
        %3300 = vmatpush.msra.mxu0 0.0
        %3301 = vmatpush.msra.mxu0 0.0
        %3302 = vmatpush.msra.mxu0 0.0
        %3303 = vmatpush.msra.mxu0 0.0
        %3304 = vmatpush.msra.mxu0 0.0
        %3305 = vmatpush.msra.mxu0 0.0
        %3306 = vmatpush.msra.mxu0 0.0
        %3307 = vmatpush.msra.mxu0 0.0
        %3308 = vmatpush.msra.mxu0 0.0
        %3309 = vmatpush.msra.mxu0 0.0
        %3310 = vmatpush.msra.mxu0 0.0
        %3311 = vmatpush.msra.mxu0 %v3189
        %3312 = vmatmul.f32.gmra.mxu0 %v3194
        %v3313 = vpop.f32.mrf.mxu0
        %v3314 = vadd.f32 0.0, %v3313
        %3315 = vdwg.mxu0
        %3316 = vmatpush.msra.mxu0 0.0
        %3317 = vmatpush.msra.mxu0 0.0
        %3318 = vmatpush.msra.mxu0 0.0
        %3319 = vmatpush.msra.mxu0 0.0
        %3320 = vmatpush.msra.mxu0 0.0
        %3321 = vmatpush.msra.mxu0 0.0
        %3322 = vmatpush.msra.mxu0 0.0
        %3323 = vmatpush.msra.mxu0 0.0
        %3324 = vmatpush.msra.mxu0 0.0
        %3325 = vmatpush.msra.mxu0 0.0
        %3326 = vmatpush.msra.mxu0 0.0
        %3327 = vmatpush.msra.mxu0 0.0
        %3328 = vmatpush.msra.mxu0 0.0
        %3329 = vmatpush.msra.mxu0 0.0
        %3330 = vmatpush.msra.mxu0 0.0
        %3331 = vmatpush.msra.mxu0 %v3190
        %3332 = vmatmul.f32.gmra.mxu0 %v3194
        %v3333 = vpop.f32.mrf.mxu0
        %v3334 = vadd.f32 0.0, %v3333
        %3335 = vdwg.mxu0
        %3336 = vmatpush.msra.mxu0 0.0
        %3337 = vmatpush.msra.mxu0 0.0
        %3338 = vmatpush.msra.mxu0 0.0
        %3339 = vmatpush.msra.mxu0 0.0
        %3340 = vmatpush.msra.mxu0 0.0
        %3341 = vmatpush.msra.mxu0 0.0
        %3342 = vmatpush.msra.mxu0 0.0
        %3343 = vmatpush.msra.mxu0 0.0
        %3344 = vmatpush.msra.mxu0 0.0
        %3345 = vmatpush.msra.mxu0 0.0
        %3346 = vmatpush.msra.mxu0 0.0
        %3347 = vmatpush.msra.mxu0 0.0
        %3348 = vmatpush.msra.mxu0 0.0
        %3349 = vmatpush.msra.mxu0 0.0
        %3350 = vmatpush.msra.mxu0 0.0
        %3351 = vmatpush.msra.mxu0 %v3191
        %3352 = vmatmul.f32.gmra.mxu0 %v3194
        %v3353 = vpop.f32.mrf.mxu0
        %v3354 = vadd.f32 0.0, %v3353
        %3355 = vdwg.mxu0
        %v3356 = vadd.f32 %v3152, %v3214
        %v3357 = vadd.f32 %v3153, %v3234
        %v3358 = vadd.f32 %v3154, %v3254
        %v3359 = vadd.f32 %v3155, %v3274
        %v3360 = vadd.f32 %v3156, %v3294
        %v3361 = vadd.f32 %v3157, %v3314
        %v3362 = vadd.f32 %v3158, %v3334
        %v3363 = vadd.f32 %v3159, %v3354
        %3364 = vrot.lane.b32.xlu0 %v2945, 32
        %v3365 = vpop.permute.xlu0 %3364
        %3366 = vrot.lane.b32.xlu0 %v2946, 32
        %v3367 = vpop.permute.xlu0 %3366
        %3368 = vrot.lane.b32.xlu0 %v2947, 32
        %v3369 = vpop.permute.xlu0 %3368
        %3370 = vrot.lane.b32.xlu0 %v2948, 32
        %v3371 = vpop.permute.xlu0 %3370
        %3372 = vrot.lane.b32.xlu0 %v2949, 32
        %v3373 = vpop.permute.xlu0 %3372
        %3374 = vrot.lane.b32.xlu0 %v2950, 32
        %v3375 = vpop.permute.xlu0 %3374
        %3376 = vrot.lane.b32.xlu0 %v2951, 32
        %v3377 = vpop.permute.xlu0 %3376
        %3378 = vrot.lane.b32.xlu0 %v2952, 32
        %v3379 = vpop.permute.xlu0 %3378
        %v3380 = vsel %vm646, %v3377, %v3379
        %v3381 = vsel %vm646, %v3375, %v3377
        %v3382 = vsel %vm646, %v3373, %v3375
        %v3383 = vsel %vm646, %v3371, %v3373
        %v3384 = vsel %vm646, %v3369, %v3371
        %v3385 = vsel %vm646, %v3367, %v3369
        %v3386 = vsel %vm646, %v3365, %v3367
        %v3387 = vsel %vm646, %v3379, %v3365
        %v3388 = vmul.f32 %v3387, %v660
        %v3389 = vmul.f32 %v3386, %v661
        %v3390 = vmul.f32 %v3385, %v662
        %v3391 = vmul.f32 %v3384, %v663
        %v3392 = vmul.f32 %v3383, %v664
        %v3393 = vmul.f32 %v3382, %v665
        %v3394 = vmul.f32 %v3381, %v666
        %v3395 = vmul.f32 %v3380, %v667
        %3396 = vrot.lane.b32.xlu0 %v315, 120
        %v3397 = vpop.permute.xlu0 %3396
        %v3398 = vsel %vm3192, %v3397, 0
        %3400 = vmatpush.msra.mxu0 0.0
        %3401 = vmatpush.msra.mxu0 0.0
        %3402 = vmatpush.msra.mxu0 0.0
        %3403 = vmatpush.msra.mxu0 0.0
        %3404 = vmatpush.msra.mxu0 0.0
        %3405 = vmatpush.msra.mxu0 0.0
        %3406 = vmatpush.msra.mxu0 0.0
        %3407 = vmatpush.msra.mxu0 0.0
        %3408 = vmatpush.msra.mxu0 0.0
        %3409 = vmatpush.msra.mxu0 0.0
        %3410 = vmatpush.msra.mxu0 0.0
        %3411 = vmatpush.msra.mxu0 0.0
        %3412 = vmatpush.msra.mxu0 0.0
        %3413 = vmatpush.msra.mxu0 0.0
        %3414 = vmatpush.msra.mxu0 0.0
        %3415 = vmatpush.msra.mxu0 %v3388
        %3416 = vmatmul.f32.gmra.mxu0 %v3398
        %v3417 = vpop.f32.mrf.mxu0
        %v3418 = vadd.f32 0.0, %v3417
        %3419 = vdwg.mxu0
        %3420 = vmatpush.msra.mxu0 0.0
        %3421 = vmatpush.msra.mxu0 0.0
        %3422 = vmatpush.msra.mxu0 0.0
        %3423 = vmatpush.msra.mxu0 0.0
        %3424 = vmatpush.msra.mxu0 0.0
        %3425 = vmatpush.msra.mxu0 0.0
        %3426 = vmatpush.msra.mxu0 0.0
        %3427 = vmatpush.msra.mxu0 0.0
        %3428 = vmatpush.msra.mxu0 0.0
        %3429 = vmatpush.msra.mxu0 0.0
        %3430 = vmatpush.msra.mxu0 0.0
        %3431 = vmatpush.msra.mxu0 0.0
        %3432 = vmatpush.msra.mxu0 0.0
        %3433 = vmatpush.msra.mxu0 0.0
        %3434 = vmatpush.msra.mxu0 0.0
        %3435 = vmatpush.msra.mxu0 %v3389
        %3436 = vmatmul.f32.gmra.mxu0 %v3398
        %v3437 = vpop.f32.mrf.mxu0
        %v3438 = vadd.f32 0.0, %v3437
        %3439 = vdwg.mxu0
        %3440 = vmatpush.msra.mxu0 0.0
        %3441 = vmatpush.msra.mxu0 0.0
        %3442 = vmatpush.msra.mxu0 0.0
        %3443 = vmatpush.msra.mxu0 0.0
        %3444 = vmatpush.msra.mxu0 0.0
        %3445 = vmatpush.msra.mxu0 0.0
        %3446 = vmatpush.msra.mxu0 0.0
        %3447 = vmatpush.msra.mxu0 0.0
        %3448 = vmatpush.msra.mxu0 0.0
        %3449 = vmatpush.msra.mxu0 0.0
        %3450 = vmatpush.msra.mxu0 0.0
        %3451 = vmatpush.msra.mxu0 0.0
        %3452 = vmatpush.msra.mxu0 0.0
        %3453 = vmatpush.msra.mxu0 0.0
        %3454 = vmatpush.msra.mxu0 0.0
        %3455 = vmatpush.msra.mxu0 %v3390
        %3456 = vmatmul.f32.gmra.mxu0 %v3398
        %v3457 = vpop.f32.mrf.mxu0
        %v3458 = vadd.f32 0.0, %v3457
        %3459 = vdwg.mxu0
        %3460 = vmatpush.msra.mxu0 0.0
        %3461 = vmatpush.msra.mxu0 0.0
        %3462 = vmatpush.msra.mxu0 0.0
        %3463 = vmatpush.msra.mxu0 0.0
        %3464 = vmatpush.msra.mxu0 0.0
        %3465 = vmatpush.msra.mxu0 0.0
        %3466 = vmatpush.msra.mxu0 0.0
        %3467 = vmatpush.msra.mxu0 0.0
        %3468 = vmatpush.msra.mxu0 0.0
        %3469 = vmatpush.msra.mxu0 0.0
        %3470 = vmatpush.msra.mxu0 0.0
        %3471 = vmatpush.msra.mxu0 0.0
        %3472 = vmatpush.msra.mxu0 0.0
        %3473 = vmatpush.msra.mxu0 0.0
        %3474 = vmatpush.msra.mxu0 0.0
        %3475 = vmatpush.msra.mxu0 %v3391
        %3476 = vmatmul.f32.gmra.mxu0 %v3398
        %v3477 = vpop.f32.mrf.mxu0
        %v3478 = vadd.f32 0.0, %v3477
        %3479 = vdwg.mxu0
        %3480 = vmatpush.msra.mxu0 0.0
        %3481 = vmatpush.msra.mxu0 0.0
        %3482 = vmatpush.msra.mxu0 0.0
        %3483 = vmatpush.msra.mxu0 0.0
        %3484 = vmatpush.msra.mxu0 0.0
        %3485 = vmatpush.msra.mxu0 0.0
        %3486 = vmatpush.msra.mxu0 0.0
        %3487 = vmatpush.msra.mxu0 0.0
        %3488 = vmatpush.msra.mxu0 0.0
        %3489 = vmatpush.msra.mxu0 0.0
        %3490 = vmatpush.msra.mxu0 0.0
        %3491 = vmatpush.msra.mxu0 0.0
        %3492 = vmatpush.msra.mxu0 0.0
        %3493 = vmatpush.msra.mxu0 0.0
        %3494 = vmatpush.msra.mxu0 0.0
        %3495 = vmatpush.msra.mxu0 %v3392
        %3496 = vmatmul.f32.gmra.mxu0 %v3398
        %v3497 = vpop.f32.mrf.mxu0
        %v3498 = vadd.f32 0.0, %v3497
        %3499 = vdwg.mxu0
        %3500 = vmatpush.msra.mxu0 0.0
        %3501 = vmatpush.msra.mxu0 0.0
        %3502 = vmatpush.msra.mxu0 0.0
        %3503 = vmatpush.msra.mxu0 0.0
        %3504 = vmatpush.msra.mxu0 0.0
        %3505 = vmatpush.msra.mxu0 0.0
        %3506 = vmatpush.msra.mxu0 0.0
        %3507 = vmatpush.msra.mxu0 0.0
        %3508 = vmatpush.msra.mxu0 0.0
        %3509 = vmatpush.msra.mxu0 0.0
        %3510 = vmatpush.msra.mxu0 0.0
        %3511 = vmatpush.msra.mxu0 0.0
        %3512 = vmatpush.msra.mxu0 0.0
        %3513 = vmatpush.msra.mxu0 0.0
        %3514 = vmatpush.msra.mxu0 0.0
        %3515 = vmatpush.msra.mxu0 %v3393
        %3516 = vmatmul.f32.gmra.mxu0 %v3398
        %v3517 = vpop.f32.mrf.mxu0
        %v3518 = vadd.f32 0.0, %v3517
        %3519 = vdwg.mxu0
        %3520 = vmatpush.msra.mxu0 0.0
        %3521 = vmatpush.msra.mxu0 0.0
        %3522 = vmatpush.msra.mxu0 0.0
        %3523 = vmatpush.msra.mxu0 0.0
        %3524 = vmatpush.msra.mxu0 0.0
        %3525 = vmatpush.msra.mxu0 0.0
        %3526 = vmatpush.msra.mxu0 0.0
        %3527 = vmatpush.msra.mxu0 0.0
        %3528 = vmatpush.msra.mxu0 0.0
        %3529 = vmatpush.msra.mxu0 0.0
        %3530 = vmatpush.msra.mxu0 0.0
        %3531 = vmatpush.msra.mxu0 0.0
        %3532 = vmatpush.msra.mxu0 0.0
        %3533 = vmatpush.msra.mxu0 0.0
        %3534 = vmatpush.msra.mxu0 0.0
        %3535 = vmatpush.msra.mxu0 %v3394
        %3536 = vmatmul.f32.gmra.mxu0 %v3398
        %v3537 = vpop.f32.mrf.mxu0
        %v3538 = vadd.f32 0.0, %v3537
        %3539 = vdwg.mxu0
        %3540 = vmatpush.msra.mxu0 0.0
        %3541 = vmatpush.msra.mxu0 0.0
        %3542 = vmatpush.msra.mxu0 0.0
        %3543 = vmatpush.msra.mxu0 0.0
        %3544 = vmatpush.msra.mxu0 0.0
        %3545 = vmatpush.msra.mxu0 0.0
        %3546 = vmatpush.msra.mxu0 0.0
        %3547 = vmatpush.msra.mxu0 0.0
        %3548 = vmatpush.msra.mxu0 0.0
        %3549 = vmatpush.msra.mxu0 0.0
        %3550 = vmatpush.msra.mxu0 0.0
        %3551 = vmatpush.msra.mxu0 0.0
        %3552 = vmatpush.msra.mxu0 0.0
        %3553 = vmatpush.msra.mxu0 0.0
        %3554 = vmatpush.msra.mxu0 0.0
        %3555 = vmatpush.msra.mxu0 %v3395
        %3556 = vmatmul.f32.gmra.mxu0 %v3398
        %v3557 = vpop.f32.mrf.mxu0
        %v3558 = vadd.f32 0.0, %v3557
        %3559 = vdwg.mxu0
        %v3560 = vadd.f32 %v3356, %v3418
        %v3561 = vadd.f32 %v3357, %v3438
        %v3562 = vadd.f32 %v3358, %v3458
        %v3563 = vadd.f32 %v3359, %v3478
        %v3564 = vadd.f32 %v3360, %v3498
        %v3565 = vadd.f32 %v3361, %v3518
        %v3566 = vadd.f32 %v3362, %v3538
        %v3567 = vadd.f32 %v3363, %v3558
        %3568 = vrot.lane.b32.xlu0 %v2945, 31
        %v3569 = vpop.permute.xlu0 %3568
        %3570 = vrot.lane.b32.xlu0 %v2946, 31
        %v3571 = vpop.permute.xlu0 %3570
        %3572 = vrot.lane.b32.xlu0 %v2947, 31
        %v3573 = vpop.permute.xlu0 %3572
        %3574 = vrot.lane.b32.xlu0 %v2948, 31
        %v3575 = vpop.permute.xlu0 %3574
        %3576 = vrot.lane.b32.xlu0 %v2949, 31
        %v3577 = vpop.permute.xlu0 %3576
        %3578 = vrot.lane.b32.xlu0 %v2950, 31
        %v3579 = vpop.permute.xlu0 %3578
        %3580 = vrot.lane.b32.xlu0 %v2951, 31
        %v3581 = vpop.permute.xlu0 %3580
        %3582 = vrot.lane.b32.xlu0 %v2952, 31
        %v3583 = vpop.permute.xlu0 %3582
        %v3584 = vsel %vm919, %v3581, %v3583
        %v3585 = vsel %vm919, %v3579, %v3581
        %v3586 = vsel %vm919, %v3577, %v3579
        %v3587 = vsel %vm919, %v3575, %v3577
        %v3588 = vsel %vm919, %v3573, %v3575
        %v3589 = vsel %vm919, %v3571, %v3573
        %v3590 = vsel %vm919, %v3569, %v3571
        %v3591 = vsel %vm919, %v3583, %v3569
        %v3592 = vmul.f32 %v3591, %v933
        %v3593 = vmul.f32 %v3590, %v934
        %v3594 = vmul.f32 %v3589, %v935
        %v3595 = vmul.f32 %v3588, %v936
        %v3596 = vmul.f32 %v3587, %v937
        %v3597 = vmul.f32 %v3586, %v938
        %v3598 = vmul.f32 %v3585, %v939
        %v3599 = vmul.f32 %v3584, %v940
        %3600 = vrot.lane.b32.xlu0 %v315, 112
        %v3601 = vpop.permute.xlu0 %3600
        %v3602 = vsel %vm3192, %v3601, 0
        %3604 = vmatpush.msra.mxu0 0.0
        %3605 = vmatpush.msra.mxu0 0.0
        %3606 = vmatpush.msra.mxu0 0.0
        %3607 = vmatpush.msra.mxu0 0.0
        %3608 = vmatpush.msra.mxu0 0.0
        %3609 = vmatpush.msra.mxu0 0.0
        %3610 = vmatpush.msra.mxu0 0.0
        %3611 = vmatpush.msra.mxu0 0.0
        %3612 = vmatpush.msra.mxu0 0.0
        %3613 = vmatpush.msra.mxu0 0.0
        %3614 = vmatpush.msra.mxu0 0.0
        %3615 = vmatpush.msra.mxu0 0.0
        %3616 = vmatpush.msra.mxu0 0.0
        %3617 = vmatpush.msra.mxu0 0.0
        %3618 = vmatpush.msra.mxu0 0.0
        %3619 = vmatpush.msra.mxu0 %v3592
        %3620 = vmatmul.f32.gmra.mxu0 %v3602
        %v3621 = vpop.f32.mrf.mxu0
        %v3622 = vadd.f32 0.0, %v3621
        %3623 = vdwg.mxu0
        %3624 = vmatpush.msra.mxu0 0.0
        %3625 = vmatpush.msra.mxu0 0.0
        %3626 = vmatpush.msra.mxu0 0.0
        %3627 = vmatpush.msra.mxu0 0.0
        %3628 = vmatpush.msra.mxu0 0.0
        %3629 = vmatpush.msra.mxu0 0.0
        %3630 = vmatpush.msra.mxu0 0.0
        %3631 = vmatpush.msra.mxu0 0.0
        %3632 = vmatpush.msra.mxu0 0.0
        %3633 = vmatpush.msra.mxu0 0.0
        %3634 = vmatpush.msra.mxu0 0.0
        %3635 = vmatpush.msra.mxu0 0.0
        %3636 = vmatpush.msra.mxu0 0.0
        %3637 = vmatpush.msra.mxu0 0.0
        %3638 = vmatpush.msra.mxu0 0.0
        %3639 = vmatpush.msra.mxu0 %v3593
        %3640 = vmatmul.f32.gmra.mxu0 %v3602
        %v3641 = vpop.f32.mrf.mxu0
        %v3642 = vadd.f32 0.0, %v3641
        %3643 = vdwg.mxu0
        %3644 = vmatpush.msra.mxu0 0.0
        %3645 = vmatpush.msra.mxu0 0.0
        %3646 = vmatpush.msra.mxu0 0.0
        %3647 = vmatpush.msra.mxu0 0.0
        %3648 = vmatpush.msra.mxu0 0.0
        %3649 = vmatpush.msra.mxu0 0.0
        %3650 = vmatpush.msra.mxu0 0.0
        %3651 = vmatpush.msra.mxu0 0.0
        %3652 = vmatpush.msra.mxu0 0.0
        %3653 = vmatpush.msra.mxu0 0.0
        %3654 = vmatpush.msra.mxu0 0.0
        %3655 = vmatpush.msra.mxu0 0.0
        %3656 = vmatpush.msra.mxu0 0.0
        %3657 = vmatpush.msra.mxu0 0.0
        %3658 = vmatpush.msra.mxu0 0.0
        %3659 = vmatpush.msra.mxu0 %v3594
        %3660 = vmatmul.f32.gmra.mxu0 %v3602
        %v3661 = vpop.f32.mrf.mxu0
        %v3662 = vadd.f32 0.0, %v3661
        %3663 = vdwg.mxu0
        %3664 = vmatpush.msra.mxu0 0.0
        %3665 = vmatpush.msra.mxu0 0.0
        %3666 = vmatpush.msra.mxu0 0.0
        %3667 = vmatpush.msra.mxu0 0.0
        %3668 = vmatpush.msra.mxu0 0.0
        %3669 = vmatpush.msra.mxu0 0.0
        %3670 = vmatpush.msra.mxu0 0.0
        %3671 = vmatpush.msra.mxu0 0.0
        %3672 = vmatpush.msra.mxu0 0.0
        %3673 = vmatpush.msra.mxu0 0.0
        %3674 = vmatpush.msra.mxu0 0.0
        %3675 = vmatpush.msra.mxu0 0.0
        %3676 = vmatpush.msra.mxu0 0.0
        %3677 = vmatpush.msra.mxu0 0.0
        %3678 = vmatpush.msra.mxu0 0.0
        %3679 = vmatpush.msra.mxu0 %v3595
        %3680 = vmatmul.f32.gmra.mxu0 %v3602
        %v3681 = vpop.f32.mrf.mxu0
        %v3682 = vadd.f32 0.0, %v3681
        %3683 = vdwg.mxu0
        %3684 = vmatpush.msra.mxu0 0.0
        %3685 = vmatpush.msra.mxu0 0.0
        %3686 = vmatpush.msra.mxu0 0.0
        %3687 = vmatpush.msra.mxu0 0.0
        %3688 = vmatpush.msra.mxu0 0.0
        %3689 = vmatpush.msra.mxu0 0.0
        %3690 = vmatpush.msra.mxu0 0.0
        %3691 = vmatpush.msra.mxu0 0.0
        %3692 = vmatpush.msra.mxu0 0.0
        %3693 = vmatpush.msra.mxu0 0.0
        %3694 = vmatpush.msra.mxu0 0.0
        %3695 = vmatpush.msra.mxu0 0.0
        %3696 = vmatpush.msra.mxu0 0.0
        %3697 = vmatpush.msra.mxu0 0.0
        %3698 = vmatpush.msra.mxu0 0.0
        %3699 = vmatpush.msra.mxu0 %v3596
        %3700 = vmatmul.f32.gmra.mxu0 %v3602
        %v3701 = vpop.f32.mrf.mxu0
        %v3702 = vadd.f32 0.0, %v3701
        %3703 = vdwg.mxu0
        %3704 = vmatpush.msra.mxu0 0.0
        %3705 = vmatpush.msra.mxu0 0.0
        %3706 = vmatpush.msra.mxu0 0.0
        %3707 = vmatpush.msra.mxu0 0.0
        %3708 = vmatpush.msra.mxu0 0.0
        %3709 = vmatpush.msra.mxu0 0.0
        %3710 = vmatpush.msra.mxu0 0.0
        %3711 = vmatpush.msra.mxu0 0.0
        %3712 = vmatpush.msra.mxu0 0.0
        %3713 = vmatpush.msra.mxu0 0.0
        %3714 = vmatpush.msra.mxu0 0.0
        %3715 = vmatpush.msra.mxu0 0.0
        %3716 = vmatpush.msra.mxu0 0.0
        %3717 = vmatpush.msra.mxu0 0.0
        %3718 = vmatpush.msra.mxu0 0.0
        %3719 = vmatpush.msra.mxu0 %v3597
        %3720 = vmatmul.f32.gmra.mxu0 %v3602
        %v3721 = vpop.f32.mrf.mxu0
        %v3722 = vadd.f32 0.0, %v3721
        %3723 = vdwg.mxu0
        %3724 = vmatpush.msra.mxu0 0.0
        %3725 = vmatpush.msra.mxu0 0.0
        %3726 = vmatpush.msra.mxu0 0.0
        %3727 = vmatpush.msra.mxu0 0.0
        %3728 = vmatpush.msra.mxu0 0.0
        %3729 = vmatpush.msra.mxu0 0.0
        %3730 = vmatpush.msra.mxu0 0.0
        %3731 = vmatpush.msra.mxu0 0.0
        %3732 = vmatpush.msra.mxu0 0.0
        %3733 = vmatpush.msra.mxu0 0.0
        %3734 = vmatpush.msra.mxu0 0.0
        %3735 = vmatpush.msra.mxu0 0.0
        %3736 = vmatpush.msra.mxu0 0.0
        %3737 = vmatpush.msra.mxu0 0.0
        %3738 = vmatpush.msra.mxu0 0.0
        %3739 = vmatpush.msra.mxu0 %v3598
        %3740 = vmatmul.f32.gmra.mxu0 %v3602
        %v3741 = vpop.f32.mrf.mxu0
        %v3742 = vadd.f32 0.0, %v3741
        %3743 = vdwg.mxu0
        %3744 = vmatpush.msra.mxu0 0.0
        %3745 = vmatpush.msra.mxu0 0.0
        %3746 = vmatpush.msra.mxu0 0.0
        %3747 = vmatpush.msra.mxu0 0.0
        %3748 = vmatpush.msra.mxu0 0.0
        %3749 = vmatpush.msra.mxu0 0.0
        %3750 = vmatpush.msra.mxu0 0.0
        %3751 = vmatpush.msra.mxu0 0.0
        %3752 = vmatpush.msra.mxu0 0.0
        %3753 = vmatpush.msra.mxu0 0.0
        %3754 = vmatpush.msra.mxu0 0.0
        %3755 = vmatpush.msra.mxu0 0.0
        %3756 = vmatpush.msra.mxu0 0.0
        %3757 = vmatpush.msra.mxu0 0.0
        %3758 = vmatpush.msra.mxu0 0.0
        %3759 = vmatpush.msra.mxu0 %v3599
        %3760 = vmatmul.f32.gmra.mxu0 %v3602
        %v3761 = vpop.f32.mrf.mxu0
        %v3762 = vadd.f32 0.0, %v3761
        %3763 = vdwg.mxu0
        %v3764 = vadd.f32 %v3560, %v3622
        %v3765 = vadd.f32 %v3561, %v3642
        %v3766 = vadd.f32 %v3562, %v3662
        %v3767 = vadd.f32 %v3563, %v3682
        %v3768 = vadd.f32 %v3564, %v3702
        %v3769 = vadd.f32 %v3565, %v3722
        %v3770 = vadd.f32 %v3566, %v3742
        %v3771 = vadd.f32 %v3567, %v3762
        %3772 = vrot.lane.b32.xlu0 %v2945, 1
        %v3773 = vpop.permute.xlu0 %3772
        %3774 = vrot.lane.b32.xlu0 %v2946, 1
        %v3775 = vpop.permute.xlu0 %3774
        %3776 = vrot.lane.b32.xlu0 %v2947, 1
        %v3777 = vpop.permute.xlu0 %3776
        %3778 = vrot.lane.b32.xlu0 %v2948, 1
        %v3779 = vpop.permute.xlu0 %3778
        %3780 = vrot.lane.b32.xlu0 %v2949, 1
        %v3781 = vpop.permute.xlu0 %3780
        %3782 = vrot.lane.b32.xlu0 %v2950, 1
        %v3783 = vpop.permute.xlu0 %3782
        %3784 = vrot.lane.b32.xlu0 %v2951, 1
        %v3785 = vpop.permute.xlu0 %3784
        %3786 = vrot.lane.b32.xlu0 %v2952, 1
        %v3787 = vpop.permute.xlu0 %3786
        %v3788 = vsel %vm1192, %v3785, %v3787
        %v3789 = vsel %vm1192, %v3783, %v3785
        %v3790 = vsel %vm1192, %v3781, %v3783
        %v3791 = vsel %vm1192, %v3779, %v3781
        %v3792 = vsel %vm1192, %v3777, %v3779
        %v3793 = vsel %vm1192, %v3775, %v3777
        %v3794 = vsel %vm1192, %v3773, %v3775
        %v3795 = vsel %vm1192, %v3787, %v3773
        %v3796 = vmul.f32 %v3795, %v1206
        %v3797 = vmul.f32 %v3794, %v1207
        %v3798 = vmul.f32 %v3793, %v1208
        %v3799 = vmul.f32 %v3792, %v1209
        %v3800 = vmul.f32 %v3791, %v1210
        %v3801 = vmul.f32 %v3790, %v1211
        %v3802 = vmul.f32 %v3789, %v1212
        %v3803 = vmul.f32 %v3788, %v1213
        %3804 = vrot.lane.b32.xlu0 %v315, 104
        %v3805 = vpop.permute.xlu0 %3804
        %v3806 = vsel %vm3192, %v3805, 0
        %3808 = vmatpush.msra.mxu0 0.0
        %3809 = vmatpush.msra.mxu0 0.0
        %3810 = vmatpush.msra.mxu0 0.0
        %3811 = vmatpush.msra.mxu0 0.0
        %3812 = vmatpush.msra.mxu0 0.0
        %3813 = vmatpush.msra.mxu0 0.0
        %3814 = vmatpush.msra.mxu0 0.0
        %3815 = vmatpush.msra.mxu0 0.0
        %3816 = vmatpush.msra.mxu0 0.0
        %3817 = vmatpush.msra.mxu0 0.0
        %3818 = vmatpush.msra.mxu0 0.0
        %3819 = vmatpush.msra.mxu0 0.0
        %3820 = vmatpush.msra.mxu0 0.0
        %3821 = vmatpush.msra.mxu0 0.0
        %3822 = vmatpush.msra.mxu0 0.0
        %3823 = vmatpush.msra.mxu0 %v3796
        %3824 = vmatmul.f32.gmra.mxu0 %v3806
        %v3825 = vpop.f32.mrf.mxu0
        %v3826 = vadd.f32 0.0, %v3825
        %3827 = vdwg.mxu0
        %3828 = vmatpush.msra.mxu0 0.0
        %3829 = vmatpush.msra.mxu0 0.0
        %3830 = vmatpush.msra.mxu0 0.0
        %3831 = vmatpush.msra.mxu0 0.0
        %3832 = vmatpush.msra.mxu0 0.0
        %3833 = vmatpush.msra.mxu0 0.0
        %3834 = vmatpush.msra.mxu0 0.0
        %3835 = vmatpush.msra.mxu0 0.0
        %3836 = vmatpush.msra.mxu0 0.0
        %3837 = vmatpush.msra.mxu0 0.0
        %3838 = vmatpush.msra.mxu0 0.0
        %3839 = vmatpush.msra.mxu0 0.0
        %3840 = vmatpush.msra.mxu0 0.0
        %3841 = vmatpush.msra.mxu0 0.0
        %3842 = vmatpush.msra.mxu0 0.0
        %3843 = vmatpush.msra.mxu0 %v3797
        %3844 = vmatmul.f32.gmra.mxu0 %v3806
        %v3845 = vpop.f32.mrf.mxu0
        %v3846 = vadd.f32 0.0, %v3845
        %3847 = vdwg.mxu0
        %3848 = vmatpush.msra.mxu0 0.0
        %3849 = vmatpush.msra.mxu0 0.0
        %3850 = vmatpush.msra.mxu0 0.0
        %3851 = vmatpush.msra.mxu0 0.0
        %3852 = vmatpush.msra.mxu0 0.0
        %3853 = vmatpush.msra.mxu0 0.0
        %3854 = vmatpush.msra.mxu0 0.0
        %3855 = vmatpush.msra.mxu0 0.0
        %3856 = vmatpush.msra.mxu0 0.0
        %3857 = vmatpush.msra.mxu0 0.0
        %3858 = vmatpush.msra.mxu0 0.0
        %3859 = vmatpush.msra.mxu0 0.0
        %3860 = vmatpush.msra.mxu0 0.0
        %3861 = vmatpush.msra.mxu0 0.0
        %3862 = vmatpush.msra.mxu0 0.0
        %3863 = vmatpush.msra.mxu0 %v3798
        %3864 = vmatmul.f32.gmra.mxu0 %v3806
        %v3865 = vpop.f32.mrf.mxu0
        %v3866 = vadd.f32 0.0, %v3865
        %3867 = vdwg.mxu0
        %3868 = vmatpush.msra.mxu0 0.0
        %3869 = vmatpush.msra.mxu0 0.0
        %3870 = vmatpush.msra.mxu0 0.0
        %3871 = vmatpush.msra.mxu0 0.0
        %3872 = vmatpush.msra.mxu0 0.0
        %3873 = vmatpush.msra.mxu0 0.0
        %3874 = vmatpush.msra.mxu0 0.0
        %3875 = vmatpush.msra.mxu0 0.0
        %3876 = vmatpush.msra.mxu0 0.0
        %3877 = vmatpush.msra.mxu0 0.0
        %3878 = vmatpush.msra.mxu0 0.0
        %3879 = vmatpush.msra.mxu0 0.0
        %3880 = vmatpush.msra.mxu0 0.0
        %3881 = vmatpush.msra.mxu0 0.0
        %3882 = vmatpush.msra.mxu0 0.0
        %3883 = vmatpush.msra.mxu0 %v3799
        %3884 = vmatmul.f32.gmra.mxu0 %v3806
        %v3885 = vpop.f32.mrf.mxu0
        %v3886 = vadd.f32 0.0, %v3885
        %3887 = vdwg.mxu0
        %3888 = vmatpush.msra.mxu0 0.0
        %3889 = vmatpush.msra.mxu0 0.0
        %3890 = vmatpush.msra.mxu0 0.0
        %3891 = vmatpush.msra.mxu0 0.0
        %3892 = vmatpush.msra.mxu0 0.0
        %3893 = vmatpush.msra.mxu0 0.0
        %3894 = vmatpush.msra.mxu0 0.0
        %3895 = vmatpush.msra.mxu0 0.0
        %3896 = vmatpush.msra.mxu0 0.0
        %3897 = vmatpush.msra.mxu0 0.0
        %3898 = vmatpush.msra.mxu0 0.0
        %3899 = vmatpush.msra.mxu0 0.0
        %3900 = vmatpush.msra.mxu0 0.0
        %3901 = vmatpush.msra.mxu0 0.0
        %3902 = vmatpush.msra.mxu0 0.0
        %3903 = vmatpush.msra.mxu0 %v3800
        %3904 = vmatmul.f32.gmra.mxu0 %v3806
        %v3905 = vpop.f32.mrf.mxu0
        %v3906 = vadd.f32 0.0, %v3905
        %3907 = vdwg.mxu0
        %3908 = vmatpush.msra.mxu0 0.0
        %3909 = vmatpush.msra.mxu0 0.0
        %3910 = vmatpush.msra.mxu0 0.0
        %3911 = vmatpush.msra.mxu0 0.0
        %3912 = vmatpush.msra.mxu0 0.0
        %3913 = vmatpush.msra.mxu0 0.0
        %3914 = vmatpush.msra.mxu0 0.0
        %3915 = vmatpush.msra.mxu0 0.0
        %3916 = vmatpush.msra.mxu0 0.0
        %3917 = vmatpush.msra.mxu0 0.0
        %3918 = vmatpush.msra.mxu0 0.0
        %3919 = vmatpush.msra.mxu0 0.0
        %3920 = vmatpush.msra.mxu0 0.0
        %3921 = vmatpush.msra.mxu0 0.0
        %3922 = vmatpush.msra.mxu0 0.0
        %3923 = vmatpush.msra.mxu0 %v3801
        %3924 = vmatmul.f32.gmra.mxu0 %v3806
        %v3925 = vpop.f32.mrf.mxu0
        %v3926 = vadd.f32 0.0, %v3925
        %3927 = vdwg.mxu0
        %3928 = vmatpush.msra.mxu0 0.0
        %3929 = vmatpush.msra.mxu0 0.0
        %3930 = vmatpush.msra.mxu0 0.0
        %3931 = vmatpush.msra.mxu0 0.0
        %3932 = vmatpush.msra.mxu0 0.0
        %3933 = vmatpush.msra.mxu0 0.0
        %3934 = vmatpush.msra.mxu0 0.0
        %3935 = vmatpush.msra.mxu0 0.0
        %3936 = vmatpush.msra.mxu0 0.0
        %3937 = vmatpush.msra.mxu0 0.0
        %3938 = vmatpush.msra.mxu0 0.0
        %3939 = vmatpush.msra.mxu0 0.0
        %3940 = vmatpush.msra.mxu0 0.0
        %3941 = vmatpush.msra.mxu0 0.0
        %3942 = vmatpush.msra.mxu0 0.0
        %3943 = vmatpush.msra.mxu0 %v3802
        %3944 = vmatmul.f32.gmra.mxu0 %v3806
        %v3945 = vpop.f32.mrf.mxu0
        %v3946 = vadd.f32 0.0, %v3945
        %3947 = vdwg.mxu0
        %3948 = vmatpush.msra.mxu0 0.0
        %3949 = vmatpush.msra.mxu0 0.0
        %3950 = vmatpush.msra.mxu0 0.0
        %3951 = vmatpush.msra.mxu0 0.0
        %3952 = vmatpush.msra.mxu0 0.0
        %3953 = vmatpush.msra.mxu0 0.0
        %3954 = vmatpush.msra.mxu0 0.0
        %3955 = vmatpush.msra.mxu0 0.0
        %3956 = vmatpush.msra.mxu0 0.0
        %3957 = vmatpush.msra.mxu0 0.0
        %3958 = vmatpush.msra.mxu0 0.0
        %3959 = vmatpush.msra.mxu0 0.0
        %3960 = vmatpush.msra.mxu0 0.0
        %3961 = vmatpush.msra.mxu0 0.0
        %3962 = vmatpush.msra.mxu0 0.0
        %3963 = vmatpush.msra.mxu0 %v3803
        %3964 = vmatmul.f32.gmra.mxu0 %v3806
        %v3965 = vpop.f32.mrf.mxu0
        %v3966 = vadd.f32 0.0, %v3965
        %3967 = vdwg.mxu0
        %v3968 = vadd.f32 %v3764, %v3826
        %v3969 = vadd.f32 %v3765, %v3846
        %v3970 = vadd.f32 %v3766, %v3866
        %v3971 = vadd.f32 %v3767, %v3886
        %v3972 = vadd.f32 %v3768, %v3906
        %v3973 = vadd.f32 %v3769, %v3926
        %v3974 = vadd.f32 %v3770, %v3946
        %v3975 = vadd.f32 %v3771, %v3966
        %3976 = vrot.lane.b32.xlu0 %v315, 96
        %v3977 = vpop.permute.xlu0 %3976
        %v3978 = vsel %vm3192, %v3977, 0
        %3980 = vmatpush.msra.mxu0 0.0
        %3981 = vmatpush.msra.mxu0 0.0
        %3982 = vmatpush.msra.mxu0 0.0
        %3983 = vmatpush.msra.mxu0 0.0
        %3984 = vmatpush.msra.mxu0 0.0
        %3985 = vmatpush.msra.mxu0 0.0
        %3986 = vmatpush.msra.mxu0 0.0
        %3987 = vmatpush.msra.mxu0 0.0
        %3988 = vmatpush.msra.mxu0 0.0
        %3989 = vmatpush.msra.mxu0 0.0
        %3990 = vmatpush.msra.mxu0 0.0
        %3991 = vmatpush.msra.mxu0 0.0
        %3992 = vmatpush.msra.mxu0 0.0
        %3993 = vmatpush.msra.mxu0 0.0
        %3994 = vmatpush.msra.mxu0 0.0
        %3995 = vmatpush.msra.mxu0 %v2945
        %3996 = vmatmul.f32.gmra.mxu0 %v3978
        %v3997 = vpop.f32.mrf.mxu0
        %v3998 = vadd.f32 0.0, %v3997
        %3999 = vdwg.mxu0
        %4000 = vmatpush.msra.mxu0 0.0
        %4001 = vmatpush.msra.mxu0 0.0
        %4002 = vmatpush.msra.mxu0 0.0
        %4003 = vmatpush.msra.mxu0 0.0
        %4004 = vmatpush.msra.mxu0 0.0
        %4005 = vmatpush.msra.mxu0 0.0
        %4006 = vmatpush.msra.mxu0 0.0
        %4007 = vmatpush.msra.mxu0 0.0
        %4008 = vmatpush.msra.mxu0 0.0
        %4009 = vmatpush.msra.mxu0 0.0
        %4010 = vmatpush.msra.mxu0 0.0
        %4011 = vmatpush.msra.mxu0 0.0
        %4012 = vmatpush.msra.mxu0 0.0
        %4013 = vmatpush.msra.mxu0 0.0
        %4014 = vmatpush.msra.mxu0 0.0
        %4015 = vmatpush.msra.mxu0 %v2946
        %4016 = vmatmul.f32.gmra.mxu0 %v3978
        %v4017 = vpop.f32.mrf.mxu0
        %v4018 = vadd.f32 0.0, %v4017
        %4019 = vdwg.mxu0
        %4020 = vmatpush.msra.mxu0 0.0
        %4021 = vmatpush.msra.mxu0 0.0
        %4022 = vmatpush.msra.mxu0 0.0
        %4023 = vmatpush.msra.mxu0 0.0
        %4024 = vmatpush.msra.mxu0 0.0
        %4025 = vmatpush.msra.mxu0 0.0
        %4026 = vmatpush.msra.mxu0 0.0
        %4027 = vmatpush.msra.mxu0 0.0
        %4028 = vmatpush.msra.mxu0 0.0
        %4029 = vmatpush.msra.mxu0 0.0
        %4030 = vmatpush.msra.mxu0 0.0
        %4031 = vmatpush.msra.mxu0 0.0
        %4032 = vmatpush.msra.mxu0 0.0
        %4033 = vmatpush.msra.mxu0 0.0
        %4034 = vmatpush.msra.mxu0 0.0
        %4035 = vmatpush.msra.mxu0 %v2947
        %4036 = vmatmul.f32.gmra.mxu0 %v3978
        %v4037 = vpop.f32.mrf.mxu0
        %v4038 = vadd.f32 0.0, %v4037
        %4039 = vdwg.mxu0
        %4040 = vmatpush.msra.mxu0 0.0
        %4041 = vmatpush.msra.mxu0 0.0
        %4042 = vmatpush.msra.mxu0 0.0
        %4043 = vmatpush.msra.mxu0 0.0
        %4044 = vmatpush.msra.mxu0 0.0
        %4045 = vmatpush.msra.mxu0 0.0
        %4046 = vmatpush.msra.mxu0 0.0
        %4047 = vmatpush.msra.mxu0 0.0
        %4048 = vmatpush.msra.mxu0 0.0
        %4049 = vmatpush.msra.mxu0 0.0
        %4050 = vmatpush.msra.mxu0 0.0
        %4051 = vmatpush.msra.mxu0 0.0
        %4052 = vmatpush.msra.mxu0 0.0
        %4053 = vmatpush.msra.mxu0 0.0
        %4054 = vmatpush.msra.mxu0 0.0
        %4055 = vmatpush.msra.mxu0 %v2948
        %4056 = vmatmul.f32.gmra.mxu0 %v3978
        %v4057 = vpop.f32.mrf.mxu0
        %v4058 = vadd.f32 0.0, %v4057
        %4059 = vdwg.mxu0
        %4060 = vmatpush.msra.mxu0 0.0
        %4061 = vmatpush.msra.mxu0 0.0
        %4062 = vmatpush.msra.mxu0 0.0
        %4063 = vmatpush.msra.mxu0 0.0
        %4064 = vmatpush.msra.mxu0 0.0
        %4065 = vmatpush.msra.mxu0 0.0
        %4066 = vmatpush.msra.mxu0 0.0
        %4067 = vmatpush.msra.mxu0 0.0
        %4068 = vmatpush.msra.mxu0 0.0
        %4069 = vmatpush.msra.mxu0 0.0
        %4070 = vmatpush.msra.mxu0 0.0
        %4071 = vmatpush.msra.mxu0 0.0
        %4072 = vmatpush.msra.mxu0 0.0
        %4073 = vmatpush.msra.mxu0 0.0
        %4074 = vmatpush.msra.mxu0 0.0
        %4075 = vmatpush.msra.mxu0 %v2949
        %4076 = vmatmul.f32.gmra.mxu0 %v3978
        %v4077 = vpop.f32.mrf.mxu0
        %v4078 = vadd.f32 0.0, %v4077
        %4079 = vdwg.mxu0
        %4080 = vmatpush.msra.mxu0 0.0
        %4081 = vmatpush.msra.mxu0 0.0
        %4082 = vmatpush.msra.mxu0 0.0
        %4083 = vmatpush.msra.mxu0 0.0
        %4084 = vmatpush.msra.mxu0 0.0
        %4085 = vmatpush.msra.mxu0 0.0
        %4086 = vmatpush.msra.mxu0 0.0
        %4087 = vmatpush.msra.mxu0 0.0
        %4088 = vmatpush.msra.mxu0 0.0
        %4089 = vmatpush.msra.mxu0 0.0
        %4090 = vmatpush.msra.mxu0 0.0
        %4091 = vmatpush.msra.mxu0 0.0
        %4092 = vmatpush.msra.mxu0 0.0
        %4093 = vmatpush.msra.mxu0 0.0
        %4094 = vmatpush.msra.mxu0 0.0
        %4095 = vmatpush.msra.mxu0 %v2950
        %4096 = vmatmul.f32.gmra.mxu0 %v3978
        %v4097 = vpop.f32.mrf.mxu0
        %v4098 = vadd.f32 0.0, %v4097
        %4099 = vdwg.mxu0
        %4100 = vmatpush.msra.mxu0 0.0
        %4101 = vmatpush.msra.mxu0 0.0
        %4102 = vmatpush.msra.mxu0 0.0
        %4103 = vmatpush.msra.mxu0 0.0
        %4104 = vmatpush.msra.mxu0 0.0
        %4105 = vmatpush.msra.mxu0 0.0
        %4106 = vmatpush.msra.mxu0 0.0
        %4107 = vmatpush.msra.mxu0 0.0
        %4108 = vmatpush.msra.mxu0 0.0
        %4109 = vmatpush.msra.mxu0 0.0
        %4110 = vmatpush.msra.mxu0 0.0
        %4111 = vmatpush.msra.mxu0 0.0
        %4112 = vmatpush.msra.mxu0 0.0
        %4113 = vmatpush.msra.mxu0 0.0
        %4114 = vmatpush.msra.mxu0 0.0
        %4115 = vmatpush.msra.mxu0 %v2951
        %4116 = vmatmul.f32.gmra.mxu0 %v3978
        %v4117 = vpop.f32.mrf.mxu0
        %v4118 = vadd.f32 0.0, %v4117
        %4119 = vdwg.mxu0
        %4120 = vmatpush.msra.mxu0 0.0
        %4121 = vmatpush.msra.mxu0 0.0
        %4122 = vmatpush.msra.mxu0 0.0
        %4123 = vmatpush.msra.mxu0 0.0
        %4124 = vmatpush.msra.mxu0 0.0
        %4125 = vmatpush.msra.mxu0 0.0
        %4126 = vmatpush.msra.mxu0 0.0
        %4127 = vmatpush.msra.mxu0 0.0
        %4128 = vmatpush.msra.mxu0 0.0
        %4129 = vmatpush.msra.mxu0 0.0
        %4130 = vmatpush.msra.mxu0 0.0
        %4131 = vmatpush.msra.mxu0 0.0
        %4132 = vmatpush.msra.mxu0 0.0
        %4133 = vmatpush.msra.mxu0 0.0
        %4134 = vmatpush.msra.mxu0 0.0
        %4135 = vmatpush.msra.mxu0 %v2952
        %4136 = vmatmul.f32.gmra.mxu0 %v3978
        %v4137 = vpop.f32.mrf.mxu0
        %v4138 = vadd.f32 0.0, %v4137
        %4139 = vdwg.mxu0
        %v4140 = vadd.f32 %v3968, %v3998
        %v4141 = vadd.f32 %v3969, %v4018
        %v4142 = vadd.f32 %v3970, %v4038
        %v4143 = vadd.f32 %v3971, %v4058
        %v4144 = vadd.f32 %v3972, %v4078
        %v4145 = vadd.f32 %v3973, %v4098
        %v4146 = vadd.f32 %v3974, %v4118
        %v4147 = vadd.f32 %v3975, %v4138
        %4148 = vrot.lane.b32.xlu0 %v2945, 127
        %v4149 = vpop.permute.xlu0 %4148
        %4150 = vrot.lane.b32.xlu0 %v2946, 127
        %v4151 = vpop.permute.xlu0 %4150
        %4152 = vrot.lane.b32.xlu0 %v2947, 127
        %v4153 = vpop.permute.xlu0 %4152
        %4154 = vrot.lane.b32.xlu0 %v2948, 127
        %v4155 = vpop.permute.xlu0 %4154
        %4156 = vrot.lane.b32.xlu0 %v2949, 127
        %v4157 = vpop.permute.xlu0 %4156
        %4158 = vrot.lane.b32.xlu0 %v2950, 127
        %v4159 = vpop.permute.xlu0 %4158
        %4160 = vrot.lane.b32.xlu0 %v2951, 127
        %v4161 = vpop.permute.xlu0 %4160
        %4162 = vrot.lane.b32.xlu0 %v2952, 127
        %v4163 = vpop.permute.xlu0 %4162
        %v4164 = vsel %vm1668, %v4161, %v4163
        %v4165 = vsel %vm1668, %v4159, %v4161
        %v4166 = vsel %vm1668, %v4157, %v4159
        %v4167 = vsel %vm1668, %v4155, %v4157
        %v4168 = vsel %vm1668, %v4153, %v4155
        %v4169 = vsel %vm1668, %v4151, %v4153
        %v4170 = vsel %vm1668, %v4149, %v4151
        %v4171 = vsel %vm1668, %v4163, %v4149
        %v4172 = vmul.f32 %v4170, %v1682
        %v4173 = vmul.f32 %v4169, %v1683
        %v4174 = vmul.f32 %v4168, %v1684
        %v4175 = vmul.f32 %v4167, %v1685
        %v4176 = vmul.f32 %v4166, %v1686
        %v4177 = vmul.f32 %v4165, %v1687
        %v4178 = vmul.f32 %v4164, %v1688
        %v4179 = vmul.f32 %v4171, %v1689
        %4180 = vrot.lane.b32.xlu0 %v315, 88
        %v4181 = vpop.permute.xlu0 %4180
        %v4182 = vsel %vm3192, %v4181, 0
        %4184 = vmatpush.msra.mxu0 0.0
        %4185 = vmatpush.msra.mxu0 0.0
        %4186 = vmatpush.msra.mxu0 0.0
        %4187 = vmatpush.msra.mxu0 0.0
        %4188 = vmatpush.msra.mxu0 0.0
        %4189 = vmatpush.msra.mxu0 0.0
        %4190 = vmatpush.msra.mxu0 0.0
        %4191 = vmatpush.msra.mxu0 0.0
        %4192 = vmatpush.msra.mxu0 0.0
        %4193 = vmatpush.msra.mxu0 0.0
        %4194 = vmatpush.msra.mxu0 0.0
        %4195 = vmatpush.msra.mxu0 0.0
        %4196 = vmatpush.msra.mxu0 0.0
        %4197 = vmatpush.msra.mxu0 0.0
        %4198 = vmatpush.msra.mxu0 0.0
        %4199 = vmatpush.msra.mxu0 %v4172
        %4200 = vmatmul.f32.gmra.mxu0 %v4182
        %v4201 = vpop.f32.mrf.mxu0
        %v4202 = vadd.f32 0.0, %v4201
        %4203 = vdwg.mxu0
        %4204 = vmatpush.msra.mxu0 0.0
        %4205 = vmatpush.msra.mxu0 0.0
        %4206 = vmatpush.msra.mxu0 0.0
        %4207 = vmatpush.msra.mxu0 0.0
        %4208 = vmatpush.msra.mxu0 0.0
        %4209 = vmatpush.msra.mxu0 0.0
        %4210 = vmatpush.msra.mxu0 0.0
        %4211 = vmatpush.msra.mxu0 0.0
        %4212 = vmatpush.msra.mxu0 0.0
        %4213 = vmatpush.msra.mxu0 0.0
        %4214 = vmatpush.msra.mxu0 0.0
        %4215 = vmatpush.msra.mxu0 0.0
        %4216 = vmatpush.msra.mxu0 0.0
        %4217 = vmatpush.msra.mxu0 0.0
        %4218 = vmatpush.msra.mxu0 0.0
        %4219 = vmatpush.msra.mxu0 %v4173
        %4220 = vmatmul.f32.gmra.mxu0 %v4182
        %v4221 = vpop.f32.mrf.mxu0
        %v4222 = vadd.f32 0.0, %v4221
        %4223 = vdwg.mxu0
        %4224 = vmatpush.msra.mxu0 0.0
        %4225 = vmatpush.msra.mxu0 0.0
        %4226 = vmatpush.msra.mxu0 0.0
        %4227 = vmatpush.msra.mxu0 0.0
        %4228 = vmatpush.msra.mxu0 0.0
        %4229 = vmatpush.msra.mxu0 0.0
        %4230 = vmatpush.msra.mxu0 0.0
        %4231 = vmatpush.msra.mxu0 0.0
        %4232 = vmatpush.msra.mxu0 0.0
        %4233 = vmatpush.msra.mxu0 0.0
        %4234 = vmatpush.msra.mxu0 0.0
        %4235 = vmatpush.msra.mxu0 0.0
        %4236 = vmatpush.msra.mxu0 0.0
        %4237 = vmatpush.msra.mxu0 0.0
        %4238 = vmatpush.msra.mxu0 0.0
        %4239 = vmatpush.msra.mxu0 %v4174
        %4240 = vmatmul.f32.gmra.mxu0 %v4182
        %v4241 = vpop.f32.mrf.mxu0
        %v4242 = vadd.f32 0.0, %v4241
        %4243 = vdwg.mxu0
        %4244 = vmatpush.msra.mxu0 0.0
        %4245 = vmatpush.msra.mxu0 0.0
        %4246 = vmatpush.msra.mxu0 0.0
        %4247 = vmatpush.msra.mxu0 0.0
        %4248 = vmatpush.msra.mxu0 0.0
        %4249 = vmatpush.msra.mxu0 0.0
        %4250 = vmatpush.msra.mxu0 0.0
        %4251 = vmatpush.msra.mxu0 0.0
        %4252 = vmatpush.msra.mxu0 0.0
        %4253 = vmatpush.msra.mxu0 0.0
        %4254 = vmatpush.msra.mxu0 0.0
        %4255 = vmatpush.msra.mxu0 0.0
        %4256 = vmatpush.msra.mxu0 0.0
        %4257 = vmatpush.msra.mxu0 0.0
        %4258 = vmatpush.msra.mxu0 0.0
        %4259 = vmatpush.msra.mxu0 %v4175
        %4260 = vmatmul.f32.gmra.mxu0 %v4182
        %v4261 = vpop.f32.mrf.mxu0
        %v4262 = vadd.f32 0.0, %v4261
        %4263 = vdwg.mxu0
        %4264 = vmatpush.msra.mxu0 0.0
        %4265 = vmatpush.msra.mxu0 0.0
        %4266 = vmatpush.msra.mxu0 0.0
        %4267 = vmatpush.msra.mxu0 0.0
        %4268 = vmatpush.msra.mxu0 0.0
        %4269 = vmatpush.msra.mxu0 0.0
        %4270 = vmatpush.msra.mxu0 0.0
        %4271 = vmatpush.msra.mxu0 0.0
        %4272 = vmatpush.msra.mxu0 0.0
        %4273 = vmatpush.msra.mxu0 0.0
        %4274 = vmatpush.msra.mxu0 0.0
        %4275 = vmatpush.msra.mxu0 0.0
        %4276 = vmatpush.msra.mxu0 0.0
        %4277 = vmatpush.msra.mxu0 0.0
        %4278 = vmatpush.msra.mxu0 0.0
        %4279 = vmatpush.msra.mxu0 %v4176
        %4280 = vmatmul.f32.gmra.mxu0 %v4182
        %v4281 = vpop.f32.mrf.mxu0
        %v4282 = vadd.f32 0.0, %v4281
        %4283 = vdwg.mxu0
        %4284 = vmatpush.msra.mxu0 0.0
        %4285 = vmatpush.msra.mxu0 0.0
        %4286 = vmatpush.msra.mxu0 0.0
        %4287 = vmatpush.msra.mxu0 0.0
        %4288 = vmatpush.msra.mxu0 0.0
        %4289 = vmatpush.msra.mxu0 0.0
        %4290 = vmatpush.msra.mxu0 0.0
        %4291 = vmatpush.msra.mxu0 0.0
        %4292 = vmatpush.msra.mxu0 0.0
        %4293 = vmatpush.msra.mxu0 0.0
        %4294 = vmatpush.msra.mxu0 0.0
        %4295 = vmatpush.msra.mxu0 0.0
        %4296 = vmatpush.msra.mxu0 0.0
        %4297 = vmatpush.msra.mxu0 0.0
        %4298 = vmatpush.msra.mxu0 0.0
        %4299 = vmatpush.msra.mxu0 %v4177
        %4300 = vmatmul.f32.gmra.mxu0 %v4182
        %v4301 = vpop.f32.mrf.mxu0
        %v4302 = vadd.f32 0.0, %v4301
        %4303 = vdwg.mxu0
        %4304 = vmatpush.msra.mxu0 0.0
        %4305 = vmatpush.msra.mxu0 0.0
        %4306 = vmatpush.msra.mxu0 0.0
        %4307 = vmatpush.msra.mxu0 0.0
        %4308 = vmatpush.msra.mxu0 0.0
        %4309 = vmatpush.msra.mxu0 0.0
        %4310 = vmatpush.msra.mxu0 0.0
        %4311 = vmatpush.msra.mxu0 0.0
        %4312 = vmatpush.msra.mxu0 0.0
        %4313 = vmatpush.msra.mxu0 0.0
        %4314 = vmatpush.msra.mxu0 0.0
        %4315 = vmatpush.msra.mxu0 0.0
        %4316 = vmatpush.msra.mxu0 0.0
        %4317 = vmatpush.msra.mxu0 0.0
        %4318 = vmatpush.msra.mxu0 0.0
        %4319 = vmatpush.msra.mxu0 %v4178
        %4320 = vmatmul.f32.gmra.mxu0 %v4182
        %v4321 = vpop.f32.mrf.mxu0
        %v4322 = vadd.f32 0.0, %v4321
        %4323 = vdwg.mxu0
        %4324 = vmatpush.msra.mxu0 0.0
        %4325 = vmatpush.msra.mxu0 0.0
        %4326 = vmatpush.msra.mxu0 0.0
        %4327 = vmatpush.msra.mxu0 0.0
        %4328 = vmatpush.msra.mxu0 0.0
        %4329 = vmatpush.msra.mxu0 0.0
        %4330 = vmatpush.msra.mxu0 0.0
        %4331 = vmatpush.msra.mxu0 0.0
        %4332 = vmatpush.msra.mxu0 0.0
        %4333 = vmatpush.msra.mxu0 0.0
        %4334 = vmatpush.msra.mxu0 0.0
        %4335 = vmatpush.msra.mxu0 0.0
        %4336 = vmatpush.msra.mxu0 0.0
        %4337 = vmatpush.msra.mxu0 0.0
        %4338 = vmatpush.msra.mxu0 0.0
        %4339 = vmatpush.msra.mxu0 %v4179
        %4340 = vmatmul.f32.gmra.mxu0 %v4182
        %v4341 = vpop.f32.mrf.mxu0
        %v4342 = vadd.f32 0.0, %v4341
        %4343 = vdwg.mxu0
        %v4344 = vadd.f32 %v4140, %v4202
        %v4345 = vadd.f32 %v4141, %v4222
        %v4346 = vadd.f32 %v4142, %v4242
        %v4347 = vadd.f32 %v4143, %v4262
        %v4348 = vadd.f32 %v4144, %v4282
        %v4349 = vadd.f32 %v4145, %v4302
        %v4350 = vadd.f32 %v4146, %v4322
        %v4351 = vadd.f32 %v4147, %v4342
        %4352 = vrot.lane.b32.xlu0 %v2945, 97
        %v4353 = vpop.permute.xlu0 %4352
        %4354 = vrot.lane.b32.xlu0 %v2946, 97
        %v4355 = vpop.permute.xlu0 %4354
        %4356 = vrot.lane.b32.xlu0 %v2947, 97
        %v4357 = vpop.permute.xlu0 %4356
        %4358 = vrot.lane.b32.xlu0 %v2948, 97
        %v4359 = vpop.permute.xlu0 %4358
        %4360 = vrot.lane.b32.xlu0 %v2949, 97
        %v4361 = vpop.permute.xlu0 %4360
        %4362 = vrot.lane.b32.xlu0 %v2950, 97
        %v4363 = vpop.permute.xlu0 %4362
        %4364 = vrot.lane.b32.xlu0 %v2951, 97
        %v4365 = vpop.permute.xlu0 %4364
        %4366 = vrot.lane.b32.xlu0 %v2952, 97
        %v4367 = vpop.permute.xlu0 %4366
        %v4368 = vsel %vm1941, %v4365, %v4367
        %v4369 = vsel %vm1941, %v4363, %v4365
        %v4370 = vsel %vm1941, %v4361, %v4363
        %v4371 = vsel %vm1941, %v4359, %v4361
        %v4372 = vsel %vm1941, %v4357, %v4359
        %v4373 = vsel %vm1941, %v4355, %v4357
        %v4374 = vsel %vm1941, %v4353, %v4355
        %v4375 = vsel %vm1941, %v4367, %v4353
        %v4376 = vmul.f32 %v4374, %v1955
        %v4377 = vmul.f32 %v4373, %v1956
        %v4378 = vmul.f32 %v4372, %v1957
        %v4379 = vmul.f32 %v4371, %v1958
        %v4380 = vmul.f32 %v4370, %v1959
        %v4381 = vmul.f32 %v4369, %v1960
        %v4382 = vmul.f32 %v4368, %v1961
        %v4383 = vmul.f32 %v4375, %v1962
        %4384 = vrot.lane.b32.xlu0 %v315, 80
        %v4385 = vpop.permute.xlu0 %4384
        %v4386 = vsel %vm3192, %v4385, 0
        %4388 = vmatpush.msra.mxu0 0.0
        %4389 = vmatpush.msra.mxu0 0.0
        %4390 = vmatpush.msra.mxu0 0.0
        %4391 = vmatpush.msra.mxu0 0.0
        %4392 = vmatpush.msra.mxu0 0.0
        %4393 = vmatpush.msra.mxu0 0.0
        %4394 = vmatpush.msra.mxu0 0.0
        %4395 = vmatpush.msra.mxu0 0.0
        %4396 = vmatpush.msra.mxu0 0.0
        %4397 = vmatpush.msra.mxu0 0.0
        %4398 = vmatpush.msra.mxu0 0.0
        %4399 = vmatpush.msra.mxu0 0.0
        %4400 = vmatpush.msra.mxu0 0.0
        %4401 = vmatpush.msra.mxu0 0.0
        %4402 = vmatpush.msra.mxu0 0.0
        %4403 = vmatpush.msra.mxu0 %v4376
        %4404 = vmatmul.f32.gmra.mxu0 %v4386
        %v4405 = vpop.f32.mrf.mxu0
        %v4406 = vadd.f32 0.0, %v4405
        %4407 = vdwg.mxu0
        %4408 = vmatpush.msra.mxu0 0.0
        %4409 = vmatpush.msra.mxu0 0.0
        %4410 = vmatpush.msra.mxu0 0.0
        %4411 = vmatpush.msra.mxu0 0.0
        %4412 = vmatpush.msra.mxu0 0.0
        %4413 = vmatpush.msra.mxu0 0.0
        %4414 = vmatpush.msra.mxu0 0.0
        %4415 = vmatpush.msra.mxu0 0.0
        %4416 = vmatpush.msra.mxu0 0.0
        %4417 = vmatpush.msra.mxu0 0.0
        %4418 = vmatpush.msra.mxu0 0.0
        %4419 = vmatpush.msra.mxu0 0.0
        %4420 = vmatpush.msra.mxu0 0.0
        %4421 = vmatpush.msra.mxu0 0.0
        %4422 = vmatpush.msra.mxu0 0.0
        %4423 = vmatpush.msra.mxu0 %v4377
        %4424 = vmatmul.f32.gmra.mxu0 %v4386
        %v4425 = vpop.f32.mrf.mxu0
        %v4426 = vadd.f32 0.0, %v4425
        %4427 = vdwg.mxu0
        %4428 = vmatpush.msra.mxu0 0.0
        %4429 = vmatpush.msra.mxu0 0.0
        %4430 = vmatpush.msra.mxu0 0.0
        %4431 = vmatpush.msra.mxu0 0.0
        %4432 = vmatpush.msra.mxu0 0.0
        %4433 = vmatpush.msra.mxu0 0.0
        %4434 = vmatpush.msra.mxu0 0.0
        %4435 = vmatpush.msra.mxu0 0.0
        %4436 = vmatpush.msra.mxu0 0.0
        %4437 = vmatpush.msra.mxu0 0.0
        %4438 = vmatpush.msra.mxu0 0.0
        %4439 = vmatpush.msra.mxu0 0.0
        %4440 = vmatpush.msra.mxu0 0.0
        %4441 = vmatpush.msra.mxu0 0.0
        %4442 = vmatpush.msra.mxu0 0.0
        %4443 = vmatpush.msra.mxu0 %v4378
        %4444 = vmatmul.f32.gmra.mxu0 %v4386
        %v4445 = vpop.f32.mrf.mxu0
        %v4446 = vadd.f32 0.0, %v4445
        %4447 = vdwg.mxu0
        %4448 = vmatpush.msra.mxu0 0.0
        %4449 = vmatpush.msra.mxu0 0.0
        %4450 = vmatpush.msra.mxu0 0.0
        %4451 = vmatpush.msra.mxu0 0.0
        %4452 = vmatpush.msra.mxu0 0.0
        %4453 = vmatpush.msra.mxu0 0.0
        %4454 = vmatpush.msra.mxu0 0.0
        %4455 = vmatpush.msra.mxu0 0.0
        %4456 = vmatpush.msra.mxu0 0.0
        %4457 = vmatpush.msra.mxu0 0.0
        %4458 = vmatpush.msra.mxu0 0.0
        %4459 = vmatpush.msra.mxu0 0.0
        %4460 = vmatpush.msra.mxu0 0.0
        %4461 = vmatpush.msra.mxu0 0.0
        %4462 = vmatpush.msra.mxu0 0.0
        %4463 = vmatpush.msra.mxu0 %v4379
        %4464 = vmatmul.f32.gmra.mxu0 %v4386
        %v4465 = vpop.f32.mrf.mxu0
        %v4466 = vadd.f32 0.0, %v4465
        %4467 = vdwg.mxu0
        %4468 = vmatpush.msra.mxu0 0.0
        %4469 = vmatpush.msra.mxu0 0.0
        %4470 = vmatpush.msra.mxu0 0.0
        %4471 = vmatpush.msra.mxu0 0.0
        %4472 = vmatpush.msra.mxu0 0.0
        %4473 = vmatpush.msra.mxu0 0.0
        %4474 = vmatpush.msra.mxu0 0.0
        %4475 = vmatpush.msra.mxu0 0.0
        %4476 = vmatpush.msra.mxu0 0.0
        %4477 = vmatpush.msra.mxu0 0.0
        %4478 = vmatpush.msra.mxu0 0.0
        %4479 = vmatpush.msra.mxu0 0.0
        %4480 = vmatpush.msra.mxu0 0.0
        %4481 = vmatpush.msra.mxu0 0.0
        %4482 = vmatpush.msra.mxu0 0.0
        %4483 = vmatpush.msra.mxu0 %v4380
        %4484 = vmatmul.f32.gmra.mxu0 %v4386
        %v4485 = vpop.f32.mrf.mxu0
        %v4486 = vadd.f32 0.0, %v4485
        %4487 = vdwg.mxu0
        %4488 = vmatpush.msra.mxu0 0.0
        %4489 = vmatpush.msra.mxu0 0.0
        %4490 = vmatpush.msra.mxu0 0.0
        %4491 = vmatpush.msra.mxu0 0.0
        %4492 = vmatpush.msra.mxu0 0.0
        %4493 = vmatpush.msra.mxu0 0.0
        %4494 = vmatpush.msra.mxu0 0.0
        %4495 = vmatpush.msra.mxu0 0.0
        %4496 = vmatpush.msra.mxu0 0.0
        %4497 = vmatpush.msra.mxu0 0.0
        %4498 = vmatpush.msra.mxu0 0.0
        %4499 = vmatpush.msra.mxu0 0.0
        %4500 = vmatpush.msra.mxu0 0.0
        %4501 = vmatpush.msra.mxu0 0.0
        %4502 = vmatpush.msra.mxu0 0.0
        %4503 = vmatpush.msra.mxu0 %v4381
        %4504 = vmatmul.f32.gmra.mxu0 %v4386
        %v4505 = vpop.f32.mrf.mxu0
        %v4506 = vadd.f32 0.0, %v4505
        %4507 = vdwg.mxu0
        %4508 = vmatpush.msra.mxu0 0.0
        %4509 = vmatpush.msra.mxu0 0.0
        %4510 = vmatpush.msra.mxu0 0.0
        %4511 = vmatpush.msra.mxu0 0.0
        %4512 = vmatpush.msra.mxu0 0.0
        %4513 = vmatpush.msra.mxu0 0.0
        %4514 = vmatpush.msra.mxu0 0.0
        %4515 = vmatpush.msra.mxu0 0.0
        %4516 = vmatpush.msra.mxu0 0.0
        %4517 = vmatpush.msra.mxu0 0.0
        %4518 = vmatpush.msra.mxu0 0.0
        %4519 = vmatpush.msra.mxu0 0.0
        %4520 = vmatpush.msra.mxu0 0.0
        %4521 = vmatpush.msra.mxu0 0.0
        %4522 = vmatpush.msra.mxu0 0.0
        %4523 = vmatpush.msra.mxu0 %v4382
        %4524 = vmatmul.f32.gmra.mxu0 %v4386
        %v4525 = vpop.f32.mrf.mxu0
        %v4526 = vadd.f32 0.0, %v4525
        %4527 = vdwg.mxu0
        %4528 = vmatpush.msra.mxu0 0.0
        %4529 = vmatpush.msra.mxu0 0.0
        %4530 = vmatpush.msra.mxu0 0.0
        %4531 = vmatpush.msra.mxu0 0.0
        %4532 = vmatpush.msra.mxu0 0.0
        %4533 = vmatpush.msra.mxu0 0.0
        %4534 = vmatpush.msra.mxu0 0.0
        %4535 = vmatpush.msra.mxu0 0.0
        %4536 = vmatpush.msra.mxu0 0.0
        %4537 = vmatpush.msra.mxu0 0.0
        %4538 = vmatpush.msra.mxu0 0.0
        %4539 = vmatpush.msra.mxu0 0.0
        %4540 = vmatpush.msra.mxu0 0.0
        %4541 = vmatpush.msra.mxu0 0.0
        %4542 = vmatpush.msra.mxu0 0.0
        %4543 = vmatpush.msra.mxu0 %v4383
        %4544 = vmatmul.f32.gmra.mxu0 %v4386
        %v4545 = vpop.f32.mrf.mxu0
        %v4546 = vadd.f32 0.0, %v4545
        %4547 = vdwg.mxu0
        %v4548 = vadd.f32 %v4344, %v4406
        %v4549 = vadd.f32 %v4345, %v4426
        %v4550 = vadd.f32 %v4346, %v4446
        %v4551 = vadd.f32 %v4347, %v4466
        %v4552 = vadd.f32 %v4348, %v4486
        %v4553 = vadd.f32 %v4349, %v4506
        %v4554 = vadd.f32 %v4350, %v4526
        %v4555 = vadd.f32 %v4351, %v4546
        %4556 = vrot.lane.b32.xlu0 %v2945, 96
        %v4557 = vpop.permute.xlu0 %4556
        %4558 = vrot.lane.b32.xlu0 %v2946, 96
        %v4559 = vpop.permute.xlu0 %4558
        %4560 = vrot.lane.b32.xlu0 %v2947, 96
        %v4561 = vpop.permute.xlu0 %4560
        %4562 = vrot.lane.b32.xlu0 %v2948, 96
        %v4563 = vpop.permute.xlu0 %4562
        %4564 = vrot.lane.b32.xlu0 %v2949, 96
        %v4565 = vpop.permute.xlu0 %4564
        %4566 = vrot.lane.b32.xlu0 %v2950, 96
        %v4567 = vpop.permute.xlu0 %4566
        %4568 = vrot.lane.b32.xlu0 %v2951, 96
        %v4569 = vpop.permute.xlu0 %4568
        %4570 = vrot.lane.b32.xlu0 %v2952, 96
        %v4571 = vpop.permute.xlu0 %4570
        %v4572 = vsel %vm2214, %v4569, %v4571
        %v4573 = vsel %vm2214, %v4567, %v4569
        %v4574 = vsel %vm2214, %v4565, %v4567
        %v4575 = vsel %vm2214, %v4563, %v4565
        %v4576 = vsel %vm2214, %v4561, %v4563
        %v4577 = vsel %vm2214, %v4559, %v4561
        %v4578 = vsel %vm2214, %v4557, %v4559
        %v4579 = vsel %vm2214, %v4571, %v4557
        %v4580 = vmul.f32 %v4578, %v2228
        %v4581 = vmul.f32 %v4577, %v2229
        %v4582 = vmul.f32 %v4576, %v2230
        %v4583 = vmul.f32 %v4575, %v2231
        %v4584 = vmul.f32 %v4574, %v2232
        %v4585 = vmul.f32 %v4573, %v2233
        %v4586 = vmul.f32 %v4572, %v2234
        %v4587 = vmul.f32 %v4579, %v2235
        %4588 = vrot.lane.b32.xlu0 %v315, 72
        %v4589 = vpop.permute.xlu0 %4588
        %v4590 = vsel %vm3192, %v4589, 0
        %4592 = vmatpush.msra.mxu0 0.0
        %4593 = vmatpush.msra.mxu0 0.0
        %4594 = vmatpush.msra.mxu0 0.0
        %4595 = vmatpush.msra.mxu0 0.0
        %4596 = vmatpush.msra.mxu0 0.0
        %4597 = vmatpush.msra.mxu0 0.0
        %4598 = vmatpush.msra.mxu0 0.0
        %4599 = vmatpush.msra.mxu0 0.0
        %4600 = vmatpush.msra.mxu0 0.0
        %4601 = vmatpush.msra.mxu0 0.0
        %4602 = vmatpush.msra.mxu0 0.0
        %4603 = vmatpush.msra.mxu0 0.0
        %4604 = vmatpush.msra.mxu0 0.0
        %4605 = vmatpush.msra.mxu0 0.0
        %4606 = vmatpush.msra.mxu0 0.0
        %4607 = vmatpush.msra.mxu0 %v4580
        %4608 = vmatmul.f32.gmra.mxu0 %v4590
        %v4609 = vpop.f32.mrf.mxu0
        %v4610 = vadd.f32 0.0, %v4609
        %4611 = vdwg.mxu0
        %4612 = vmatpush.msra.mxu0 0.0
        %4613 = vmatpush.msra.mxu0 0.0
        %4614 = vmatpush.msra.mxu0 0.0
        %4615 = vmatpush.msra.mxu0 0.0
        %4616 = vmatpush.msra.mxu0 0.0
        %4617 = vmatpush.msra.mxu0 0.0
        %4618 = vmatpush.msra.mxu0 0.0
        %4619 = vmatpush.msra.mxu0 0.0
        %4620 = vmatpush.msra.mxu0 0.0
        %4621 = vmatpush.msra.mxu0 0.0
        %4622 = vmatpush.msra.mxu0 0.0
        %4623 = vmatpush.msra.mxu0 0.0
        %4624 = vmatpush.msra.mxu0 0.0
        %4625 = vmatpush.msra.mxu0 0.0
        %4626 = vmatpush.msra.mxu0 0.0
        %4627 = vmatpush.msra.mxu0 %v4581
        %4628 = vmatmul.f32.gmra.mxu0 %v4590
        %v4629 = vpop.f32.mrf.mxu0
        %v4630 = vadd.f32 0.0, %v4629
        %4631 = vdwg.mxu0
        %4632 = vmatpush.msra.mxu0 0.0
        %4633 = vmatpush.msra.mxu0 0.0
        %4634 = vmatpush.msra.mxu0 0.0
        %4635 = vmatpush.msra.mxu0 0.0
        %4636 = vmatpush.msra.mxu0 0.0
        %4637 = vmatpush.msra.mxu0 0.0
        %4638 = vmatpush.msra.mxu0 0.0
        %4639 = vmatpush.msra.mxu0 0.0
        %4640 = vmatpush.msra.mxu0 0.0
        %4641 = vmatpush.msra.mxu0 0.0
        %4642 = vmatpush.msra.mxu0 0.0
        %4643 = vmatpush.msra.mxu0 0.0
        %4644 = vmatpush.msra.mxu0 0.0
        %4645 = vmatpush.msra.mxu0 0.0
        %4646 = vmatpush.msra.mxu0 0.0
        %4647 = vmatpush.msra.mxu0 %v4582
        %4648 = vmatmul.f32.gmra.mxu0 %v4590
        %v4649 = vpop.f32.mrf.mxu0
        %v4650 = vadd.f32 0.0, %v4649
        %4651 = vdwg.mxu0
        %4652 = vmatpush.msra.mxu0 0.0
        %4653 = vmatpush.msra.mxu0 0.0
        %4654 = vmatpush.msra.mxu0 0.0
        %4655 = vmatpush.msra.mxu0 0.0
        %4656 = vmatpush.msra.mxu0 0.0
        %4657 = vmatpush.msra.mxu0 0.0
        %4658 = vmatpush.msra.mxu0 0.0
        %4659 = vmatpush.msra.mxu0 0.0
        %4660 = vmatpush.msra.mxu0 0.0
        %4661 = vmatpush.msra.mxu0 0.0
        %4662 = vmatpush.msra.mxu0 0.0
        %4663 = vmatpush.msra.mxu0 0.0
        %4664 = vmatpush.msra.mxu0 0.0
        %4665 = vmatpush.msra.mxu0 0.0
        %4666 = vmatpush.msra.mxu0 0.0
        %4667 = vmatpush.msra.mxu0 %v4583
        %4668 = vmatmul.f32.gmra.mxu0 %v4590
        %v4669 = vpop.f32.mrf.mxu0
        %v4670 = vadd.f32 0.0, %v4669
        %4671 = vdwg.mxu0
        %4672 = vmatpush.msra.mxu0 0.0
        %4673 = vmatpush.msra.mxu0 0.0
        %4674 = vmatpush.msra.mxu0 0.0
        %4675 = vmatpush.msra.mxu0 0.0
        %4676 = vmatpush.msra.mxu0 0.0
        %4677 = vmatpush.msra.mxu0 0.0
        %4678 = vmatpush.msra.mxu0 0.0
        %4679 = vmatpush.msra.mxu0 0.0
        %4680 = vmatpush.msra.mxu0 0.0
        %4681 = vmatpush.msra.mxu0 0.0
        %4682 = vmatpush.msra.mxu0 0.0
        %4683 = vmatpush.msra.mxu0 0.0
        %4684 = vmatpush.msra.mxu0 0.0
        %4685 = vmatpush.msra.mxu0 0.0
        %4686 = vmatpush.msra.mxu0 0.0
        %4687 = vmatpush.msra.mxu0 %v4584
        %4688 = vmatmul.f32.gmra.mxu0 %v4590
        %v4689 = vpop.f32.mrf.mxu0
        %v4690 = vadd.f32 0.0, %v4689
        %4691 = vdwg.mxu0
        %4692 = vmatpush.msra.mxu0 0.0
        %4693 = vmatpush.msra.mxu0 0.0
        %4694 = vmatpush.msra.mxu0 0.0
        %4695 = vmatpush.msra.mxu0 0.0
        %4696 = vmatpush.msra.mxu0 0.0
        %4697 = vmatpush.msra.mxu0 0.0
        %4698 = vmatpush.msra.mxu0 0.0
        %4699 = vmatpush.msra.mxu0 0.0
        %4700 = vmatpush.msra.mxu0 0.0
        %4701 = vmatpush.msra.mxu0 0.0
        %4702 = vmatpush.msra.mxu0 0.0
        %4703 = vmatpush.msra.mxu0 0.0
        %4704 = vmatpush.msra.mxu0 0.0
        %4705 = vmatpush.msra.mxu0 0.0
        %4706 = vmatpush.msra.mxu0 0.0
        %4707 = vmatpush.msra.mxu0 %v4585
        %4708 = vmatmul.f32.gmra.mxu0 %v4590
        %v4709 = vpop.f32.mrf.mxu0
        %v4710 = vadd.f32 0.0, %v4709
        %4711 = vdwg.mxu0
        %4712 = vmatpush.msra.mxu0 0.0
        %4713 = vmatpush.msra.mxu0 0.0
        %4714 = vmatpush.msra.mxu0 0.0
        %4715 = vmatpush.msra.mxu0 0.0
        %4716 = vmatpush.msra.mxu0 0.0
        %4717 = vmatpush.msra.mxu0 0.0
        %4718 = vmatpush.msra.mxu0 0.0
        %4719 = vmatpush.msra.mxu0 0.0
        %4720 = vmatpush.msra.mxu0 0.0
        %4721 = vmatpush.msra.mxu0 0.0
        %4722 = vmatpush.msra.mxu0 0.0
        %4723 = vmatpush.msra.mxu0 0.0
        %4724 = vmatpush.msra.mxu0 0.0
        %4725 = vmatpush.msra.mxu0 0.0
        %4726 = vmatpush.msra.mxu0 0.0
        %4727 = vmatpush.msra.mxu0 %v4586
        %4728 = vmatmul.f32.gmra.mxu0 %v4590
        %v4729 = vpop.f32.mrf.mxu0
        %v4730 = vadd.f32 0.0, %v4729
        %4731 = vdwg.mxu0
        %4732 = vmatpush.msra.mxu0 0.0
        %4733 = vmatpush.msra.mxu0 0.0
        %4734 = vmatpush.msra.mxu0 0.0
        %4735 = vmatpush.msra.mxu0 0.0
        %4736 = vmatpush.msra.mxu0 0.0
        %4737 = vmatpush.msra.mxu0 0.0
        %4738 = vmatpush.msra.mxu0 0.0
        %4739 = vmatpush.msra.mxu0 0.0
        %4740 = vmatpush.msra.mxu0 0.0
        %4741 = vmatpush.msra.mxu0 0.0
        %4742 = vmatpush.msra.mxu0 0.0
        %4743 = vmatpush.msra.mxu0 0.0
        %4744 = vmatpush.msra.mxu0 0.0
        %4745 = vmatpush.msra.mxu0 0.0
        %4746 = vmatpush.msra.mxu0 0.0
        %4747 = vmatpush.msra.mxu0 %v4587
        %4748 = vmatmul.f32.gmra.mxu0 %v4590
        %v4749 = vpop.f32.mrf.mxu0
        %v4750 = vadd.f32 0.0, %v4749
        %4751 = vdwg.mxu0
        %v4752 = vadd.f32 %v4548, %v4610
        %v4753 = vadd.f32 %v4549, %v4630
        %v4754 = vadd.f32 %v4550, %v4650
        %v4755 = vadd.f32 %v4551, %v4670
        %v4756 = vadd.f32 %v4552, %v4690
        %v4757 = vadd.f32 %v4553, %v4710
        %v4758 = vadd.f32 %v4554, %v4730
        %v4759 = vadd.f32 %v4555, %v4750
        %4760 = vrot.lane.b32.xlu0 %v2945, 95
        %v4761 = vpop.permute.xlu0 %4760
        %4762 = vrot.lane.b32.xlu0 %v2946, 95
        %v4763 = vpop.permute.xlu0 %4762
        %4764 = vrot.lane.b32.xlu0 %v2947, 95
        %v4765 = vpop.permute.xlu0 %4764
        %4766 = vrot.lane.b32.xlu0 %v2948, 95
        %v4767 = vpop.permute.xlu0 %4766
        %4768 = vrot.lane.b32.xlu0 %v2949, 95
        %v4769 = vpop.permute.xlu0 %4768
        %4770 = vrot.lane.b32.xlu0 %v2950, 95
        %v4771 = vpop.permute.xlu0 %4770
        %4772 = vrot.lane.b32.xlu0 %v2951, 95
        %v4773 = vpop.permute.xlu0 %4772
        %4774 = vrot.lane.b32.xlu0 %v2952, 95
        %v4775 = vpop.permute.xlu0 %4774
        %v4776 = vsel %vm2487, %v4773, %v4775
        %v4777 = vsel %vm2487, %v4771, %v4773
        %v4778 = vsel %vm2487, %v4769, %v4771
        %v4779 = vsel %vm2487, %v4767, %v4769
        %v4780 = vsel %vm2487, %v4765, %v4767
        %v4781 = vsel %vm2487, %v4763, %v4765
        %v4782 = vsel %vm2487, %v4761, %v4763
        %v4783 = vsel %vm2487, %v4775, %v4761
        %v4784 = vmul.f32 %v4782, %v2501
        %v4785 = vmul.f32 %v4781, %v2502
        %v4786 = vmul.f32 %v4780, %v2503
        %v4787 = vmul.f32 %v4779, %v2504
        %v4788 = vmul.f32 %v4778, %v2505
        %v4789 = vmul.f32 %v4777, %v2506
        %v4790 = vmul.f32 %v4776, %v2507
        %v4791 = vmul.f32 %v4783, %v2508
        %4792 = vrot.lane.b32.xlu0 %v315, 64
        %v4793 = vpop.permute.xlu0 %4792
        %v4794 = vsel %vm3192, %v4793, 0
        %4796 = vmatpush.msra.mxu0 0.0
        %4797 = vmatpush.msra.mxu0 0.0
        %4798 = vmatpush.msra.mxu0 0.0
        %4799 = vmatpush.msra.mxu0 0.0
        %4800 = vmatpush.msra.mxu0 0.0
        %4801 = vmatpush.msra.mxu0 0.0
        %4802 = vmatpush.msra.mxu0 0.0
        %4803 = vmatpush.msra.mxu0 0.0
        %4804 = vmatpush.msra.mxu0 0.0
        %4805 = vmatpush.msra.mxu0 0.0
        %4806 = vmatpush.msra.mxu0 0.0
        %4807 = vmatpush.msra.mxu0 0.0
        %4808 = vmatpush.msra.mxu0 0.0
        %4809 = vmatpush.msra.mxu0 0.0
        %4810 = vmatpush.msra.mxu0 0.0
        %4811 = vmatpush.msra.mxu0 %v4784
        %4812 = vmatmul.f32.gmra.mxu0 %v4794
        %v4813 = vpop.f32.mrf.mxu0
        %v4814 = vadd.f32 0.0, %v4813
        %4815 = vdwg.mxu0
        %4816 = vmatpush.msra.mxu0 0.0
        %4817 = vmatpush.msra.mxu0 0.0
        %4818 = vmatpush.msra.mxu0 0.0
        %4819 = vmatpush.msra.mxu0 0.0
        %4820 = vmatpush.msra.mxu0 0.0
        %4821 = vmatpush.msra.mxu0 0.0
        %4822 = vmatpush.msra.mxu0 0.0
        %4823 = vmatpush.msra.mxu0 0.0
        %4824 = vmatpush.msra.mxu0 0.0
        %4825 = vmatpush.msra.mxu0 0.0
        %4826 = vmatpush.msra.mxu0 0.0
        %4827 = vmatpush.msra.mxu0 0.0
        %4828 = vmatpush.msra.mxu0 0.0
        %4829 = vmatpush.msra.mxu0 0.0
        %4830 = vmatpush.msra.mxu0 0.0
        %4831 = vmatpush.msra.mxu0 %v4785
        %4832 = vmatmul.f32.gmra.mxu0 %v4794
        %v4833 = vpop.f32.mrf.mxu0
        %v4834 = vadd.f32 0.0, %v4833
        %4835 = vdwg.mxu0
        %4836 = vmatpush.msra.mxu0 0.0
        %4837 = vmatpush.msra.mxu0 0.0
        %4838 = vmatpush.msra.mxu0 0.0
        %4839 = vmatpush.msra.mxu0 0.0
        %4840 = vmatpush.msra.mxu0 0.0
        %4841 = vmatpush.msra.mxu0 0.0
        %4842 = vmatpush.msra.mxu0 0.0
        %4843 = vmatpush.msra.mxu0 0.0
        %4844 = vmatpush.msra.mxu0 0.0
        %4845 = vmatpush.msra.mxu0 0.0
        %4846 = vmatpush.msra.mxu0 0.0
        %4847 = vmatpush.msra.mxu0 0.0
        %4848 = vmatpush.msra.mxu0 0.0
        %4849 = vmatpush.msra.mxu0 0.0
        %4850 = vmatpush.msra.mxu0 0.0
        %4851 = vmatpush.msra.mxu0 %v4786
        %4852 = vmatmul.f32.gmra.mxu0 %v4794
        %v4853 = vpop.f32.mrf.mxu0
        %v4854 = vadd.f32 0.0, %v4853
        %4855 = vdwg.mxu0
        %4856 = vmatpush.msra.mxu0 0.0
        %4857 = vmatpush.msra.mxu0 0.0
        %4858 = vmatpush.msra.mxu0 0.0
        %4859 = vmatpush.msra.mxu0 0.0
        %4860 = vmatpush.msra.mxu0 0.0
        %4861 = vmatpush.msra.mxu0 0.0
        %4862 = vmatpush.msra.mxu0 0.0
        %4863 = vmatpush.msra.mxu0 0.0
        %4864 = vmatpush.msra.mxu0 0.0
        %4865 = vmatpush.msra.mxu0 0.0
        %4866 = vmatpush.msra.mxu0 0.0
        %4867 = vmatpush.msra.mxu0 0.0
        %4868 = vmatpush.msra.mxu0 0.0
        %4869 = vmatpush.msra.mxu0 0.0
        %4870 = vmatpush.msra.mxu0 0.0
        %4871 = vmatpush.msra.mxu0 %v4787
        %4872 = vmatmul.f32.gmra.mxu0 %v4794
        %v4873 = vpop.f32.mrf.mxu0
        %v4874 = vadd.f32 0.0, %v4873
        %4875 = vdwg.mxu0
        %4876 = vmatpush.msra.mxu0 0.0
        %4877 = vmatpush.msra.mxu0 0.0
        %4878 = vmatpush.msra.mxu0 0.0
        %4879 = vmatpush.msra.mxu0 0.0
        %4880 = vmatpush.msra.mxu0 0.0
        %4881 = vmatpush.msra.mxu0 0.0
        %4882 = vmatpush.msra.mxu0 0.0
        %4883 = vmatpush.msra.mxu0 0.0
        %4884 = vmatpush.msra.mxu0 0.0
        %4885 = vmatpush.msra.mxu0 0.0
        %4886 = vmatpush.msra.mxu0 0.0
        %4887 = vmatpush.msra.mxu0 0.0
        %4888 = vmatpush.msra.mxu0 0.0
        %4889 = vmatpush.msra.mxu0 0.0
        %4890 = vmatpush.msra.mxu0 0.0
        %4891 = vmatpush.msra.mxu0 %v4788
        %4892 = vmatmul.f32.gmra.mxu0 %v4794
        %v4893 = vpop.f32.mrf.mxu0
        %v4894 = vadd.f32 0.0, %v4893
        %4895 = vdwg.mxu0
        %4896 = vmatpush.msra.mxu0 0.0
        %4897 = vmatpush.msra.mxu0 0.0
        %4898 = vmatpush.msra.mxu0 0.0
        %4899 = vmatpush.msra.mxu0 0.0
        %4900 = vmatpush.msra.mxu0 0.0
        %4901 = vmatpush.msra.mxu0 0.0
        %4902 = vmatpush.msra.mxu0 0.0
        %4903 = vmatpush.msra.mxu0 0.0
        %4904 = vmatpush.msra.mxu0 0.0
        %4905 = vmatpush.msra.mxu0 0.0
        %4906 = vmatpush.msra.mxu0 0.0
        %4907 = vmatpush.msra.mxu0 0.0
        %4908 = vmatpush.msra.mxu0 0.0
        %4909 = vmatpush.msra.mxu0 0.0
        %4910 = vmatpush.msra.mxu0 0.0
        %4911 = vmatpush.msra.mxu0 %v4789
        %4912 = vmatmul.f32.gmra.mxu0 %v4794
        %v4913 = vpop.f32.mrf.mxu0
        %v4914 = vadd.f32 0.0, %v4913
        %4915 = vdwg.mxu0
        %4916 = vmatpush.msra.mxu0 0.0
        %4917 = vmatpush.msra.mxu0 0.0
        %4918 = vmatpush.msra.mxu0 0.0
        %4919 = vmatpush.msra.mxu0 0.0
        %4920 = vmatpush.msra.mxu0 0.0
        %4921 = vmatpush.msra.mxu0 0.0
        %4922 = vmatpush.msra.mxu0 0.0
        %4923 = vmatpush.msra.mxu0 0.0
        %4924 = vmatpush.msra.mxu0 0.0
        %4925 = vmatpush.msra.mxu0 0.0
        %4926 = vmatpush.msra.mxu0 0.0
        %4927 = vmatpush.msra.mxu0 0.0
        %4928 = vmatpush.msra.mxu0 0.0
        %4929 = vmatpush.msra.mxu0 0.0
        %4930 = vmatpush.msra.mxu0 0.0
        %4931 = vmatpush.msra.mxu0 %v4790
        %4932 = vmatmul.f32.gmra.mxu0 %v4794
        %v4933 = vpop.f32.mrf.mxu0
        %v4934 = vadd.f32 0.0, %v4933
        %4935 = vdwg.mxu0
        %4936 = vmatpush.msra.mxu0 0.0
        %4937 = vmatpush.msra.mxu0 0.0
        %4938 = vmatpush.msra.mxu0 0.0
        %4939 = vmatpush.msra.mxu0 0.0
        %4940 = vmatpush.msra.mxu0 0.0
        %4941 = vmatpush.msra.mxu0 0.0
        %4942 = vmatpush.msra.mxu0 0.0
        %4943 = vmatpush.msra.mxu0 0.0
        %4944 = vmatpush.msra.mxu0 0.0
        %4945 = vmatpush.msra.mxu0 0.0
        %4946 = vmatpush.msra.mxu0 0.0
        %4947 = vmatpush.msra.mxu0 0.0
        %4948 = vmatpush.msra.mxu0 0.0
        %4949 = vmatpush.msra.mxu0 0.0
        %4950 = vmatpush.msra.mxu0 0.0
        %4951 = vmatpush.msra.mxu0 %v4791
        %4952 = vmatmul.f32.gmra.mxu0 %v4794
        %v4953 = vpop.f32.mrf.mxu0
        %v4954 = vadd.f32 0.0, %v4953
        %4955 = vdwg.mxu0
        %v4956 = vadd.f32 %v4752, %v4814
        %v4957 = vadd.f32 %v4753, %v4834
        %v4958 = vadd.f32 %v4754, %v4854
        %v4959 = vadd.f32 %v4755, %v4874
        %v4960 = vadd.f32 %v4756, %v4894
        %v4961 = vadd.f32 %v4757, %v4914
        %v4962 = vadd.f32 %v4758, %v4934
        %v4963 = vadd.f32 %v4759, %v4954
        %v4964 = vmul.f32 %v4956, 0.5
        %v4965 = vmul.f32 %v4957, 0.5
        %v4966 = vmul.f32 %v4958, 0.5
        %v4967 = vmul.f32 %v4959, 0.5
        %v4968 = vmul.f32 %v4960, 0.5
        %v4969 = vmul.f32 %v4961, 0.5
        %v4970 = vmul.f32 %v4962, 0.5
        %v4971 = vmul.f32 %v4963, 0.5
        %v4972 = vmul.f32 %v4956, 0.70710677
        %v4973 = vmul.f32 %v4957, 0.70710677
        %v4974 = vmul.f32 %v4958, 0.70710677
        %v4975 = vmul.f32 %v4959, 0.70710677
        %v4976 = vmul.f32 %v4960, 0.70710677
        %v4977 = vmul.f32 %v4961, 0.70710677
        %v4978 = vmul.f32 %v4962, 0.70710677
        %v4979 = vmul.f32 %v4963, 0.70710677
        %v4980 = vand.u32 2147483647, %v4972
        %v4981 = vand.u32 2147483647, %v4973
        %v4982 = vand.u32 2147483647, %v4974
        %v4983 = vand.u32 2147483647, %v4975
        %v4984 = vand.u32 2147483647, %v4976
        %v4985 = vand.u32 2147483647, %v4977
        %v4986 = vand.u32 2147483647, %v4978
        %v4987 = vand.u32 2147483647, %v4979
        %v4988 = vmul.f32 %v4980, 0.3275911
        %v4989 = vmul.f32 %v4981, 0.3275911
        %v4990 = vmul.f32 %v4982, 0.3275911
        %v4991 = vmul.f32 %v4983, 0.3275911
        %v4992 = vmul.f32 %v4984, 0.3275911
        %v4993 = vmul.f32 %v4985, 0.3275911
        %v4994 = vmul.f32 %v4986, 0.3275911
        %v4995 = vmul.f32 %v4987, 0.3275911
        %v4996 = vadd.f32 %v4988, 1.0
        %v4997 = vadd.f32 %v4989, 1.0
        %v4998 = vadd.f32 %v4990, 1.0
        %v4999 = vadd.f32 %v4991, 1.0
        %v5000 = vadd.f32 %v4992, 1.0
        %v5001 = vadd.f32 %v4993, 1.0
        %v5002 = vadd.f32 %v4994, 1.0
        %v5003 = vadd.f32 %v4995, 1.0
        %v5004 = vrcp.pop %v4996
        %v5005 = vrcp.pop %v4997
        %v5006 = vrcp.pop %v4998
        %v5007 = vrcp.pop %v4999
        %v5008 = vrcp.pop %v5000
        %v5009 = vrcp.pop %v5001
        %v5010 = vrcp.pop %v5002
        %v5011 = vrcp.pop %v5003
        %v5012 = vmul.f32 %v4996, %v5004
        %v5013 = vmul.f32 %v4997, %v5005
        %v5014 = vmul.f32 %v4998, %v5006
        %v5015 = vmul.f32 %v4999, %v5007
        %v5016 = vmul.f32 %v5000, %v5008
        %v5017 = vmul.f32 %v5001, %v5009
        %v5018 = vmul.f32 %v5002, %v5010
        %v5019 = vmul.f32 %v5003, %v5011
        %v5020 = vsub.f32 2.0, %v5012
        %v5021 = vsub.f32 2.0, %v5013
        %v5022 = vsub.f32 2.0, %v5014
        %v5023 = vsub.f32 2.0, %v5015
        %v5024 = vsub.f32 2.0, %v5016
        %v5025 = vsub.f32 2.0, %v5017
        %v5026 = vsub.f32 2.0, %v5018
        %v5027 = vsub.f32 2.0, %v5019
        %v5028 = vmul.f32 %v5004, %v5020
        %v5029 = vmul.f32 %v5005, %v5021
        %v5030 = vmul.f32 %v5006, %v5022
        %v5031 = vmul.f32 %v5007, %v5023
        %v5032 = vmul.f32 %v5008, %v5024
        %v5033 = vmul.f32 %v5009, %v5025
        %v5034 = vmul.f32 %v5010, %v5026
        %v5035 = vmul.f32 %v5011, %v5027
        %v5036 = vmul.f32 %v5028, 1.0614054
        %v5037 = vmul.f32 %v5029, 1.0614054
        %v5038 = vmul.f32 %v5030, 1.0614054
        %v5039 = vmul.f32 %v5031, 1.0614054
        %v5040 = vmul.f32 %v5032, 1.0614054
        %v5041 = vmul.f32 %v5033, 1.0614054
        %v5042 = vmul.f32 %v5034, 1.0614054
        %v5043 = vmul.f32 %v5035, 1.0614054
        %v5044 = vadd.f32 %v5036, -1.4531521
        %v5045 = vadd.f32 %v5037, -1.4531521
        %v5046 = vadd.f32 %v5038, -1.4531521
        %v5047 = vadd.f32 %v5039, -1.4531521
        %v5048 = vadd.f32 %v5040, -1.4531521
        %v5049 = vadd.f32 %v5041, -1.4531521
        %v5050 = vadd.f32 %v5042, -1.4531521
        %v5051 = vadd.f32 %v5043, -1.4531521
        %v5052 = vmul.f32 %v5044, %v5028
        %v5053 = vmul.f32 %v5045, %v5029
        %v5054 = vmul.f32 %v5046, %v5030
        %v5055 = vmul.f32 %v5047, %v5031
        %v5056 = vmul.f32 %v5048, %v5032
        %v5057 = vmul.f32 %v5049, %v5033
        %v5058 = vmul.f32 %v5050, %v5034
        %v5059 = vmul.f32 %v5051, %v5035
        %v5060 = vadd.f32 %v5052, 1.4214138
        %v5061 = vadd.f32 %v5053, 1.4214138
        %v5062 = vadd.f32 %v5054, 1.4214138
        %v5063 = vadd.f32 %v5055, 1.4214138
        %v5064 = vadd.f32 %v5056, 1.4214138
        %v5065 = vadd.f32 %v5057, 1.4214138
        %v5066 = vadd.f32 %v5058, 1.4214138
        %v5067 = vadd.f32 %v5059, 1.4214138
        %v5068 = vmul.f32 %v5060, %v5028
        %v5069 = vmul.f32 %v5061, %v5029
        %v5070 = vmul.f32 %v5062, %v5030
        %v5071 = vmul.f32 %v5063, %v5031
        %v5072 = vmul.f32 %v5064, %v5032
        %v5073 = vmul.f32 %v5065, %v5033
        %v5074 = vmul.f32 %v5066, %v5034
        %v5075 = vmul.f32 %v5067, %v5035
        %v5076 = vadd.f32 %v5068, -0.28449672
        %v5077 = vadd.f32 %v5069, -0.28449672
        %v5078 = vadd.f32 %v5070, -0.28449672
        %v5079 = vadd.f32 %v5071, -0.28449672
        %v5080 = vadd.f32 %v5072, -0.28449672
        %v5081 = vadd.f32 %v5073, -0.28449672
        %v5082 = vadd.f32 %v5074, -0.28449672
        %v5083 = vadd.f32 %v5075, -0.28449672
        %v5084 = vmul.f32 %v5076, %v5028
        %v5085 = vmul.f32 %v5077, %v5029
        %v5086 = vmul.f32 %v5078, %v5030
        %v5087 = vmul.f32 %v5079, %v5031
        %v5088 = vmul.f32 %v5080, %v5032
        %v5089 = vmul.f32 %v5081, %v5033
        %v5090 = vmul.f32 %v5082, %v5034
        %v5091 = vmul.f32 %v5083, %v5035
        %v5092 = vadd.f32 %v5084, 0.2548296
        %v5093 = vadd.f32 %v5085, 0.2548296
        %v5094 = vadd.f32 %v5086, 0.2548296
        %v5095 = vadd.f32 %v5087, 0.2548296
        %v5096 = vadd.f32 %v5088, 0.2548296
        %v5097 = vadd.f32 %v5089, 0.2548296
        %v5098 = vadd.f32 %v5090, 0.2548296
        %v5099 = vadd.f32 %v5091, 0.2548296
        %v5100 = vmul.f32 %v5092, %v5028
        %v5101 = vmul.f32 %v5093, %v5029
        %v5102 = vmul.f32 %v5094, %v5030
        %v5103 = vmul.f32 %v5095, %v5031
        %v5104 = vmul.f32 %v5096, %v5032
        %v5105 = vmul.f32 %v5097, %v5033
        %v5106 = vmul.f32 %v5098, %v5034
        %v5107 = vmul.f32 %v5099, %v5035
        %v5108 = vsub.f32 0.0, %v4980
        %v5109 = vsub.f32 0.0, %v4981
        %v5110 = vsub.f32 0.0, %v4982
        %v5111 = vsub.f32 0.0, %v4983
        %v5112 = vsub.f32 0.0, %v4984
        %v5113 = vsub.f32 0.0, %v4985
        %v5114 = vsub.f32 0.0, %v4986
        %v5115 = vsub.f32 0.0, %v4987
        %v5116 = vmul.f32 %v5108, %v4980
        %v5117 = vmul.f32 %v5109, %v4981
        %v5118 = vmul.f32 %v5110, %v4982
        %v5119 = vmul.f32 %v5111, %v4983
        %v5120 = vmul.f32 %v5112, %v4984
        %v5121 = vmul.f32 %v5113, %v4985
        %v5122 = vmul.f32 %v5114, %v4986
        %v5123 = vmul.f32 %v5115, %v4987
        %v5124 = vmul.f32 %v5116, 1.442695
        %v5125 = vpow.pop %v5124
        %v5126 = vmul.f32 %v5117, 1.442695
        %v5127 = vpow.pop %v5126
        %v5128 = vmul.f32 %v5118, 1.442695
        %v5129 = vpow.pop %v5128
        %v5130 = vmul.f32 %v5119, 1.442695
        %v5131 = vpow.pop %v5130
        %v5132 = vmul.f32 %v5120, 1.442695
        %v5133 = vpow.pop %v5132
        %v5134 = vmul.f32 %v5121, 1.442695
        %v5135 = vpow.pop %v5134
        %v5136 = vmul.f32 %v5122, 1.442695
        %v5137 = vpow.pop %v5136
        %v5138 = vmul.f32 %v5123, 1.442695
        %v5139 = vpow.pop %v5138
        %v5140 = vmul.f32 %v5100, %v5125
        %v5141 = vmul.f32 %v5101, %v5127
        %v5142 = vmul.f32 %v5102, %v5129
        %v5143 = vmul.f32 %v5103, %v5131
        %v5144 = vmul.f32 %v5104, %v5133
        %v5145 = vmul.f32 %v5105, %v5135
        %v5146 = vmul.f32 %v5106, %v5137
        %v5147 = vmul.f32 %v5107, %v5139
        %v5148 = vsub.f32 1.0, %v5140
        %v5149 = vsub.f32 1.0, %v5141
        %v5150 = vsub.f32 1.0, %v5142
        %v5151 = vsub.f32 1.0, %v5143
        %v5152 = vsub.f32 1.0, %v5144
        %v5153 = vsub.f32 1.0, %v5145
        %v5154 = vsub.f32 1.0, %v5146
        %v5155 = vsub.f32 1.0, %v5147
        %vm5156 = vcmp.lt.f32.partialorder %v4972, 0.0
        %vm5157 = vcmp.lt.f32.partialorder %v4973, 0.0
        %vm5158 = vcmp.lt.f32.partialorder %v4974, 0.0
        %vm5159 = vcmp.lt.f32.partialorder %v4975, 0.0
        %vm5160 = vcmp.lt.f32.partialorder %v4976, 0.0
        %vm5161 = vcmp.lt.f32.partialorder %v4977, 0.0
        %vm5162 = vcmp.lt.f32.partialorder %v4978, 0.0
        %vm5163 = vcmp.lt.f32.partialorder %v4979, 0.0
        %v5164 = vsub.f32 0.0, %v5148
        %v5165 = vsub.f32 0.0, %v5149
        %v5166 = vsub.f32 0.0, %v5150
        %v5167 = vsub.f32 0.0, %v5151
        %v5168 = vsub.f32 0.0, %v5152
        %v5169 = vsub.f32 0.0, %v5153
        %v5170 = vsub.f32 0.0, %v5154
        %v5171 = vsub.f32 0.0, %v5155
        %v5172 = vsel %vm5156, %v5164, %v5148
        %v5173 = vsel %vm5157, %v5165, %v5149
        %v5174 = vsel %vm5158, %v5166, %v5150
        %v5175 = vsel %vm5159, %v5167, %v5151
        %v5176 = vsel %vm5160, %v5168, %v5152
        %v5177 = vsel %vm5161, %v5169, %v5153
        %v5178 = vsel %vm5162, %v5170, %v5154
        %v5179 = vsel %vm5163, %v5171, %v5155
        %v5180 = vadd.f32 %v5172, 1.0
        %v5181 = vadd.f32 %v5173, 1.0
        %v5182 = vadd.f32 %v5174, 1.0
        %v5183 = vadd.f32 %v5175, 1.0
        %v5184 = vadd.f32 %v5176, 1.0
        %v5185 = vadd.f32 %v5177, 1.0
        %v5186 = vadd.f32 %v5178, 1.0
        %v5187 = vadd.f32 %v5179, 1.0
        %v5188 = vmul.f32 %v4964, %v5180
        %v5189 = vmul.f32 %v4965, %v5181
        %v5190 = vmul.f32 %v4966, %v5182
        %v5191 = vmul.f32 %v4967, %v5183
        %v5192 = vmul.f32 %v4968, %v5184
        %v5193 = vmul.f32 %v4969, %v5185
        %v5194 = vmul.f32 %v4970, %v5186
        %v5195 = vmul.f32 %v4971, %v5187
        %5196 = vst [vmem:[%s313] sm:$0xff] %v5188
        %5197 = vst [vmem:[%s313 + $0x8] sm:$0xff] %v5189
        %5198 = vst [vmem:[%s313 + $0x10] sm:$0xff] %v5190
        %5199 = vst [vmem:[%s313 + $0x18] sm:$0xff] %v5191
        %5200 = vst [vmem:[%s313 + $0x20] sm:$0xff] %v5192
        %5201 = vst [vmem:[%s313 + $0x28] sm:$0xff] %v5193
        %5202 = vst [vmem:[%s313 + $0x30] sm:$0xff] %v5194
        %5203 = vst [vmem:[%s313 + $0x38] sm:$0xff] %v5195
        %s5204 = sand.u32 %s185, 1
        %s5205 = scalar_lea.sflag [#allocation4], %s5204
        %s5206 = sand.u32 %s185, 1
        %s5207 = smul.addr %s5206, 64
        %s5208 = scalar_lea.vmem [#allocation7], %s5207
        // Predicated region
        $region57: #{tpu_custom_call.1} parent=47 // pred_check
          %p5209 = pneg %p195
        $region58: #{tpu_custom_call.1} parent=47 // pred_check_branch
          %5211 = sbr.rel (%p5209) target = $region60
        $region59: #{tpu_custom_call.1} parent=47 // pred_region
          %5213 = vsyncadd %s5205, 0
          %s5214 = smul.addr %s25, 8
          %s5215 = smul.addr %s5214, 8
          %s5216 = scalar_lea.hbm %s7, %s5215
          %s5218 = sshll.u32 %s5208, 4
          %s5219 = int_to_ptr.vmem [resolvable:$true] %s5218
          %s5220 = sshll.u32 %s5216, 4
          %s5221 = int_to_ptr.hbm [resolvable:$true] %s5220
          %5223 = dma.vmem_to_hbm [thread:$0]  %s5219, 1024, %s5221, %s5205
        $region60: #{tpu_custom_call.1} parent=47 // pred_fallthru
          _
      $region48: #{tpu_custom_call.1} parent=5 // pred_fallthru
        _
      %p5224 = scmp.le.s32.totalorder 2, %s20
      // Predicated region
      $region61: #{tpu_custom_call.1} parent=5 // pred_check
        %p5225 = pneg %p5224
      $region62: #{tpu_custom_call.1} parent=5 // pred_check_branch
        %5227 = sbr.rel (%p5225) target = $region64
      $region63: #{tpu_custom_call.1} parent=5 // pred_region
        %s5228 = ssub.s32 %s20, 2
        // Predicated region
        $region65: #{tpu_custom_call.1} parent=63 // pred_check
          %p5229 = pneg %p201
        $region66: #{tpu_custom_call.1} parent=63 // pred_check_branch
          %5231 = sbr.rel (%p5229) target = $region68
        $region67: #{tpu_custom_call.1} parent=63 // pred_region
          %s5232 = sand.u32 %s186, 1
          %s5233 = scalar_lea.sflag [#allocation4], %s5232
          %s5234 = sand.u32 %s186, 1
          %s5235 = smul.addr %s5234, 64
          %s5236 = scalar_lea.vmem [#allocation7], %s5235
          %5238 = dma.done %s5233, 1024
        $region68: #{tpu_custom_call.1} parent=63 // pred_fallthru
          _
      $region64: #{tpu_custom_call.1} parent=5 // pred_fallthru
        _
    $region6: #{tpu_custom_call.1} parent=1 // loop_footer
      %s24 = sadd.s32 1, %s20
    $region7: #{tpu_custom_call.1} parent=1 // loop_footer_branch
      %19 = sbr.rel target = $region3
    $region8: #{tpu_custom_call.1} parent=1 // loop_exit
      _
    %5239 = vsyncpa [#allocation3], 1
    %s5240 = scalar_lea.sflag [#allocation3], 1
    %5241 = vsyncpa %s5240, 1
    %5242 = vsyncpa [#allocation6], 1
    %5243 = vsyncpa [#allocation4], 1
    %s5244 = scalar_lea.sflag [#allocation4], 1
    %5245 = vsyncpa %s5244, 1

</llo_original>
